<compile_context>
chip_gen: v7x
topology: tpu7x:2x2x1
jax: 0.10.0
libtpu: 0.0.40
codegen_flags: <defaults>
</compile_context>

<pallas_src>
import numpy as np
import jax
import jax.numpy as jnp
from jax.experimental import pallas as pl
from jax.experimental.pallas import tpu as pltpu


# ---------------------------------------------------------------------------
# Fixed geometry of the torch module (CIFAR input 3x32x32).
# ---------------------------------------------------------------------------
BT = 32                        # images per grid step (multiple of 8; 16 is a
                               # good choice on v7x for very small batches)
H1, W1, C1 = 32, 32, 3         # conv1 input
OH1, OW1, CO1 = 28, 28, 6      # conv1 output
PH1, PW1 = 14, 14              # after pool1
OH2, OW2, CO2 = 10, 10, 16     # conv2 output
PH2, PW2 = 5, 5                # after pool2
K = 5                          # conv kernel size

CW = C1 * W1                   # 96 columns per kh slab of the expanded input
XK = K * CW                    # 480 real K of the conv1 matmul
XKPAD = 512                    # lane-padded K (4 * 128)
CPAD = 128                     # lane-padded width of one dc half of a conv out

# conv1 output-row order within a tile: slot = dr*14 + p1*7 + j  ->  oh1.
# Rows [0:14*BT] are dr=0, [14*BT:28*BT] dr=1 (row pool = max of halves);
# within a half, ph1 = 2*j + p1 is parity-blocked (evens then odds), which is
# exactly what conv2's contiguous kh windows need.
_OH1_ORDER = np.array([4 * j + 2 * p1 + dr
                       for dr in range(2) for p1 in range(2)
                       for j in range(PH1 // 2)], dtype=np.int32)    # (28,)

# conv2 kh-window starts (units of BT row-blocks of the parity-blocked pool1)
_EVEN_STARTS = (0, 7, 1, 8, 2)   # kh = 0..4, even output rows (oh2 = 2*ph2)
_ODD_STARTS = (7, 1, 8, 2, 9)    # kh = 0..4, odd  output rows (oh2 = 2*ph2+1)


# ---------------------------------------------------------------------------
# Fused kernel: one grid step = BT images end-to-end.
# ---------------------------------------------------------------------------
def _cifar_fused_kernel(x_ref, cb1_ref, cbias1_ref, cb2_ref, cbias2_ref,
                        w1_ref, b1_ref, w2_ref, b2_ref, w3_ref, b3_ref,
                        out_ref):
    f32 = jnp.float32
    bf16 = jnp.bfloat16
    HALF1 = PH1 * BT           # 448 rows per dr half of conv1 output
    R5 = PH2 * BT              # 160 rows of each conv2 parity accumulator

    # ---- conv1 (+ fused 2x2 maxpool) : ONE (28*BT,512)@(512,256) matmul ----
    y1 = jnp.dot(x_ref[...], cb1_ref[...], preferred_element_type=f32)
    yr = jnp.maximum(y1[0:HALF1, :], y1[HALF1:2 * HALF1, :])       # row pool
    yp = jnp.maximum(yr[:, 0:CPAD], yr[:, CPAD:2 * CPAD])          # col pool
    a1 = jnp.maximum(yp + cbias1_ref[...], 0.0).astype(bf16)       # (448,128)

    # ---- conv2: chained shift-accumulate over kh, even/odd rows split ----
    se = _EVEN_STARTS[0] * BT
    so = _ODD_STARTS[0] * BT
    acc_e = jnp.dot(a1[se:se + R5, :], cb2_ref[0], preferred_element_type=f32)
    acc_o = jnp.dot(a1[so:so + R5, :], cb2_ref[0], preferred_element_type=f32)
    for kh in range(1, K):
        se = _EVEN_STARTS[kh] * BT
        so = _ODD_STARTS[kh] * BT
        acc_e = acc_e + jnp.dot(a1[se:se + R5, :], cb2_ref[kh],
                                preferred_element_type=f32)
        acc_o = acc_o + jnp.dot(a1[so:so + R5, :], cb2_ref[kh],
                                preferred_element_type=f32)
    # 2x2 pool = max over (dr halves = acc_e/acc_o, dc halves = lane halves)
    y2 = jnp.maximum(jnp.maximum(acc_e[:, 0:CPAD], acc_e[:, CPAD:2 * CPAD]),
                     jnp.maximum(acc_o[:, 0:CPAD], acc_o[:, CPAD:2 * CPAD]))
    a2 = jnp.maximum(y2 + cbias2_ref[...], 0.0).astype(bf16)       # (160,128)

    # ---- fc1: sum over the 5 pooled row-blocks (torch flatten order) ----
    z = jnp.dot(a2[0:BT, :], w1_ref[0], preferred_element_type=f32)
    for ph in range(1, PH2):
        z = z + jnp.dot(a2[ph * BT:(ph + 1) * BT, :], w1_ref[ph],
                        preferred_element_type=f32)
    z = jnp.maximum(z + b1_ref[...], 0.0)                          # (BT,120)

    # ---- fc2 + classifier + log_softmax (lane-dense, padded to 128) ----
    z = jnp.maximum(jnp.dot(z.astype(bf16), w2_ref[...],
                            preferred_element_type=f32) + b2_ref[...], 0.0)
    logits = jnp.dot(z.astype(bf16), w3_ref[...],
                     preferred_element_type=f32) + b3_ref[...]     # (BT,128)
    m = jnp.max(logits, axis=-1, keepdims=True)
    lse = jnp.log(jnp.sum(jnp.exp(logits - m), axis=-1, keepdims=True)) + m
    out_ref[...] = (logits - lse).astype(out_ref.dtype)


# ---------------------------------------------------------------------------
# Host-side (one-time) weight preparation.
# ---------------------------------------------------------------------------
def _banded_conv1(w):
    """cb1[kh*96 + ci*32 + iw, dc*128 + co*14 + pw] = w[co,ci,kh,kw],
    iw = 2*pw + dc + kw.  Output columns carry the col-pool dc split."""
    w = np.asarray(w, np.float32)
    cb = np.zeros((XKPAD, 2 * CPAD), np.float32)
    for co in range(CO1):
        for ci in range(C1):
            for kh in range(K):
                for kw in range(K):
                    v = w[co, ci, kh, kw]
                    for pw in range(PW1):
                        for dc in range(2):
                            iw = 2 * pw + dc + kw
                            cb[kh * CW + ci * W1 + iw,
                               dc * CPAD + co * PW1 + pw] = v
    return cb


def _banded_conv2(w):
    """cb2[kh, ci*14 + iw, dc*128 + co*5 + pw] = w[co,ci,kh,kw]."""
    w = np.asarray(w, np.float32)
    cb = np.zeros((K, CPAD, 2 * CPAD), np.float32)
    for co in range(CO2):
        for ci in range(CO1):
            for kh in range(K):
                for kw in range(K):
                    v = w[co, ci, kh, kw]
                    for pw in range(PW2):
                        for dc in range(2):
                            iw = 2 * pw + dc + kw
                            cb[kh, ci * PW1 + iw,
                               dc * CPAD + co * PW2 + pw] = v
    return cb


def _fc1_banded(fc1_w):
    """torch flatten f = co*25 + ph*5 + pw  ->  per-ph (128,120) slabs."""
    fw = np.asarray(fc1_w, np.float32).reshape(120, CO2, PH2, PW2)
    w1 = np.zeros((PH2, CPAD, 120), np.float32)
    for ph in range(PH2):
        for co in range(CO2):
            for pw in range(PW2):
                w1[ph, co * PW2 + pw, :] = fw[:, co, ph, pw]
    return w1


def prepare_kernel_params(params):
    conv1_b = np.asarray(params["conv1_b"], np.float32)
    conv2_b = np.asarray(params["conv2_b"], np.float32)
    fc1_b = np.asarray(params["fc1_b"], np.float32)
    fc2_w = np.asarray(params["fc2_w"], np.float32)
    fc2_b = np.asarray(params["fc2_b"], np.float32)
    lin_w = np.asarray(params["linear_w"], np.float32)
    lin_b = np.asarray(params["linear_b"], np.float32)
    n_class = lin_w.shape[0]
    assert n_class <= CPAD

    cbias1 = np.zeros((1, CPAD), np.float32)
    for co in range(CO1):
        cbias1[0, co * PW1:(co + 1) * PW1] = conv1_b[co]
    cbias2 = np.zeros((1, CPAD), np.float32)
    for co in range(CO2):
        cbias2[0, co * PW2:(co + 1) * PW2] = conv2_b[co]

    w3 = np.zeros((84, CPAD), np.float32)
    w3[:, :n_class] = lin_w.T
    b3 = np.full((1, CPAD), -1e9, np.float32)   # pad logits -> ~0 after exp
    b3[0, :n_class] = lin_b

    bf16 = jnp.bfloat16
    return dict(
        cb1=jnp.asarray(_banded_conv1(params["conv1_w"]), bf16),
        cbias1=jnp.asarray(cbias1),
        cb2=jnp.asarray(_banded_conv2(params["conv2_w"]), bf16),
        cbias2=jnp.asarray(cbias2),
        w1=jnp.asarray(_fc1_banded(params["fc1_w"]), bf16),
        b1=jnp.asarray(fc1_b[None, :]),
        w2=jnp.asarray(fc2_w.T, bf16),
        b2=jnp.asarray(fc2_b[None, :]),
        w3=jnp.asarray(w3, bf16),
        b3=jnp.asarray(b3),
    )


# ---------------------------------------------------------------------------
# Forward pass (jit-able): pad batch to a BT multiple, one fused pallas_call.
# ---------------------------------------------------------------------------
def cifar_net_fedsi_forward(x_nchw, kp, *, n_class):
    n = x_nchw.shape[0]
    n_pad = ((n + BT - 1) // BT) * BT
    nt = n_pad // BT

    x = jnp.pad(x_nchw.astype(jnp.float32),
                ((0, n_pad - n), (0, 0), (0, 0), (0, 0)))
    # rows = (image, h), cols = (channel, w)
    x_rows = jnp.transpose(x, (0, 2, 1, 3)).reshape(n_pad, H1, CW)
    # im2row over kh only, in the kernel's (dr, parity, j) output-row order
    h_idx = (_OH1_ORDER[:, None] + np.arange(K, dtype=np.int32)[None, :]
             ).reshape(-1)                                          # (140,)
    xg = x_rows[:, h_idx, :].reshape(n_pad, OH1, XK)                # (N,28,480)
    xg = jnp.pad(xg, ((0, 0), (0, 0), (0, XKPAD - XK)))             # (N,28,512)
    xg = jnp.transpose(xg.reshape(nt, BT, OH1, XKPAD), (0, 2, 1, 3))
    x_exp = xg.reshape(nt * OH1 * BT, XKPAD).astype(jnp.bfloat16)

    operands = (x_exp, kp["cb1"], kp["cbias1"], kp["cb2"], kp["cbias2"],
                kp["w1"], kp["b1"], kp["w2"], kp["b2"], kp["w3"], kp["b3"])

    def _const_spec(a):
        zeros = (0,) * a.ndim
        return pl.BlockSpec(a.shape, lambda i, _z=zeros: _z)

    in_specs = [pl.BlockSpec((OH1 * BT, XKPAD), lambda i: (i, 0))]
    in_specs += [_const_spec(a) for a in operands[1:]]

    out = pl.pallas_call(
        _cifar_fused_kernel,
        out_shape=jax.ShapeDtypeStruct((n_pad, CPAD), jnp.float32),
        grid=(nt,),
        in_specs=in_specs,
        out_specs=pl.BlockSpec((BT, CPAD), lambda i: (i, 0)),
        compiler_params=pltpu.CompilerParams(
            dimension_semantics=("parallel",),
            vmem_limit_bytes=32 * 1024 * 1024),
    )(*operands)
    return out[:n, :n_class]


# ---------------------------------------------------------------------------
# Parameters (torch-layout) + pure-JAX reference for verification.
# ---------------------------------------------------------------------------
def init_params(key, n_class):
    ks = jax.random.split(key, 10)

    def u(k, shape, fan_in):
        bound = 1.0 / jnp.sqrt(jnp.float32(fan_in))
        return jax.random.uniform(k, shape, jnp.float32, -bound, bound)

    return {
        "conv1_w": u(ks[0], (6, 3, 5, 5), 3 * 5 * 5),
        "conv1_b": u(ks[1], (6,), 3 * 5 * 5),
        "conv2_w": u(ks[2], (16, 6, 5, 5), 6 * 5 * 5),
        "conv2_b": u(ks[3], (16,), 6 * 5 * 5),
        "fc1_w":   u(ks[4], (120, 16 * 5 * 5), 16 * 5 * 5),
        "fc1_b":   u(ks[5], (120,), 16 * 5 * 5),
        "fc2_w":   u(ks[6], (84, 120), 120),
        "fc2_b":   u(ks[7], (84,), 120),
        "linear_w": u(ks[8], (n_class, 84), 84),
        "linear_b": u(ks[9], (n_class,), 84),
    }


def _reference_forward(x, params):
    # Mirrors the kernel's bf16 operand rounding (f32 accumulation everywhere).
    f32 = jnp.float32

    def bf(a):
        return a.astype(jnp.bfloat16)

    def conv(h, w, b):
        y = jax.lax.conv_general_dilated(
            bf(h), bf(w), (1, 1), "VALID",
            dimension_numbers=("NCHW", "OIHW", "NCHW"),
            preferred_element_type=f32)
        return jax.nn.relu(y + b[None, :, None, None])

    def pool(h):
        n, c, hh, ww = h.shape
        return h.reshape(n, c, hh // 2, 2, ww // 2, 2).max(axis=(3, 5))

    h = pool(conv(x, params["conv1_w"], params["conv1_b"]))
    h = pool(conv(h, params["conv2_w"], params["conv2_b"]))
    h = h.reshape(x.shape[0], -1)
    h = jax.nn.relu(jnp.dot(bf(h), bf(params["fc1_w"].T),
                            preferred_element_type=f32) + params["fc1_b"])
    h = jax.nn.relu(jnp.dot(bf(h), bf(params["fc2_w"].T),
                            preferred_element_type=f32) + params["fc2_b"])
    z = jnp.dot(bf(h), bf(params["linear_w"].T),
                preferred_element_type=f32) + params["linear_b"]
    return jax.nn.log_softmax(z, axis=-1)


if __name__ == "__main__":
    n_class = 10
    key = jax.random.PRNGKey(0)
    k_x, k_p = jax.random.split(key)

    # CIFAR-shaped input (spatial must be 32 so the flatten hits 16*5*5=400).
    x = jax.random.normal(k_x, (2, 3, 32, 32), dtype=jnp.float32)
    params = init_params(k_p, n_class)
    kp = prepare_kernel_params(params)

    fwd = jax.jit(cifar_net_fedsi_forward, static_argnames=("n_class",))
    logp = jax.block_until_ready(fwd(x, kp, n_class=n_class))

    assert logp.shape == (2, n_class), logp.shape
    row_sums = jnp.exp(logp).sum(axis=1)
    assert bool(jnp.all(jnp.abs(row_sums - 1.0) < 1e-3)), row_sums

    ref = _reference_forward(x, params)
    err = float(jnp.max(jnp.abs(logp - ref)))
    assert err < 2e-2, f"max abs error vs reference: {err}"

    print("KERNEL_OK")
</pallas_src>

<mosaic_0001>
module attributes {stable_mosaic.version = 11 : i64} {
  func.func @_cifar_fused_kernel(%arg0: i32, %arg1: memref<896x512xbf16, #tpu.memory_space<vmem>>, %arg2: memref<512x256xbf16, #tpu.memory_space<vmem>>, %arg3: memref<1x128xf32, #tpu.memory_space<vmem>>, %arg4: memref<5x128x256xbf16, #tpu.memory_space<vmem>>, %arg5: memref<1x128xf32, #tpu.memory_space<vmem>>, %arg6: memref<5x128x120xbf16, #tpu.memory_space<vmem>>, %arg7: memref<1x120xf32, #tpu.memory_space<vmem>>, %arg8: memref<120x84xbf16, #tpu.memory_space<vmem>>, %arg9: memref<1x84xf32, #tpu.memory_space<vmem>>, %arg10: memref<84x128xbf16, #tpu.memory_space<vmem>>, %arg11: memref<1x128xf32, #tpu.memory_space<vmem>>, %arg12: memref<32x128xf32, #tpu.memory_space<vmem>>) attributes {dimension_semantics = [#tpu.dimension_semantics<parallel>], iteration_bounds = array<i64: 1>, scalar_prefetch = 0 : i64, scratch_operands = 0 : i64, tpu.core_type = #tpu.core_type<tc>, window_params = [{transform_indices = @transform_0, window_bounds = array<i64: 896, 512>}, {pipeline_mode = #tpu.pipeline_mode<synchronous>, transform_indices = @transform_1, window_bounds = array<i64: 512, 256>}, {pipeline_mode = #tpu.pipeline_mode<synchronous>, transform_indices = @transform_2, window_bounds = array<i64: 1, 128>}, {pipeline_mode = #tpu.pipeline_mode<synchronous>, transform_indices = @transform_3, window_bounds = array<i64: 5, 128, 256>}, {pipeline_mode = #tpu.pipeline_mode<synchronous>, transform_indices = @transform_4, window_bounds = array<i64: 1, 128>}, {pipeline_mode = #tpu.pipeline_mode<synchronous>, transform_indices = @transform_5, window_bounds = array<i64: 5, 128, 120>}, {pipeline_mode = #tpu.pipeline_mode<synchronous>, transform_indices = @transform_6, window_bounds = array<i64: 1, 120>}, {pipeline_mode = #tpu.pipeline_mode<synchronous>, transform_indices = @transform_7, window_bounds = array<i64: 120, 84>}, {pipeline_mode = #tpu.pipeline_mode<synchronous>, transform_indices = @transform_8, window_bounds = array<i64: 1, 84>}, {pipeline_mode = #tpu.pipeline_mode<synchronous>, transform_indices = @transform_9, window_bounds = array<i64: 84, 128>}, {pipeline_mode = #tpu.pipeline_mode<synchronous>, transform_indices = @transform_10, window_bounds = array<i64: 1, 128>}, {transform_indices = @transform_11, window_bounds = array<i64: 32, 128>}]} {
    %c0 = arith.constant 0 : index
    %c0_0 = arith.constant 0 : index
    %0 = vector.load %arg1[%c0, %c0_0] : memref<896x512xbf16, #tpu.memory_space<vmem>>, vector<896x512xbf16>
    %c0_1 = arith.constant 0 : index
    %c0_2 = arith.constant 0 : index
    %1 = vector.load %arg2[%c0_1, %c0_2] : memref<512x256xbf16, #tpu.memory_space<vmem>>, vector<512x256xbf16>
    %cst = arith.constant dense<0.000000e+00> : vector<896x256xf32>
    %2 = tpu.matmul %0, %1, %cst {dimension_numbers = #tpu.dot_dimension_numbers<[1], [0], [0], [1], [0, 0, 1, 1], [], []>} : vector<896x512xbf16>, vector<512x256xbf16>, vector<896x256xf32> -> vector<896x256xf32>
    %3 = vector.extract_strided_slice %2 {offsets = [0, 0], sizes = [448, 256], strides = [1, 1]} : vector<896x256xf32> to vector<448x256xf32>
    %4 = vector.extract_strided_slice %2 {offsets = [448, 0], sizes = [448, 256], strides = [1, 1]} : vector<896x256xf32> to vector<448x256xf32>
    %5 = arith.maximumf %3, %4 : vector<448x256xf32>
    %6 = vector.extract_strided_slice %5 {offsets = [0, 0], sizes = [448, 128], strides = [1, 1]} : vector<448x256xf32> to vector<448x128xf32>
    %7 = vector.extract_strided_slice %5 {offsets = [0, 128], sizes = [448, 128], strides = [1, 1]} : vector<448x256xf32> to vector<448x128xf32>
    %8 = arith.maximumf %6, %7 : vector<448x128xf32>
    %c0_3 = arith.constant 0 : index
    %c0_4 = arith.constant 0 : index
    %9 = vector.load %arg3[%c0_3, %c0_4] : memref<1x128xf32, #tpu.memory_space<vmem>>, vector<1x128xf32>
    %10 = vector.broadcast %9 : vector<1x128xf32> to vector<448x128xf32>
    %11 = arith.addf %8, %10 : vector<448x128xf32>
    %cst_5 = arith.constant 0.000000e+00 : f32
    %12 = vector.broadcast %cst_5 : f32 to vector<448x128xf32>
    %13 = arith.maximumf %11, %12 : vector<448x128xf32>
    %14 = arith.truncf %13 : vector<448x128xf32> to vector<448x128xbf16>
    %15 = vector.extract_strided_slice %14 {offsets = [0, 0], sizes = [160, 128], strides = [1, 1]} : vector<448x128xbf16> to vector<160x128xbf16>
    %c0_6 = arith.constant 0 : index
    %c0_7 = arith.constant 0 : index
    %c0_8 = arith.constant 0 : index
    %16 = vector.load %arg4[%c0_6, %c0_7, %c0_8] : memref<5x128x256xbf16, #tpu.memory_space<vmem>>, vector<1x128x256xbf16>
    %17 = vector.shape_cast %16 : vector<1x128x256xbf16> to vector<128x256xbf16>
    %cst_9 = arith.constant dense<0.000000e+00> : vector<160x256xf32>
    %18 = tpu.matmul %15, %17, %cst_9 {dimension_numbers = #tpu.dot_dimension_numbers<[1], [0], [0], [1], [0, 0, 1, 1], [], []>} : vector<160x128xbf16>, vector<128x256xbf16>, vector<160x256xf32> -> vector<160x256xf32>
    %19 = vector.extract_strided_slice %14 {offsets = [224, 0], sizes = [160, 128], strides = [1, 1]} : vector<448x128xbf16> to vector<160x128xbf16>
    %c0_10 = arith.constant 0 : index
    %c0_11 = arith.constant 0 : index
    %c0_12 = arith.constant 0 : index
    %20 = vector.load %arg4[%c0_10, %c0_11, %c0_12] : memref<5x128x256xbf16, #tpu.memory_space<vmem>>, vector<1x128x256xbf16>
    %21 = vector.shape_cast %20 : vector<1x128x256xbf16> to vector<128x256xbf16>
    %cst_13 = arith.constant dense<0.000000e+00> : vector<160x256xf32>
    %22 = tpu.matmul %19, %21, %cst_13 {dimension_numbers = #tpu.dot_dimension_numbers<[1], [0], [0], [1], [0, 0, 1, 1], [], []>} : vector<160x128xbf16>, vector<128x256xbf16>, vector<160x256xf32> -> vector<160x256xf32>
    %23 = vector.extract_strided_slice %14 {offsets = [224, 0], sizes = [160, 128], strides = [1, 1]} : vector<448x128xbf16> to vector<160x128xbf16>
    %c1 = arith.constant 1 : index
    %c0_14 = arith.constant 0 : index
    %c0_15 = arith.constant 0 : index
    %24 = vector.load %arg4[%c1, %c0_14, %c0_15] : memref<5x128x256xbf16, #tpu.memory_space<vmem>>, vector<1x128x256xbf16>
    %25 = vector.shape_cast %24 : vector<1x128x256xbf16> to vector<128x256xbf16>
    %cst_16 = arith.constant dense<0.000000e+00> : vector<160x256xf32>
    %26 = tpu.matmul %23, %25, %cst_16 {dimension_numbers = #tpu.dot_dimension_numbers<[1], [0], [0], [1], [0, 0, 1, 1], [], []>} : vector<160x128xbf16>, vector<128x256xbf16>, vector<160x256xf32> -> vector<160x256xf32>
    %27 = arith.addf %18, %26 : vector<160x256xf32>
    %28 = vector.extract_strided_slice %14 {offsets = [32, 0], sizes = [160, 128], strides = [1, 1]} : vector<448x128xbf16> to vector<160x128xbf16>
    %c1_17 = arith.constant 1 : index
    %c0_18 = arith.constant 0 : index
    %c0_19 = arith.constant 0 : index
    %29 = vector.load %arg4[%c1_17, %c0_18, %c0_19] : memref<5x128x256xbf16, #tpu.memory_space<vmem>>, vector<1x128x256xbf16>
    %30 = vector.shape_cast %29 : vector<1x128x256xbf16> to vector<128x256xbf16>
    %cst_20 = arith.constant dense<0.000000e+00> : vector<160x256xf32>
    %31 = tpu.matmul %28, %30, %cst_20 {dimension_numbers = #tpu.dot_dimension_numbers<[1], [0], [0], [1], [0, 0, 1, 1], [], []>} : vector<160x128xbf16>, vector<128x256xbf16>, vector<160x256xf32> -> vector<160x256xf32>
    %32 = arith.addf %22, %31 : vector<160x256xf32>
    %33 = vector.extract_strided_slice %14 {offsets = [32, 0], sizes = [160, 128], strides = [1, 1]} : vector<448x128xbf16> to vector<160x128xbf16>
    %c2 = arith.constant 2 : index
    %c0_21 = arith.constant 0 : index
    %c0_22 = arith.constant 0 : index
    %34 = vector.load %arg4[%c2, %c0_21, %c0_22] : memref<5x128x256xbf16, #tpu.memory_space<vmem>>, vector<1x128x256xbf16>
    %35 = vector.shape_cast %34 : vector<1x128x256xbf16> to vector<128x256xbf16>
    %cst_23 = arith.constant dense<0.000000e+00> : vector<160x256xf32>
    %36 = tpu.matmul %33, %35, %cst_23 {dimension_numbers = #tpu.dot_dimension_numbers<[1], [0], [0], [1], [0, 0, 1, 1], [], []>} : vector<160x128xbf16>, vector<128x256xbf16>, vector<160x256xf32> -> vector<160x256xf32>
    %37 = arith.addf %27, %36 : vector<160x256xf32>
    %38 = vector.extract_strided_slice %14 {offsets = [256, 0], sizes = [160, 128], strides = [1, 1]} : vector<448x128xbf16> to vector<160x128xbf16>
    %c2_24 = arith.constant 2 : index
    %c0_25 = arith.constant 0 : index
    %c0_26 = arith.constant 0 : index
    %39 = vector.load %arg4[%c2_24, %c0_25, %c0_26] : memref<5x128x256xbf16, #tpu.memory_space<vmem>>, vector<1x128x256xbf16>
    %40 = vector.shape_cast %39 : vector<1x128x256xbf16> to vector<128x256xbf16>
    %cst_27 = arith.constant dense<0.000000e+00> : vector<160x256xf32>
    %41 = tpu.matmul %38, %40, %cst_27 {dimension_numbers = #tpu.dot_dimension_numbers<[1], [0], [0], [1], [0, 0, 1, 1], [], []>} : vector<160x128xbf16>, vector<128x256xbf16>, vector<160x256xf32> -> vector<160x256xf32>
    %42 = arith.addf %32, %41 : vector<160x256xf32>
    %43 = vector.extract_strided_slice %14 {offsets = [256, 0], sizes = [160, 128], strides = [1, 1]} : vector<448x128xbf16> to vector<160x128xbf16>
    %c3 = arith.constant 3 : index
    %c0_28 = arith.constant 0 : index
    %c0_29 = arith.constant 0 : index
    %44 = vector.load %arg4[%c3, %c0_28, %c0_29] : memref<5x128x256xbf16, #tpu.memory_space<vmem>>, vector<1x128x256xbf16>
    %45 = vector.shape_cast %44 : vector<1x128x256xbf16> to vector<128x256xbf16>
    %cst_30 = arith.constant dense<0.000000e+00> : vector<160x256xf32>
    %46 = tpu.matmul %43, %45, %cst_30 {dimension_numbers = #tpu.dot_dimension_numbers<[1], [0], [0], [1], [0, 0, 1, 1], [], []>} : vector<160x128xbf16>, vector<128x256xbf16>, vector<160x256xf32> -> vector<160x256xf32>
    %47 = arith.addf %37, %46 : vector<160x256xf32>
    %48 = vector.extract_strided_slice %14 {offsets = [64, 0], sizes = [160, 128], strides = [1, 1]} : vector<448x128xbf16> to vector<160x128xbf16>
    %c3_31 = arith.constant 3 : index
    %c0_32 = arith.constant 0 : index
    %c0_33 = arith.constant 0 : index
    %49 = vector.load %arg4[%c3_31, %c0_32, %c0_33] : memref<5x128x256xbf16, #tpu.memory_space<vmem>>, vector<1x128x256xbf16>
    %50 = vector.shape_cast %49 : vector<1x128x256xbf16> to vector<128x256xbf16>
    %cst_34 = arith.constant dense<0.000000e+00> : vector<160x256xf32>
    %51 = tpu.matmul %48, %50, %cst_34 {dimension_numbers = #tpu.dot_dimension_numbers<[1], [0], [0], [1], [0, 0, 1, 1], [], []>} : vector<160x128xbf16>, vector<128x256xbf16>, vector<160x256xf32> -> vector<160x256xf32>
    %52 = arith.addf %42, %51 : vector<160x256xf32>
    %53 = vector.extract_strided_slice %14 {offsets = [64, 0], sizes = [160, 128], strides = [1, 1]} : vector<448x128xbf16> to vector<160x128xbf16>
    %c4 = arith.constant 4 : index
    %c0_35 = arith.constant 0 : index
    %c0_36 = arith.constant 0 : index
    %54 = vector.load %arg4[%c4, %c0_35, %c0_36] : memref<5x128x256xbf16, #tpu.memory_space<vmem>>, vector<1x128x256xbf16>
    %55 = vector.shape_cast %54 : vector<1x128x256xbf16> to vector<128x256xbf16>
    %cst_37 = arith.constant dense<0.000000e+00> : vector<160x256xf32>
    %56 = tpu.matmul %53, %55, %cst_37 {dimension_numbers = #tpu.dot_dimension_numbers<[1], [0], [0], [1], [0, 0, 1, 1], [], []>} : vector<160x128xbf16>, vector<128x256xbf16>, vector<160x256xf32> -> vector<160x256xf32>
    %57 = arith.addf %47, %56 : vector<160x256xf32>
    %58 = vector.extract_strided_slice %14 {offsets = [288, 0], sizes = [160, 128], strides = [1, 1]} : vector<448x128xbf16> to vector<160x128xbf16>
    %c4_38 = arith.constant 4 : index
    %c0_39 = arith.constant 0 : index
    %c0_40 = arith.constant 0 : index
    %59 = vector.load %arg4[%c4_38, %c0_39, %c0_40] : memref<5x128x256xbf16, #tpu.memory_space<vmem>>, vector<1x128x256xbf16>
    %60 = vector.shape_cast %59 : vector<1x128x256xbf16> to vector<128x256xbf16>
    %cst_41 = arith.constant dense<0.000000e+00> : vector<160x256xf32>
    %61 = tpu.matmul %58, %60, %cst_41 {dimension_numbers = #tpu.dot_dimension_numbers<[1], [0], [0], [1], [0, 0, 1, 1], [], []>} : vector<160x128xbf16>, vector<128x256xbf16>, vector<160x256xf32> -> vector<160x256xf32>
    %62 = arith.addf %52, %61 : vector<160x256xf32>
    %63 = vector.extract_strided_slice %57 {offsets = [0, 0], sizes = [160, 128], strides = [1, 1]} : vector<160x256xf32> to vector<160x128xf32>
    %64 = vector.extract_strided_slice %57 {offsets = [0, 128], sizes = [160, 128], strides = [1, 1]} : vector<160x256xf32> to vector<160x128xf32>
    %65 = arith.maximumf %63, %64 : vector<160x128xf32>
    %66 = vector.extract_strided_slice %62 {offsets = [0, 0], sizes = [160, 128], strides = [1, 1]} : vector<160x256xf32> to vector<160x128xf32>
    %67 = vector.extract_strided_slice %62 {offsets = [0, 128], sizes = [160, 128], strides = [1, 1]} : vector<160x256xf32> to vector<160x128xf32>
    %68 = arith.maximumf %66, %67 : vector<160x128xf32>
    %69 = arith.maximumf %65, %68 : vector<160x128xf32>
    %c0_42 = arith.constant 0 : index
    %c0_43 = arith.constant 0 : index
    %70 = vector.load %arg5[%c0_42, %c0_43] : memref<1x128xf32, #tpu.memory_space<vmem>>, vector<1x128xf32>
    %71 = vector.broadcast %70 : vector<1x128xf32> to vector<160x128xf32>
    %72 = arith.addf %69, %71 : vector<160x128xf32>
    %cst_44 = arith.constant 0.000000e+00 : f32
    %73 = vector.broadcast %cst_44 : f32 to vector<160x128xf32>
    %74 = arith.maximumf %72, %73 : vector<160x128xf32>
    %75 = arith.truncf %74 : vector<160x128xf32> to vector<160x128xbf16>
    %76 = vector.extract_strided_slice %75 {offsets = [0, 0], sizes = [32, 128], strides = [1, 1]} : vector<160x128xbf16> to vector<32x128xbf16>
    %c0_45 = arith.constant 0 : index
    %c0_46 = arith.constant 0 : index
    %c0_47 = arith.constant 0 : index
    %77 = vector.load %arg6[%c0_45, %c0_46, %c0_47] : memref<5x128x120xbf16, #tpu.memory_space<vmem>>, vector<1x128x120xbf16>
    %78 = vector.shape_cast %77 : vector<1x128x120xbf16> to vector<128x120xbf16>
    %cst_48 = arith.constant dense<0.000000e+00> : vector<32x120xf32>
    %79 = tpu.matmul %76, %78, %cst_48 {dimension_numbers = #tpu.dot_dimension_numbers<[1], [0], [0], [1], [0, 0, 1, 1], [], []>} : vector<32x128xbf16>, vector<128x120xbf16>, vector<32x120xf32> -> vector<32x120xf32>
    %80 = vector.extract_strided_slice %75 {offsets = [32, 0], sizes = [32, 128], strides = [1, 1]} : vector<160x128xbf16> to vector<32x128xbf16>
    %c1_49 = arith.constant 1 : index
    %c0_50 = arith.constant 0 : index
    %c0_51 = arith.constant 0 : index
    %81 = vector.load %arg6[%c1_49, %c0_50, %c0_51] : memref<5x128x120xbf16, #tpu.memory_space<vmem>>, vector<1x128x120xbf16>
    %82 = vector.shape_cast %81 : vector<1x128x120xbf16> to vector<128x120xbf16>
    %cst_52 = arith.constant dense<0.000000e+00> : vector<32x120xf32>
    %83 = tpu.matmul %80, %82, %cst_52 {dimension_numbers = #tpu.dot_dimension_numbers<[1], [0], [0], [1], [0, 0, 1, 1], [], []>} : vector<32x128xbf16>, vector<128x120xbf16>, vector<32x120xf32> -> vector<32x120xf32>
    %84 = arith.addf %79, %83 : vector<32x120xf32>
    %85 = vector.extract_strided_slice %75 {offsets = [64, 0], sizes = [32, 128], strides = [1, 1]} : vector<160x128xbf16> to vector<32x128xbf16>
    %c2_53 = arith.constant 2 : index
    %c0_54 = arith.constant 0 : index
    %c0_55 = arith.constant 0 : index
    %86 = vector.load %arg6[%c2_53, %c0_54, %c0_55] : memref<5x128x120xbf16, #tpu.memory_space<vmem>>, vector<1x128x120xbf16>
    %87 = vector.shape_cast %86 : vector<1x128x120xbf16> to vector<128x120xbf16>
    %cst_56 = arith.constant dense<0.000000e+00> : vector<32x120xf32>
    %88 = tpu.matmul %85, %87, %cst_56 {dimension_numbers = #tpu.dot_dimension_numbers<[1], [0], [0], [1], [0, 0, 1, 1], [], []>} : vector<32x128xbf16>, vector<128x120xbf16>, vector<32x120xf32> -> vector<32x120xf32>
    %89 = arith.addf %84, %88 : vector<32x120xf32>
    %90 = vector.extract_strided_slice %75 {offsets = [96, 0], sizes = [32, 128], strides = [1, 1]} : vector<160x128xbf16> to vector<32x128xbf16>
    %c3_57 = arith.constant 3 : index
    %c0_58 = arith.constant 0 : index
    %c0_59 = arith.constant 0 : index
    %91 = vector.load %arg6[%c3_57, %c0_58, %c0_59] : memref<5x128x120xbf16, #tpu.memory_space<vmem>>, vector<1x128x120xbf16>
    %92 = vector.shape_cast %91 : vector<1x128x120xbf16> to vector<128x120xbf16>
    %cst_60 = arith.constant dense<0.000000e+00> : vector<32x120xf32>
    %93 = tpu.matmul %90, %92, %cst_60 {dimension_numbers = #tpu.dot_dimension_numbers<[1], [0], [0], [1], [0, 0, 1, 1], [], []>} : vector<32x128xbf16>, vector<128x120xbf16>, vector<32x120xf32> -> vector<32x120xf32>
    %94 = arith.addf %89, %93 : vector<32x120xf32>
    %95 = vector.extract_strided_slice %75 {offsets = [128, 0], sizes = [32, 128], strides = [1, 1]} : vector<160x128xbf16> to vector<32x128xbf16>
    %c4_61 = arith.constant 4 : index
    %c0_62 = arith.constant 0 : index
    %c0_63 = arith.constant 0 : index
    %96 = vector.load %arg6[%c4_61, %c0_62, %c0_63] : memref<5x128x120xbf16, #tpu.memory_space<vmem>>, vector<1x128x120xbf16>
    %97 = vector.shape_cast %96 : vector<1x128x120xbf16> to vector<128x120xbf16>
    %cst_64 = arith.constant dense<0.000000e+00> : vector<32x120xf32>
    %98 = tpu.matmul %95, %97, %cst_64 {dimension_numbers = #tpu.dot_dimension_numbers<[1], [0], [0], [1], [0, 0, 1, 1], [], []>} : vector<32x128xbf16>, vector<128x120xbf16>, vector<32x120xf32> -> vector<32x120xf32>
    %99 = arith.addf %94, %98 : vector<32x120xf32>
    %c0_65 = arith.constant 0 : index
    %c0_66 = arith.constant 0 : index
    %100 = vector.load %arg7[%c0_65, %c0_66] : memref<1x120xf32, #tpu.memory_space<vmem>>, vector<1x120xf32>
    %101 = vector.broadcast %100 : vector<1x120xf32> to vector<32x120xf32>
    %102 = arith.addf %99, %101 : vector<32x120xf32>
    %cst_67 = arith.constant 0.000000e+00 : f32
    %103 = vector.broadcast %cst_67 : f32 to vector<32x120xf32>
    %104 = arith.maximumf %102, %103 : vector<32x120xf32>
    %105 = arith.truncf %104 : vector<32x120xf32> to vector<32x120xbf16>
    %c0_68 = arith.constant 0 : index
    %c0_69 = arith.constant 0 : index
    %106 = vector.load %arg8[%c0_68, %c0_69] : memref<120x84xbf16, #tpu.memory_space<vmem>>, vector<120x84xbf16>
    %cst_70 = arith.constant dense<0.000000e+00> : vector<32x84xf32>
    %107 = tpu.matmul %105, %106, %cst_70 {dimension_numbers = #tpu.dot_dimension_numbers<[1], [0], [0], [1], [0, 0, 1, 1], [], []>} : vector<32x120xbf16>, vector<120x84xbf16>, vector<32x84xf32> -> vector<32x84xf32>
    %c0_71 = arith.constant 0 : index
    %c0_72 = arith.constant 0 : index
    %108 = vector.load %arg9[%c0_71, %c0_72] : memref<1x84xf32, #tpu.memory_space<vmem>>, vector<1x84xf32>
    %109 = vector.broadcast %108 : vector<1x84xf32> to vector<32x84xf32>
    %110 = arith.addf %107, %109 : vector<32x84xf32>
    %cst_73 = arith.constant 0.000000e+00 : f32
    %111 = vector.broadcast %cst_73 : f32 to vector<32x84xf32>
    %112 = arith.maximumf %110, %111 : vector<32x84xf32>
    %113 = arith.truncf %112 : vector<32x84xf32> to vector<32x84xbf16>
    %c0_74 = arith.constant 0 : index
    %c0_75 = arith.constant 0 : index
    %114 = vector.load %arg10[%c0_74, %c0_75] : memref<84x128xbf16, #tpu.memory_space<vmem>>, vector<84x128xbf16>
    %cst_76 = arith.constant dense<0.000000e+00> : vector<32x128xf32>
    %115 = tpu.matmul %113, %114, %cst_76 {dimension_numbers = #tpu.dot_dimension_numbers<[1], [0], [0], [1], [0, 0, 1, 1], [], []>} : vector<32x84xbf16>, vector<84x128xbf16>, vector<32x128xf32> -> vector<32x128xf32>
    %c0_77 = arith.constant 0 : index
    %c0_78 = arith.constant 0 : index
    %116 = vector.load %arg11[%c0_77, %c0_78] : memref<1x128xf32, #tpu.memory_space<vmem>>, vector<1x128xf32>
    %117 = vector.broadcast %116 : vector<1x128xf32> to vector<32x128xf32>
    %118 = arith.addf %115, %117 : vector<32x128xf32>
    %cst_79 = arith.constant dense<0xFF800000> : vector<32xf32>
    %119 = vector.multi_reduction <maximumf>, %118, %cst_79 [1] : vector<32x128xf32> to vector<32xf32>
    %120 = vector.shape_cast %119 : vector<32xf32> to vector<32x1xf32>
    %121 = vector.broadcast %120 : vector<32x1xf32> to vector<32x128xf32>
    %122 = arith.subf %118, %121 : vector<32x128xf32>
    %123 = math.exp %122 : vector<32x128xf32>
    %cst_80 = arith.constant dense<0.000000e+00> : vector<32xf32>
    %124 = vector.multi_reduction <add>, %123, %cst_80 [1] : vector<32x128xf32> to vector<32xf32>
    %125 = vector.shape_cast %124 : vector<32xf32> to vector<32x1xf32>
    %126 = math.log %125 : vector<32x1xf32>
    %127 = arith.addf %126, %120 : vector<32x1xf32>
    %128 = vector.broadcast %127 : vector<32x1xf32> to vector<32x128xf32>
    %129 = arith.subf %118, %128 : vector<32x128xf32>
    %c0_81 = arith.constant 0 : index
    %c0_82 = arith.constant 0 : index
    %130 = vector.load %arg12[%c0_81, %c0_82] : memref<32x128xf32, #tpu.memory_space<vmem>>, vector<32x128xf32>
    tpu.vector_store %arg12[%c0_81, %c0_82], %129 {strides = array<i32>} : memref<32x128xf32, #tpu.memory_space<vmem>>, vector<32x128xf32>,
    return
  }
  func.func @transform_0(%arg0: i32) -> (i32, i32) {
    %c0_i32 = arith.constant 0 : i32
    %c0_i32_0 = arith.constant 0 : i32
    return %arg0, %c0_i32 : i32, i32
  }
  func.func @transform_1(%arg0: i32) -> (i32, i32) {
    %c0_i32 = arith.constant 0 : i32
    %c0_i32_0 = arith.constant 0 : i32
    %c0_i32_1 = arith.constant 0 : i32
    return %c0_i32, %c0_i32_0 : i32, i32
  }
  func.func @transform_2(%arg0: i32) -> (i32, i32) {
    %c0_i32 = arith.constant 0 : i32
    %c0_i32_0 = arith.constant 0 : i32
    %c0_i32_1 = arith.constant 0 : i32
    return %c0_i32, %c0_i32_0 : i32, i32
  }
  func.func @transform_3(%arg0: i32) -> (i32, i32, i32) {
    %c0_i32 = arith.constant 0 : i32
    %c0_i32_0 = arith.constant 0 : i32
    %c0_i32_1 = arith.constant 0 : i32
    %c0_i32_2 = arith.constant 0 : i32
    return %c0_i32, %c0_i32_0, %c0_i32_1 : i32, i32, i32
  }
  func.func @transform_4(%arg0: i32) -> (i32, i32) {
    %c0_i32 = arith.constant 0 : i32
    %c0_i32_0 = arith.constant 0 : i32
    %c0_i32_1 = arith.constant 0 : i32
    return %c0_i32, %c0_i32_0 : i32, i32
  }
  func.func @transform_5(%arg0: i32) -> (i32, i32, i32) {
    %c0_i32 = arith.constant 0 : i32
    %c0_i32_0 = arith.constant 0 : i32
    %c0_i32_1 = arith.constant 0 : i32
    %c0_i32_2 = arith.constant 0 : i32
    return %c0_i32, %c0_i32_0, %c0_i32_1 : i32, i32, i32
  }
  func.func @transform_6(%arg0: i32) -> (i32, i32) {
    %c0_i32 = arith.constant 0 : i32
    %c0_i32_0 = arith.constant 0 : i32
    %c0_i32_1 = arith.constant 0 : i32
    return %c0_i32, %c0_i32_0 : i32, i32
  }
  func.func @transform_7(%arg0: i32) -> (i32, i32) {
    %c0_i32 = arith.constant 0 : i32
    %c0_i32_0 = arith.constant 0 : i32
    %c0_i32_1 = arith.constant 0 : i32
    return %c0_i32, %c0_i32_0 : i32, i32
  }
  func.func @transform_8(%arg0: i32) -> (i32, i32) {
    %c0_i32 = arith.constant 0 : i32
    %c0_i32_0 = arith.constant 0 : i32
    %c0_i32_1 = arith.constant 0 : i32
    return %c0_i32, %c0_i32_0 : i32, i32
  }
  func.func @transform_9(%arg0: i32) -> (i32, i32) {
    %c0_i32 = arith.constant 0 : i32
    %c0_i32_0 = arith.constant 0 : i32
    %c0_i32_1 = arith.constant 0 : i32
    return %c0_i32, %c0_i32_0 : i32, i32
  }
  func.func @transform_10(%arg0: i32) -> (i32, i32) {
    %c0_i32 = arith.constant 0 : i32
    %c0_i32_0 = arith.constant 0 : i32
    %c0_i32_1 = arith.constant 0 : i32
    return %c0_i32, %c0_i32_0 : i32, i32
  }
  func.func @transform_11(%arg0: i32) -> (i32, i32) {
    %c0_i32 = arith.constant 0 : i32
    %c0_i32_0 = arith.constant 0 : i32
    return %arg0, %c0_i32 : i32, i32
  }
}

</mosaic_0001>

<llo_original>
// kernel: cifar_net_fedsi_forward.1
$region0: #{cifar_net_fedsi_forward.1}
  #allocation0 [shape = 'u32[]', space=smem, size = 0x4, offset = 0x4, fixed_abs, tag = 'smem constant byte address 0x4 - core index']
  #allocation1 [shape = 'u32[144,128]{1,0:T(1,128)}', space=vmem, size = 0x12000, scoped, tag = 'internal scratch']
  %s0 = inlined_call_operand.vmem [shape: bf16[896,512], index: 0, kind: input, shape index: {}]
  %s1 = inlined_call_operand.vmem [shape: bf16[512,256], index: 1, kind: input, shape index: {}]
  %s2 = inlined_call_operand.vmem [shape: f32[1,128], index: 2, kind: input, shape index: {}]
  %s3 = inlined_call_operand.vmem [shape: bf16[5,128,256], index: 3, kind: input, shape index: {}]
  %s4 = inlined_call_operand.vmem [shape: f32[1,128], index: 4, kind: input, shape index: {}]
  %s5 = inlined_call_operand.vmem [shape: bf16[5,128,120], index: 5, kind: input, shape index: {}]
  %s6 = inlined_call_operand.vmem [shape: f32[1,120], index: 6, kind: input, shape index: {}]
  %s7 = inlined_call_operand.vmem [shape: bf16[120,84], index: 7, kind: input, shape index: {}]
  %s8 = inlined_call_operand.vmem [shape: f32[1,84], index: 8, kind: input, shape index: {}]
  %s9 = inlined_call_operand.vmem [shape: bf16[84,128], index: 9, kind: input, shape index: {}]
  %s10 = inlined_call_operand.vmem [shape: f32[1,128], index: 10, kind: input, shape index: {}]
  %s11 = inlined_call_operand.vmem [shape: f32[32,128], index: 11, kind: output, shape index: {}]
  %s12 = sld [smem:[#allocation0]]
  $region54: #{cifar_net_fedsi_forward.1} parent=0
    _
  %s14 = ssub.s32 1, %s12
  %s15 = scalar_select 0, %s14, %s12
  // Predicated region
  $region2: #{cifar_net_fedsi_forward.1} parent=0 // pred_check
    _
  $region3: #{cifar_net_fedsi_forward.1} parent=0 // pred_check_branch
    %17 = sbr.rel (0) target = $region5
  $region4: #{cifar_net_fedsi_forward.1} parent=0 // pred_region
    _
  $region5: #{cifar_net_fedsi_forward.1} parent=0 // pred_fallthru
    _
  // Predicated region
  $region6: #{cifar_net_fedsi_forward.1} parent=0 // pred_check
    _
  $region7: #{cifar_net_fedsi_forward.1} parent=0 // pred_check_branch
    %19 = sbr.rel (0) target = $region9
  $region8: #{cifar_net_fedsi_forward.1} parent=0 // pred_region
    _
  $region9: #{cifar_net_fedsi_forward.1} parent=0 // pred_fallthru
    _
  // Predicated region
  $region10: #{cifar_net_fedsi_forward.1} parent=0 // pred_check
    _
  $region11: #{cifar_net_fedsi_forward.1} parent=0 // pred_check_branch
    %21 = sbr.rel (0) target = $region13
  $region12: #{cifar_net_fedsi_forward.1} parent=0 // pred_region
    _
  $region13: #{cifar_net_fedsi_forward.1} parent=0 // pred_fallthru
    _
  // Predicated region
  $region14: #{cifar_net_fedsi_forward.1} parent=0 // pred_check
    _
  $region15: #{cifar_net_fedsi_forward.1} parent=0 // pred_check_branch
    %23 = sbr.rel (0) target = $region17
  $region16: #{cifar_net_fedsi_forward.1} parent=0 // pred_region
    _
  $region17: #{cifar_net_fedsi_forward.1} parent=0 // pred_fallthru
    _
  // Predicated region
  $region18: #{cifar_net_fedsi_forward.1} parent=0 // pred_check
    _
  $region19: #{cifar_net_fedsi_forward.1} parent=0 // pred_check_branch
    %25 = sbr.rel (0) target = $region21
  $region20: #{cifar_net_fedsi_forward.1} parent=0 // pred_region
    _
  $region21: #{cifar_net_fedsi_forward.1} parent=0 // pred_fallthru
    _
  // Predicated region
  $region22: #{cifar_net_fedsi_forward.1} parent=0 // pred_check
    _
  $region23: #{cifar_net_fedsi_forward.1} parent=0 // pred_check_branch
    %27 = sbr.rel (0) target = $region25
  $region24: #{cifar_net_fedsi_forward.1} parent=0 // pred_region
    _
  $region25: #{cifar_net_fedsi_forward.1} parent=0 // pred_fallthru
    _
  // Predicated region
  $region26: #{cifar_net_fedsi_forward.1} parent=0 // pred_check
    _
  $region27: #{cifar_net_fedsi_forward.1} parent=0 // pred_check_branch
    %29 = sbr.rel (0) target = $region29
  $region28: #{cifar_net_fedsi_forward.1} parent=0 // pred_region
    _
  $region29: #{cifar_net_fedsi_forward.1} parent=0 // pred_fallthru
    _
  // Predicated region
  $region30: #{cifar_net_fedsi_forward.1} parent=0 // pred_check
    _
  $region31: #{cifar_net_fedsi_forward.1} parent=0 // pred_check_branch
    %31 = sbr.rel (0) target = $region33
  $region32: #{cifar_net_fedsi_forward.1} parent=0 // pred_region
    _
  $region33: #{cifar_net_fedsi_forward.1} parent=0 // pred_fallthru
    _
  // Predicated region
  $region34: #{cifar_net_fedsi_forward.1} parent=0 // pred_check
    _
  $region35: #{cifar_net_fedsi_forward.1} parent=0 // pred_check_branch
    %33 = sbr.rel (0) target = $region37
  $region36: #{cifar_net_fedsi_forward.1} parent=0 // pred_region
    _
  $region37: #{cifar_net_fedsi_forward.1} parent=0 // pred_fallthru
    _
  // Predicated region
  $region38: #{cifar_net_fedsi_forward.1} parent=0 // pred_check
    _
  $region39: #{cifar_net_fedsi_forward.1} parent=0 // pred_check_branch
    %35 = sbr.rel (0) target = $region41
  $region40: #{cifar_net_fedsi_forward.1} parent=0 // pred_region
    _
  $region41: #{cifar_net_fedsi_forward.1} parent=0 // pred_fallthru
    _
  // Predicated region
  $region42: #{cifar_net_fedsi_forward.1} parent=0 // pred_check
    _
  $region43: #{cifar_net_fedsi_forward.1} parent=0 // pred_check_branch
    %37 = sbr.rel (0) target = $region45
  $region44: #{cifar_net_fedsi_forward.1} parent=0 // pred_region
    _
  $region45: #{cifar_net_fedsi_forward.1} parent=0 // pred_fallthru
    _
  %v39 = vld [vmem:[%s0] sm:$0xff]
  %v40 = vld [vmem:[%s0 + $0x8] sm:$0xff]
  %v41 = vld [vmem:[%s0 + $0x10] sm:$0xff]
  %v42 = vld [vmem:[%s0 + $0x18] sm:$0xff]
  %v43 = vld [vmem:[%s0 + $0x20] sm:$0xff]
  %v44 = vld [vmem:[%s0 + $0x28] sm:$0xff]
  %v45 = vld [vmem:[%s0 + $0x30] sm:$0xff]
  %v46 = vld [vmem:[%s0 + $0x38] sm:$0xff]
  %v47 = vld [vmem:[%s0 + $0x40] sm:$0xff]
  %v48 = vld [vmem:[%s0 + $0x48] sm:$0xff]
  %v49 = vld [vmem:[%s0 + $0x50] sm:$0xff]
  %v50 = vld [vmem:[%s0 + $0x58] sm:$0xff]
  %v51 = vld [vmem:[%s0 + $0x60] sm:$0xff]
  %v52 = vld [vmem:[%s0 + $0x68] sm:$0xff]
  %v53 = vld [vmem:[%s0 + $0x70] sm:$0xff]
  %v54 = vld [vmem:[%s0 + $0x78] sm:$0xff]
  %v55 = vld [vmem:[%s0 + $0x80] sm:$0xff]
  %v56 = vld [vmem:[%s0 + $0x88] sm:$0xff]
  %v57 = vld [vmem:[%s0 + $0x90] sm:$0xff]
  %v58 = vld [vmem:[%s0 + $0x98] sm:$0xff]
  %v59 = vld [vmem:[%s0 + $0xa0] sm:$0xff]
  %v60 = vld [vmem:[%s0 + $0xa8] sm:$0xff]
  %v61 = vld [vmem:[%s0 + $0xb0] sm:$0xff]
  %v62 = vld [vmem:[%s0 + $0xb8] sm:$0xff]
  %v63 = vld [vmem:[%s0 + $0xc0] sm:$0xff]
  %v64 = vld [vmem:[%s0 + $0xc8] sm:$0xff]
  %v65 = vld [vmem:[%s0 + $0xd0] sm:$0xff]
  %v66 = vld [vmem:[%s0 + $0xd8] sm:$0xff]
  %v67 = vld [vmem:[%s0 + $0xe0] sm:$0xff]
  %v68 = vld [vmem:[%s0 + $0xe8] sm:$0xff]
  %v69 = vld [vmem:[%s0 + $0xf0] sm:$0xff]
  %v70 = vld [vmem:[%s0 + $0xf8] sm:$0xff]
  %v71 = vld [vmem:[%s0 + $0x100] sm:$0xff]
  %v72 = vld [vmem:[%s0 + $0x108] sm:$0xff]
  %v73 = vld [vmem:[%s0 + $0x110] sm:$0xff]
  %v74 = vld [vmem:[%s0 + $0x118] sm:$0xff]
  %v75 = vld [vmem:[%s0 + $0x120] sm:$0xff]
  %v76 = vld [vmem:[%s0 + $0x128] sm:$0xff]
  %v77 = vld [vmem:[%s0 + $0x130] sm:$0xff]
  %v78 = vld [vmem:[%s0 + $0x138] sm:$0xff]
  %v79 = vld [vmem:[%s0 + $0x140] sm:$0xff]
  %v80 = vld [vmem:[%s0 + $0x148] sm:$0xff]
  %v81 = vld [vmem:[%s0 + $0x150] sm:$0xff]
  %v82 = vld [vmem:[%s0 + $0x158] sm:$0xff]
  %v83 = vld [vmem:[%s0 + $0x160] sm:$0xff]
  %v84 = vld [vmem:[%s0 + $0x168] sm:$0xff]
  %v85 = vld [vmem:[%s0 + $0x170] sm:$0xff]
  %v86 = vld [vmem:[%s0 + $0x178] sm:$0xff]
  %v87 = vld [vmem:[%s0 + $0x180] sm:$0xff]
  %v88 = vld [vmem:[%s0 + $0x188] sm:$0xff]
  %v89 = vld [vmem:[%s0 + $0x190] sm:$0xff]
  %v90 = vld [vmem:[%s0 + $0x198] sm:$0xff]
  %v91 = vld [vmem:[%s0 + $0x1a0] sm:$0xff]
  %v92 = vld [vmem:[%s0 + $0x1a8] sm:$0xff]
  %v93 = vld [vmem:[%s0 + $0x1b0] sm:$0xff]
  %v94 = vld [vmem:[%s0 + $0x1b8] sm:$0xff]
  %v95 = vld [vmem:[%s0 + $0x1c0] sm:$0xff]
  %v96 = vld [vmem:[%s0 + $0x1c8] sm:$0xff]
  %v97 = vld [vmem:[%s0 + $0x1d0] sm:$0xff]
  %v98 = vld [vmem:[%s0 + $0x1d8] sm:$0xff]
  %v99 = vld [vmem:[%s0 + $0x1e0] sm:$0xff]
  %v100 = vld [vmem:[%s0 + $0x1e8] sm:$0xff]
  %v101 = vld [vmem:[%s0 + $0x1f0] sm:$0xff]
  %v102 = vld [vmem:[%s0 + $0x1f8] sm:$0xff]
  %v103 = vld [vmem:[%s0 + $0x200] sm:$0xff]
  %v104 = vld [vmem:[%s0 + $0x208] sm:$0xff]
  %v105 = vld [vmem:[%s0 + $0x210] sm:$0xff]
  %v106 = vld [vmem:[%s0 + $0x218] sm:$0xff]
  %v107 = vld [vmem:[%s0 + $0x220] sm:$0xff]
  %v108 = vld [vmem:[%s0 + $0x228] sm:$0xff]
  %v109 = vld [vmem:[%s0 + $0x230] sm:$0xff]
  %v110 = vld [vmem:[%s0 + $0x238] sm:$0xff]
  %v111 = vld [vmem:[%s0 + $0x240] sm:$0xff]
  %v112 = vld [vmem:[%s0 + $0x248] sm:$0xff]
  %v113 = vld [vmem:[%s0 + $0x250] sm:$0xff]
  %v114 = vld [vmem:[%s0 + $0x258] sm:$0xff]
  %v115 = vld [vmem:[%s0 + $0x260] sm:$0xff]
  %v116 = vld [vmem:[%s0 + $0x268] sm:$0xff]
  %v117 = vld [vmem:[%s0 + $0x270] sm:$0xff]
  %v118 = vld [vmem:[%s0 + $0x278] sm:$0xff]
  %v119 = vld [vmem:[%s0 + $0x280] sm:$0xff]
  %v120 = vld [vmem:[%s0 + $0x288] sm:$0xff]
  %v121 = vld [vmem:[%s0 + $0x290] sm:$0xff]
  %v122 = vld [vmem:[%s0 + $0x298] sm:$0xff]
  %v123 = vld [vmem:[%s0 + $0x2a0] sm:$0xff]
  %v124 = vld [vmem:[%s0 + $0x2a8] sm:$0xff]
  %v125 = vld [vmem:[%s0 + $0x2b0] sm:$0xff]
  %v126 = vld [vmem:[%s0 + $0x2b8] sm:$0xff]
  %v127 = vld [vmem:[%s0 + $0x2c0] sm:$0xff]
  %v128 = vld [vmem:[%s0 + $0x2c8] sm:$0xff]
  %v129 = vld [vmem:[%s0 + $0x2d0] sm:$0xff]
  %v130 = vld [vmem:[%s0 + $0x2d8] sm:$0xff]
  %v131 = vld [vmem:[%s0 + $0x2e0] sm:$0xff]
  %v132 = vld [vmem:[%s0 + $0x2e8] sm:$0xff]
  %v133 = vld [vmem:[%s0 + $0x2f0] sm:$0xff]
  %v134 = vld [vmem:[%s0 + $0x2f8] sm:$0xff]
  %v135 = vld [vmem:[%s0 + $0x300] sm:$0xff]
  %v136 = vld [vmem:[%s0 + $0x308] sm:$0xff]
  %v137 = vld [vmem:[%s0 + $0x310] sm:$0xff]
  %v138 = vld [vmem:[%s0 + $0x318] sm:$0xff]
  %v139 = vld [vmem:[%s0 + $0x320] sm:$0xff]
  %v140 = vld [vmem:[%s0 + $0x328] sm:$0xff]
  %v141 = vld [vmem:[%s0 + $0x330] sm:$0xff]
  %v142 = vld [vmem:[%s0 + $0x338] sm:$0xff]
  %v143 = vld [vmem:[%s0 + $0x340] sm:$0xff]
  %v144 = vld [vmem:[%s0 + $0x348] sm:$0xff]
  %v145 = vld [vmem:[%s0 + $0x350] sm:$0xff]
  %v146 = vld [vmem:[%s0 + $0x358] sm:$0xff]
  %v147 = vld [vmem:[%s0 + $0x360] sm:$0xff]
  %v148 = vld [vmem:[%s0 + $0x368] sm:$0xff]
  %v149 = vld [vmem:[%s0 + $0x370] sm:$0xff]
  %v150 = vld [vmem:[%s0 + $0x378] sm:$0xff]
  %v151 = vld [vmem:[%s0 + $0x380] sm:$0xff]
  %v152 = vld [vmem:[%s0 + $0x388] sm:$0xff]
  %v153 = vld [vmem:[%s0 + $0x390] sm:$0xff]
  %v154 = vld [vmem:[%s0 + $0x398] sm:$0xff]
  %v155 = vld [vmem:[%s0 + $0x3a0] sm:$0xff]
  %v156 = vld [vmem:[%s0 + $0x3a8] sm:$0xff]
  %v157 = vld [vmem:[%s0 + $0x3b0] sm:$0xff]
  %v158 = vld [vmem:[%s0 + $0x3b8] sm:$0xff]
  %v159 = vld [vmem:[%s0 + $0x3c0] sm:$0xff]
  %v160 = vld [vmem:[%s0 + $0x3c8] sm:$0xff]
  %v161 = vld [vmem:[%s0 + $0x3d0] sm:$0xff]
  %v162 = vld [vmem:[%s0 + $0x3d8] sm:$0xff]
  %v163 = vld [vmem:[%s0 + $0x3e0] sm:$0xff]
  %v164 = vld [vmem:[%s0 + $0x3e8] sm:$0xff]
  %v165 = vld [vmem:[%s0 + $0x3f0] sm:$0xff]
  %v166 = vld [vmem:[%s0 + $0x3f8] sm:$0xff]
  %v167 = vld [vmem:[%s0 + $0x400] sm:$0xff]
  %v168 = vld [vmem:[%s0 + $0x408] sm:$0xff]
  %v169 = vld [vmem:[%s0 + $0x410] sm:$0xff]
  %v170 = vld [vmem:[%s0 + $0x418] sm:$0xff]
  %v171 = vld [vmem:[%s0 + $0x420] sm:$0xff]
  %v172 = vld [vmem:[%s0 + $0x428] sm:$0xff]
  %v173 = vld [vmem:[%s0 + $0x430] sm:$0xff]
  %v174 = vld [vmem:[%s0 + $0x438] sm:$0xff]
  %v175 = vld [vmem:[%s0 + $0x440] sm:$0xff]
  %v176 = vld [vmem:[%s0 + $0x448] sm:$0xff]
  %v177 = vld [vmem:[%s0 + $0x450] sm:$0xff]
  %v178 = vld [vmem:[%s0 + $0x458] sm:$0xff]
  %v179 = vld [vmem:[%s0 + $0x460] sm:$0xff]
  %v180 = vld [vmem:[%s0 + $0x468] sm:$0xff]
  %v181 = vld [vmem:[%s0 + $0x470] sm:$0xff]
  %v182 = vld [vmem:[%s0 + $0x478] sm:$0xff]
  %v183 = vld [vmem:[%s0 + $0x480] sm:$0xff]
  %v184 = vld [vmem:[%s0 + $0x488] sm:$0xff]
  %v185 = vld [vmem:[%s0 + $0x490] sm:$0xff]
  %v186 = vld [vmem:[%s0 + $0x498] sm:$0xff]
  %v187 = vld [vmem:[%s0 + $0x4a0] sm:$0xff]
  %v188 = vld [vmem:[%s0 + $0x4a8] sm:$0xff]
  %v189 = vld [vmem:[%s0 + $0x4b0] sm:$0xff]
  %v190 = vld [vmem:[%s0 + $0x4b8] sm:$0xff]
  %v191 = vld [vmem:[%s0 + $0x4c0] sm:$0xff]
  %v192 = vld [vmem:[%s0 + $0x4c8] sm:$0xff]
  %v193 = vld [vmem:[%s0 + $0x4d0] sm:$0xff]
  %v194 = vld [vmem:[%s0 + $0x4d8] sm:$0xff]
  %v195 = vld [vmem:[%s0 + $0x4e0] sm:$0xff]
  %v196 = vld [vmem:[%s0 + $0x4e8] sm:$0xff]
  %v197 = vld [vmem:[%s0 + $0x4f0] sm:$0xff]
  %v198 = vld [vmem:[%s0 + $0x4f8] sm:$0xff]
  %v199 = vld [vmem:[%s0 + $0x500] sm:$0xff]
  %v200 = vld [vmem:[%s0 + $0x508] sm:$0xff]
  %v201 = vld [vmem:[%s0 + $0x510] sm:$0xff]
  %v202 = vld [vmem:[%s0 + $0x518] sm:$0xff]
  %v203 = vld [vmem:[%s0 + $0x520] sm:$0xff]
  %v204 = vld [vmem:[%s0 + $0x528] sm:$0xff]
  %v205 = vld [vmem:[%s0 + $0x530] sm:$0xff]
  %v206 = vld [vmem:[%s0 + $0x538] sm:$0xff]
  %v207 = vld [vmem:[%s0 + $0x540] sm:$0xff]
  %v208 = vld [vmem:[%s0 + $0x548] sm:$0xff]
  %v209 = vld [vmem:[%s0 + $0x550] sm:$0xff]
  %v210 = vld [vmem:[%s0 + $0x558] sm:$0xff]
  %v211 = vld [vmem:[%s0 + $0x560] sm:$0xff]
  %v212 = vld [vmem:[%s0 + $0x568] sm:$0xff]
  %v213 = vld [vmem:[%s0 + $0x570] sm:$0xff]
  %v214 = vld [vmem:[%s0 + $0x578] sm:$0xff]
  %v215 = vld [vmem:[%s0 + $0x580] sm:$0xff]
  %v216 = vld [vmem:[%s0 + $0x588] sm:$0xff]
  %v217 = vld [vmem:[%s0 + $0x590] sm:$0xff]
  %v218 = vld [vmem:[%s0 + $0x598] sm:$0xff]
  %v219 = vld [vmem:[%s0 + $0x5a0] sm:$0xff]
  %v220 = vld [vmem:[%s0 + $0x5a8] sm:$0xff]
  %v221 = vld [vmem:[%s0 + $0x5b0] sm:$0xff]
  %v222 = vld [vmem:[%s0 + $0x5b8] sm:$0xff]
  %v223 = vld [vmem:[%s0 + $0x5c0] sm:$0xff]
  %v224 = vld [vmem:[%s0 + $0x5c8] sm:$0xff]
  %v225 = vld [vmem:[%s0 + $0x5d0] sm:$0xff]
  %v226 = vld [vmem:[%s0 + $0x5d8] sm:$0xff]
  %v227 = vld [vmem:[%s0 + $0x5e0] sm:$0xff]
  %v228 = vld [vmem:[%s0 + $0x5e8] sm:$0xff]
  %v229 = vld [vmem:[%s0 + $0x5f0] sm:$0xff]
  %v230 = vld [vmem:[%s0 + $0x5f8] sm:$0xff]
  %v231 = vld [vmem:[%s0 + $0x600] sm:$0xff]
  %v232 = vld [vmem:[%s0 + $0x608] sm:$0xff]
  %v233 = vld [vmem:[%s0 + $0x610] sm:$0xff]
  %v234 = vld [vmem:[%s0 + $0x618] sm:$0xff]
  %v235 = vld [vmem:[%s0 + $0x620] sm:$0xff]
  %v236 = vld [vmem:[%s0 + $0x628] sm:$0xff]
  %v237 = vld [vmem:[%s0 + $0x630] sm:$0xff]
  %v238 = vld [vmem:[%s0 + $0x638] sm:$0xff]
  %v239 = vld [vmem:[%s0 + $0x640] sm:$0xff]
  %v240 = vld [vmem:[%s0 + $0x648] sm:$0xff]
  %v241 = vld [vmem:[%s0 + $0x650] sm:$0xff]
  %v242 = vld [vmem:[%s0 + $0x658] sm:$0xff]
  %v243 = vld [vmem:[%s0 + $0x660] sm:$0xff]
  %v244 = vld [vmem:[%s0 + $0x668] sm:$0xff]
  %v245 = vld [vmem:[%s0 + $0x670] sm:$0xff]
  %v246 = vld [vmem:[%s0 + $0x678] sm:$0xff]
  %v247 = vld [vmem:[%s0 + $0x680] sm:$0xff]
  %v248 = vld [vmem:[%s0 + $0x688] sm:$0xff]
  %v249 = vld [vmem:[%s0 + $0x690] sm:$0xff]
  %v250 = vld [vmem:[%s0 + $0x698] sm:$0xff]
  %v251 = vld [vmem:[%s0 + $0x6a0] sm:$0xff]
  %v252 = vld [vmem:[%s0 + $0x6a8] sm:$0xff]
  %v253 = vld [vmem:[%s0 + $0x6b0] sm:$0xff]
  %v254 = vld [vmem:[%s0 + $0x6b8] sm:$0xff]
  %v255 = vld [vmem:[%s0 + $0x6c0] sm:$0xff]
  %v256 = vld [vmem:[%s0 + $0x6c8] sm:$0xff]
  %v257 = vld [vmem:[%s0 + $0x6d0] sm:$0xff]
  %v258 = vld [vmem:[%s0 + $0x6d8] sm:$0xff]
  %v259 = vld [vmem:[%s0 + $0x6e0] sm:$0xff]
  %v260 = vld [vmem:[%s0 + $0x6e8] sm:$0xff]
  %v261 = vld [vmem:[%s0 + $0x6f0] sm:$0xff]
  %v262 = vld [vmem:[%s0 + $0x6f8] sm:$0xff]
  %v263 = vld [vmem:[%s1] sm:$0xff]
  %v264 = vld [vmem:[%s1 + $0x8] sm:$0xff]
  %v265 = vld [vmem:[%s1 + $0x10] sm:$0xff]
  %v266 = vld [vmem:[%s1 + $0x18] sm:$0xff]
  %v267 = vld [vmem:[%s1 + $0x20] sm:$0xff]
  %v268 = vld [vmem:[%s1 + $0x28] sm:$0xff]
  %v269 = vld [vmem:[%s1 + $0x30] sm:$0xff]
  %v270 = vld [vmem:[%s1 + $0x38] sm:$0xff]
  %v271 = vld [vmem:[%s1 + $0x40] sm:$0xff]
  %v272 = vld [vmem:[%s1 + $0x48] sm:$0xff]
  %v273 = vld [vmem:[%s1 + $0x50] sm:$0xff]
  %v274 = vld [vmem:[%s1 + $0x58] sm:$0xff]
  %v275 = vld [vmem:[%s1 + $0x60] sm:$0xff]
  %v276 = vld [vmem:[%s1 + $0x68] sm:$0xff]
  %v277 = vld [vmem:[%s1 + $0x70] sm:$0xff]
  %v278 = vld [vmem:[%s1 + $0x78] sm:$0xff]
  %v279 = vld [vmem:[%s1 + $0x80] sm:$0xff]
  %v280 = vld [vmem:[%s1 + $0x88] sm:$0xff]
  %v281 = vld [vmem:[%s1 + $0x90] sm:$0xff]
  %v282 = vld [vmem:[%s1 + $0x98] sm:$0xff]
  %v283 = vld [vmem:[%s1 + $0xa0] sm:$0xff]
  %v284 = vld [vmem:[%s1 + $0xa8] sm:$0xff]
  %v285 = vld [vmem:[%s1 + $0xb0] sm:$0xff]
  %v286 = vld [vmem:[%s1 + $0xb8] sm:$0xff]
  %v287 = vld [vmem:[%s1 + $0xc0] sm:$0xff]
  %v288 = vld [vmem:[%s1 + $0xc8] sm:$0xff]
  %v289 = vld [vmem:[%s1 + $0xd0] sm:$0xff]
  %v290 = vld [vmem:[%s1 + $0xd8] sm:$0xff]
  %v291 = vld [vmem:[%s1 + $0xe0] sm:$0xff]
  %v292 = vld [vmem:[%s1 + $0xe8] sm:$0xff]
  %v293 = vld [vmem:[%s1 + $0xf0] sm:$0xff]
  %v294 = vld [vmem:[%s1 + $0xf8] sm:$0xff]
  %v295 = vld [vmem:[%s1 + $0x100] sm:$0xff]
  %v296 = vld [vmem:[%s1 + $0x108] sm:$0xff]
  %v297 = vld [vmem:[%s1 + $0x110] sm:$0xff]
  %v298 = vld [vmem:[%s1 + $0x118] sm:$0xff]
  %v299 = vld [vmem:[%s1 + $0x120] sm:$0xff]
  %v300 = vld [vmem:[%s1 + $0x128] sm:$0xff]
  %v301 = vld [vmem:[%s1 + $0x130] sm:$0xff]
  %v302 = vld [vmem:[%s1 + $0x138] sm:$0xff]
  %v303 = vld [vmem:[%s1 + $0x140] sm:$0xff]
  %v304 = vld [vmem:[%s1 + $0x148] sm:$0xff]
  %v305 = vld [vmem:[%s1 + $0x150] sm:$0xff]
  %v306 = vld [vmem:[%s1 + $0x158] sm:$0xff]
  %v307 = vld [vmem:[%s1 + $0x160] sm:$0xff]
  %v308 = vld [vmem:[%s1 + $0x168] sm:$0xff]
  %v309 = vld [vmem:[%s1 + $0x170] sm:$0xff]
  %v310 = vld [vmem:[%s1 + $0x178] sm:$0xff]
  %v311 = vld [vmem:[%s1 + $0x180] sm:$0xff]
  %v312 = vld [vmem:[%s1 + $0x188] sm:$0xff]
  %v313 = vld [vmem:[%s1 + $0x190] sm:$0xff]
  %v314 = vld [vmem:[%s1 + $0x198] sm:$0xff]
  %v315 = vld [vmem:[%s1 + $0x1a0] sm:$0xff]
  %v316 = vld [vmem:[%s1 + $0x1a8] sm:$0xff]
  %v317 = vld [vmem:[%s1 + $0x1b0] sm:$0xff]
  %v318 = vld [vmem:[%s1 + $0x1b8] sm:$0xff]
  %v319 = vld [vmem:[%s1 + $0x1c0] sm:$0xff]
  %v320 = vld [vmem:[%s1 + $0x1c8] sm:$0xff]
  %v321 = vld [vmem:[%s1 + $0x1d0] sm:$0xff]
  %v322 = vld [vmem:[%s1 + $0x1d8] sm:$0xff]
  %v323 = vld [vmem:[%s1 + $0x1e0] sm:$0xff]
  %v324 = vld [vmem:[%s1 + $0x1e8] sm:$0xff]
  %v325 = vld [vmem:[%s1 + $0x1f0] sm:$0xff]
  %v326 = vld [vmem:[%s1 + $0x1f8] sm:$0xff]
  %v551 = vunpack.c.l.b16 %v39
  %v552 = vunpack.c.h.b16 %v39
  %v553 = vunpack.c.l.b16 %v40
  %v554 = vunpack.c.h.b16 %v40
  %v555 = vunpack.c.l.b16 %v41
  %v556 = vunpack.c.h.b16 %v41
  %v557 = vunpack.c.l.b16 %v42
  %v558 = vunpack.c.h.b16 %v42
  %v559 = vunpack.c.l.b16 %v43
  %v560 = vunpack.c.h.b16 %v43
  %v561 = vunpack.c.l.b16 %v44
  %v562 = vunpack.c.h.b16 %v44
  %v563 = vunpack.c.l.b16 %v45
  %v564 = vunpack.c.h.b16 %v45
  %v565 = vunpack.c.l.b16 %v46
  %v566 = vunpack.c.h.b16 %v46
  %v567 = vunpack.c.l.b16 %v47
  %v568 = vunpack.c.h.b16 %v47
  %v569 = vunpack.c.l.b16 %v48
  %v570 = vunpack.c.h.b16 %v48
  %v571 = vunpack.c.l.b16 %v49
  %v572 = vunpack.c.h.b16 %v49
  %v573 = vunpack.c.l.b16 %v50
  %v574 = vunpack.c.h.b16 %v50
  %v575 = vunpack.c.l.b16 %v51
  %v576 = vunpack.c.h.b16 %v51
  %v577 = vunpack.c.l.b16 %v52
  %v578 = vunpack.c.h.b16 %v52
  %v579 = vunpack.c.l.b16 %v53
  %v580 = vunpack.c.h.b16 %v53
  %v581 = vunpack.c.l.b16 %v54
  %v582 = vunpack.c.h.b16 %v54
  %v583 = vunpack.c.l.b16 %v55
  %v584 = vunpack.c.h.b16 %v55
  %v585 = vunpack.c.l.b16 %v56
  %v586 = vunpack.c.h.b16 %v56
  %v587 = vunpack.c.l.b16 %v57
  %v588 = vunpack.c.h.b16 %v57
  %v589 = vunpack.c.l.b16 %v58
  %v590 = vunpack.c.h.b16 %v58
  %v591 = vunpack.c.l.b16 %v59
  %v592 = vunpack.c.h.b16 %v59
  %v593 = vunpack.c.l.b16 %v60
  %v594 = vunpack.c.h.b16 %v60
  %v595 = vunpack.c.l.b16 %v61
  %v596 = vunpack.c.h.b16 %v61
  %v597 = vunpack.c.l.b16 %v62
  %v598 = vunpack.c.h.b16 %v62
  %v599 = vunpack.c.l.b16 %v63
  %v600 = vunpack.c.h.b16 %v63
  %v601 = vunpack.c.l.b16 %v64
  %v602 = vunpack.c.h.b16 %v64
  %v603 = vunpack.c.l.b16 %v65
  %v604 = vunpack.c.h.b16 %v65
  %v605 = vunpack.c.l.b16 %v66
  %v606 = vunpack.c.h.b16 %v66
  %v607 = vunpack.c.l.b16 %v67
  %v608 = vunpack.c.h.b16 %v67
  %v609 = vunpack.c.l.b16 %v68
  %v610 = vunpack.c.h.b16 %v68
  %v611 = vunpack.c.l.b16 %v69
  %v612 = vunpack.c.h.b16 %v69
  %v613 = vunpack.c.l.b16 %v70
  %v614 = vunpack.c.h.b16 %v70
  %v615 = vunpack.c.l.b16 %v71
  %v616 = vunpack.c.h.b16 %v71
  %v617 = vunpack.c.l.b16 %v72
  %v618 = vunpack.c.h.b16 %v72
  %v619 = vunpack.c.l.b16 %v73
  %v620 = vunpack.c.h.b16 %v73
  %v621 = vunpack.c.l.b16 %v74
  %v622 = vunpack.c.h.b16 %v74
  %v623 = vunpack.c.l.b16 %v75
  %v624 = vunpack.c.h.b16 %v75
  %v625 = vunpack.c.l.b16 %v76
  %v626 = vunpack.c.h.b16 %v76
  %v627 = vunpack.c.l.b16 %v77
  %v628 = vunpack.c.h.b16 %v77
  %v629 = vunpack.c.l.b16 %v78
  %v630 = vunpack.c.h.b16 %v78
  %v631 = vunpack.c.l.b16 %v79
  %v632 = vunpack.c.h.b16 %v79
  %v633 = vunpack.c.l.b16 %v80
  %v634 = vunpack.c.h.b16 %v80
  %v635 = vunpack.c.l.b16 %v81
  %v636 = vunpack.c.h.b16 %v81
  %v637 = vunpack.c.l.b16 %v82
  %v638 = vunpack.c.h.b16 %v82
  %v639 = vunpack.c.l.b16 %v83
  %v640 = vunpack.c.h.b16 %v83
  %v641 = vunpack.c.l.b16 %v84
  %v642 = vunpack.c.h.b16 %v84
  %v643 = vunpack.c.l.b16 %v85
  %v644 = vunpack.c.h.b16 %v85
  %v645 = vunpack.c.l.b16 %v86
  %v646 = vunpack.c.h.b16 %v86
  %v647 = vunpack.c.l.b16 %v87
  %v648 = vunpack.c.h.b16 %v87
  %v649 = vunpack.c.l.b16 %v88
  %v650 = vunpack.c.h.b16 %v88
  %v651 = vunpack.c.l.b16 %v89
  %v652 = vunpack.c.h.b16 %v89
  %v653 = vunpack.c.l.b16 %v90
  %v654 = vunpack.c.h.b16 %v90
  %v655 = vunpack.c.l.b16 %v91
  %v656 = vunpack.c.h.b16 %v91
  %v657 = vunpack.c.l.b16 %v92
  %v658 = vunpack.c.h.b16 %v92
  %v659 = vunpack.c.l.b16 %v93
  %v660 = vunpack.c.h.b16 %v93
  %v661 = vunpack.c.l.b16 %v94
  %v662 = vunpack.c.h.b16 %v94
  %v663 = vunpack.c.l.b16 %v95
  %v664 = vunpack.c.h.b16 %v95
  %v665 = vunpack.c.l.b16 %v96
  %v666 = vunpack.c.h.b16 %v96
  %v667 = vunpack.c.l.b16 %v97
  %v668 = vunpack.c.h.b16 %v97
  %v669 = vunpack.c.l.b16 %v98
  %v670 = vunpack.c.h.b16 %v98
  %v671 = vunpack.c.l.b16 %v99
  %v672 = vunpack.c.h.b16 %v99
  %v673 = vunpack.c.l.b16 %v100
  %v674 = vunpack.c.h.b16 %v100
  %v675 = vunpack.c.l.b16 %v101
  %v676 = vunpack.c.h.b16 %v101
  %v677 = vunpack.c.l.b16 %v102
  %v678 = vunpack.c.h.b16 %v102
  %v679 = vunpack.c.l.b16 %v103
  %v680 = vunpack.c.h.b16 %v103
  %v681 = vunpack.c.l.b16 %v104
  %v682 = vunpack.c.h.b16 %v104
  %v683 = vunpack.c.l.b16 %v105
  %v684 = vunpack.c.h.b16 %v105
  %v685 = vunpack.c.l.b16 %v106
  %v686 = vunpack.c.h.b16 %v106
  %v687 = vunpack.c.l.b16 %v107
  %v688 = vunpack.c.h.b16 %v107
  %v689 = vunpack.c.l.b16 %v108
  %v690 = vunpack.c.h.b16 %v108
  %v691 = vunpack.c.l.b16 %v109
  %v692 = vunpack.c.h.b16 %v109
  %v693 = vunpack.c.l.b16 %v110
  %v694 = vunpack.c.h.b16 %v110
  %v695 = vunpack.c.l.b16 %v111
  %v696 = vunpack.c.h.b16 %v111
  %v697 = vunpack.c.l.b16 %v112
  %v698 = vunpack.c.h.b16 %v112
  %v699 = vunpack.c.l.b16 %v113
  %v700 = vunpack.c.h.b16 %v113
  %v701 = vunpack.c.l.b16 %v114
  %v702 = vunpack.c.h.b16 %v114
  %v703 = vunpack.c.l.b16 %v115
  %v704 = vunpack.c.h.b16 %v115
  %v705 = vunpack.c.l.b16 %v116
  %v706 = vunpack.c.h.b16 %v116
  %v707 = vunpack.c.l.b16 %v117
  %v708 = vunpack.c.h.b16 %v117
  %v709 = vunpack.c.l.b16 %v118
  %v710 = vunpack.c.h.b16 %v118
  %v711 = vunpack.c.l.b16 %v119
  %v712 = vunpack.c.h.b16 %v119
  %v713 = vunpack.c.l.b16 %v120
  %v714 = vunpack.c.h.b16 %v120
  %v715 = vunpack.c.l.b16 %v121
  %v716 = vunpack.c.h.b16 %v121
  %v717 = vunpack.c.l.b16 %v122
  %v718 = vunpack.c.h.b16 %v122
  %v719 = vunpack.c.l.b16 %v123
  %v720 = vunpack.c.h.b16 %v123
  %v721 = vunpack.c.l.b16 %v124
  %v722 = vunpack.c.h.b16 %v124
  %v723 = vunpack.c.l.b16 %v125
  %v724 = vunpack.c.h.b16 %v125
  %v725 = vunpack.c.l.b16 %v126
  %v726 = vunpack.c.h.b16 %v126
  %v727 = vunpack.c.l.b16 %v127
  %v728 = vunpack.c.h.b16 %v127
  %v729 = vunpack.c.l.b16 %v128
  %v730 = vunpack.c.h.b16 %v128
  %v731 = vunpack.c.l.b16 %v129
  %v732 = vunpack.c.h.b16 %v129
  %v733 = vunpack.c.l.b16 %v130
  %v734 = vunpack.c.h.b16 %v130
  %v735 = vunpack.c.l.b16 %v131
  %v736 = vunpack.c.h.b16 %v131
  %v737 = vunpack.c.l.b16 %v132
  %v738 = vunpack.c.h.b16 %v132
  %v739 = vunpack.c.l.b16 %v133
  %v740 = vunpack.c.h.b16 %v133
  %v741 = vunpack.c.l.b16 %v134
  %v742 = vunpack.c.h.b16 %v134
  %v743 = vunpack.c.l.b16 %v135
  %v744 = vunpack.c.h.b16 %v135
  %v745 = vunpack.c.l.b16 %v136
  %v746 = vunpack.c.h.b16 %v136
  %v747 = vunpack.c.l.b16 %v137
  %v748 = vunpack.c.h.b16 %v137
  %v749 = vunpack.c.l.b16 %v138
  %v750 = vunpack.c.h.b16 %v138
  %v751 = vunpack.c.l.b16 %v139
  %v752 = vunpack.c.h.b16 %v139
  %v753 = vunpack.c.l.b16 %v140
  %v754 = vunpack.c.h.b16 %v140
  %v755 = vunpack.c.l.b16 %v141
  %v756 = vunpack.c.h.b16 %v141
  %v757 = vunpack.c.l.b16 %v142
  %v758 = vunpack.c.h.b16 %v142
  %v759 = vunpack.c.l.b16 %v143
  %v760 = vunpack.c.h.b16 %v143
  %v761 = vunpack.c.l.b16 %v144
  %v762 = vunpack.c.h.b16 %v144
  %v763 = vunpack.c.l.b16 %v145
  %v764 = vunpack.c.h.b16 %v145
  %v765 = vunpack.c.l.b16 %v146
  %v766 = vunpack.c.h.b16 %v146
  %v767 = vunpack.c.l.b16 %v147
  %v768 = vunpack.c.h.b16 %v147
  %v769 = vunpack.c.l.b16 %v148
  %v770 = vunpack.c.h.b16 %v148
  %v771 = vunpack.c.l.b16 %v149
  %v772 = vunpack.c.h.b16 %v149
  %v773 = vunpack.c.l.b16 %v150
  %v774 = vunpack.c.h.b16 %v150
  %v775 = vunpack.c.l.b16 %v151
  %v776 = vunpack.c.h.b16 %v151
  %v777 = vunpack.c.l.b16 %v152
  %v778 = vunpack.c.h.b16 %v152
  %v779 = vunpack.c.l.b16 %v153
  %v780 = vunpack.c.h.b16 %v153
  %v781 = vunpack.c.l.b16 %v154
  %v782 = vunpack.c.h.b16 %v154
  %v783 = vunpack.c.l.b16 %v155
  %v784 = vunpack.c.h.b16 %v155
  %v785 = vunpack.c.l.b16 %v156
  %v786 = vunpack.c.h.b16 %v156
  %v787 = vunpack.c.l.b16 %v157
  %v788 = vunpack.c.h.b16 %v157
  %v789 = vunpack.c.l.b16 %v158
  %v790 = vunpack.c.h.b16 %v158
  %v791 = vunpack.c.l.b16 %v159
  %v792 = vunpack.c.h.b16 %v159
  %v793 = vunpack.c.l.b16 %v160
  %v794 = vunpack.c.h.b16 %v160
  %v795 = vunpack.c.l.b16 %v161
  %v796 = vunpack.c.h.b16 %v161
  %v797 = vunpack.c.l.b16 %v162
  %v798 = vunpack.c.h.b16 %v162
  %v799 = vunpack.c.l.b16 %v163
  %v800 = vunpack.c.h.b16 %v163
  %v801 = vunpack.c.l.b16 %v164
  %v802 = vunpack.c.h.b16 %v164
  %v803 = vunpack.c.l.b16 %v165
  %v804 = vunpack.c.h.b16 %v165
  %v805 = vunpack.c.l.b16 %v166
  %v806 = vunpack.c.h.b16 %v166
  %v807 = vunpack.c.l.b16 %v167
  %v808 = vunpack.c.h.b16 %v167
  %v809 = vunpack.c.l.b16 %v168
  %v810 = vunpack.c.h.b16 %v168
  %v811 = vunpack.c.l.b16 %v169
  %v812 = vunpack.c.h.b16 %v169
  %v813 = vunpack.c.l.b16 %v170
  %v814 = vunpack.c.h.b16 %v170
  %v815 = vunpack.c.l.b16 %v171
  %v816 = vunpack.c.h.b16 %v171
  %v817 = vunpack.c.l.b16 %v172
  %v818 = vunpack.c.h.b16 %v172
  %v819 = vunpack.c.l.b16 %v173
  %v820 = vunpack.c.h.b16 %v173
  %v821 = vunpack.c.l.b16 %v174
  %v822 = vunpack.c.h.b16 %v174
  %v823 = vunpack.c.l.b16 %v175
  %v824 = vunpack.c.h.b16 %v175
  %v825 = vunpack.c.l.b16 %v176
  %v826 = vunpack.c.h.b16 %v176
  %v827 = vunpack.c.l.b16 %v177
  %v828 = vunpack.c.h.b16 %v177
  %v829 = vunpack.c.l.b16 %v178
  %v830 = vunpack.c.h.b16 %v178
  %v831 = vunpack.c.l.b16 %v179
  %v832 = vunpack.c.h.b16 %v179
  %v833 = vunpack.c.l.b16 %v180
  %v834 = vunpack.c.h.b16 %v180
  %v835 = vunpack.c.l.b16 %v181
  %v836 = vunpack.c.h.b16 %v181
  %v837 = vunpack.c.l.b16 %v182
  %v838 = vunpack.c.h.b16 %v182
  %v839 = vunpack.c.l.b16 %v183
  %v840 = vunpack.c.h.b16 %v183
  %v841 = vunpack.c.l.b16 %v184
  %v842 = vunpack.c.h.b16 %v184
  %v843 = vunpack.c.l.b16 %v185
  %v844 = vunpack.c.h.b16 %v185
  %v845 = vunpack.c.l.b16 %v186
  %v846 = vunpack.c.h.b16 %v186
  %v847 = vunpack.c.l.b16 %v187
  %v848 = vunpack.c.h.b16 %v187
  %v849 = vunpack.c.l.b16 %v188
  %v850 = vunpack.c.h.b16 %v188
  %v851 = vunpack.c.l.b16 %v189
  %v852 = vunpack.c.h.b16 %v189
  %v853 = vunpack.c.l.b16 %v190
  %v854 = vunpack.c.h.b16 %v190
  %v855 = vunpack.c.l.b16 %v191
  %v856 = vunpack.c.h.b16 %v191
  %v857 = vunpack.c.l.b16 %v192
  %v858 = vunpack.c.h.b16 %v192
  %v859 = vunpack.c.l.b16 %v193
  %v860 = vunpack.c.h.b16 %v193
  %v861 = vunpack.c.l.b16 %v194
  %v862 = vunpack.c.h.b16 %v194
  %v863 = vunpack.c.l.b16 %v195
  %v864 = vunpack.c.h.b16 %v195
  %v865 = vunpack.c.l.b16 %v196
  %v866 = vunpack.c.h.b16 %v196
  %v867 = vunpack.c.l.b16 %v197
  %v868 = vunpack.c.h.b16 %v197
  %v869 = vunpack.c.l.b16 %v198
  %v870 = vunpack.c.h.b16 %v198
  %v871 = vunpack.c.l.b16 %v199
  %v872 = vunpack.c.h.b16 %v199
  %v873 = vunpack.c.l.b16 %v200
  %v874 = vunpack.c.h.b16 %v200
  %v875 = vunpack.c.l.b16 %v201
  %v876 = vunpack.c.h.b16 %v201
  %v877 = vunpack.c.l.b16 %v202
  %v878 = vunpack.c.h.b16 %v202
  %v879 = vunpack.c.l.b16 %v203
  %v880 = vunpack.c.h.b16 %v203
  %v881 = vunpack.c.l.b16 %v204
  %v882 = vunpack.c.h.b16 %v204
  %v883 = vunpack.c.l.b16 %v205
  %v884 = vunpack.c.h.b16 %v205
  %v885 = vunpack.c.l.b16 %v206
  %v886 = vunpack.c.h.b16 %v206
  %v887 = vunpack.c.l.b16 %v207
  %v888 = vunpack.c.h.b16 %v207
  %v889 = vunpack.c.l.b16 %v208
  %v890 = vunpack.c.h.b16 %v208
  %v891 = vunpack.c.l.b16 %v209
  %v892 = vunpack.c.h.b16 %v209
  %v893 = vunpack.c.l.b16 %v210
  %v894 = vunpack.c.h.b16 %v210
  %v895 = vunpack.c.l.b16 %v211
  %v896 = vunpack.c.h.b16 %v211
  %v897 = vunpack.c.l.b16 %v212
  %v898 = vunpack.c.h.b16 %v212
  %v899 = vunpack.c.l.b16 %v213
  %v900 = vunpack.c.h.b16 %v213
  %v901 = vunpack.c.l.b16 %v214
  %v902 = vunpack.c.h.b16 %v214
  %v903 = vunpack.c.l.b16 %v215
  %v904 = vunpack.c.h.b16 %v215
  %v905 = vunpack.c.l.b16 %v216
  %v906 = vunpack.c.h.b16 %v216
  %v907 = vunpack.c.l.b16 %v217
  %v908 = vunpack.c.h.b16 %v217
  %v909 = vunpack.c.l.b16 %v218
  %v910 = vunpack.c.h.b16 %v218
  %v911 = vunpack.c.l.b16 %v219
  %v912 = vunpack.c.h.b16 %v219
  %v913 = vunpack.c.l.b16 %v220
  %v914 = vunpack.c.h.b16 %v220
  %v915 = vunpack.c.l.b16 %v221
  %v916 = vunpack.c.h.b16 %v221
  %v917 = vunpack.c.l.b16 %v222
  %v918 = vunpack.c.h.b16 %v222
  %v919 = vunpack.c.l.b16 %v223
  %v920 = vunpack.c.h.b16 %v223
  %v921 = vunpack.c.l.b16 %v224
  %v922 = vunpack.c.h.b16 %v224
  %v923 = vunpack.c.l.b16 %v225
  %v924 = vunpack.c.h.b16 %v225
  %v925 = vunpack.c.l.b16 %v226
  %v926 = vunpack.c.h.b16 %v226
  %v927 = vunpack.c.l.b16 %v227
  %v928 = vunpack.c.h.b16 %v227
  %v929 = vunpack.c.l.b16 %v228
  %v930 = vunpack.c.h.b16 %v228
  %v931 = vunpack.c.l.b16 %v229
  %v932 = vunpack.c.h.b16 %v229
  %v933 = vunpack.c.l.b16 %v230
  %v934 = vunpack.c.h.b16 %v230
  %v935 = vunpack.c.l.b16 %v231
  %v936 = vunpack.c.h.b16 %v231
  %v937 = vunpack.c.l.b16 %v232
  %v938 = vunpack.c.h.b16 %v232
  %v939 = vunpack.c.l.b16 %v233
  %v940 = vunpack.c.h.b16 %v233
  %v941 = vunpack.c.l.b16 %v234
  %v942 = vunpack.c.h.b16 %v234
  %v943 = vunpack.c.l.b16 %v235
  %v944 = vunpack.c.h.b16 %v235
  %v945 = vunpack.c.l.b16 %v236
  %v946 = vunpack.c.h.b16 %v236
  %v947 = vunpack.c.l.b16 %v237
  %v948 = vunpack.c.h.b16 %v237
  %v949 = vunpack.c.l.b16 %v238
  %v950 = vunpack.c.h.b16 %v238
  %v951 = vunpack.c.l.b16 %v239
  %v952 = vunpack.c.h.b16 %v239
  %v953 = vunpack.c.l.b16 %v240
  %v954 = vunpack.c.h.b16 %v240
  %v955 = vunpack.c.l.b16 %v241
  %v956 = vunpack.c.h.b16 %v241
  %v957 = vunpack.c.l.b16 %v242
  %v958 = vunpack.c.h.b16 %v242
  %v959 = vunpack.c.l.b16 %v243
  %v960 = vunpack.c.h.b16 %v243
  %v961 = vunpack.c.l.b16 %v244
  %v962 = vunpack.c.h.b16 %v244
  %v963 = vunpack.c.l.b16 %v245
  %v964 = vunpack.c.h.b16 %v245
  %v965 = vunpack.c.l.b16 %v246
  %v966 = vunpack.c.h.b16 %v246
  %v967 = vunpack.c.l.b16 %v247
  %v968 = vunpack.c.h.b16 %v247
  %v969 = vunpack.c.l.b16 %v248
  %v970 = vunpack.c.h.b16 %v248
  %v971 = vunpack.c.l.b16 %v249
  %v972 = vunpack.c.h.b16 %v249
  %v973 = vunpack.c.l.b16 %v250
  %v974 = vunpack.c.h.b16 %v250
  %v975 = vunpack.c.l.b16 %v251
  %v976 = vunpack.c.h.b16 %v251
  %v977 = vunpack.c.l.b16 %v252
  %v978 = vunpack.c.h.b16 %v252
  %v979 = vunpack.c.l.b16 %v253
  %v980 = vunpack.c.h.b16 %v253
  %v981 = vunpack.c.l.b16 %v254
  %v982 = vunpack.c.h.b16 %v254
  %v983 = vunpack.c.l.b16 %v255
  %v984 = vunpack.c.h.b16 %v255
  %v985 = vunpack.c.l.b16 %v256
  %v986 = vunpack.c.h.b16 %v256
  %v987 = vunpack.c.l.b16 %v257
  %v988 = vunpack.c.h.b16 %v257
  %v989 = vunpack.c.l.b16 %v258
  %v990 = vunpack.c.h.b16 %v258
  %v991 = vunpack.c.l.b16 %v259
  %v992 = vunpack.c.h.b16 %v259
  %v993 = vunpack.c.l.b16 %v260
  %v994 = vunpack.c.h.b16 %v260
  %v995 = vunpack.c.l.b16 %v261
  %v996 = vunpack.c.h.b16 %v261
  %v997 = vunpack.c.l.b16 %v262
  %v998 = vunpack.c.h.b16 %v262
  %v999 = vpack.c.b16 %v555, %v551
  %v1000 = vpack.c.b16 %v556, %v552
  %v1001 = vpack.c.b16 %v557, %v553
  %v1002 = vpack.c.b16 %v558, %v554
  %v1003 = vpack.c.b16 %v563, %v559
  %v1004 = vpack.c.b16 %v564, %v560
  %v1005 = vpack.c.b16 %v565, %v561
  %v1006 = vpack.c.b16 %v566, %v562
  %v1007 = vpack.c.b16 %v571, %v567
  %v1008 = vpack.c.b16 %v572, %v568
  %v1009 = vpack.c.b16 %v573, %v569
  %v1010 = vpack.c.b16 %v574, %v570
  %v1011 = vpack.c.b16 %v579, %v575
  %v1012 = vpack.c.b16 %v580, %v576
  %v1013 = vpack.c.b16 %v581, %v577
  %v1014 = vpack.c.b16 %v582, %v578
  %v1015 = vpack.c.b16 %v587, %v583
  %v1016 = vpack.c.b16 %v588, %v584
  %v1017 = vpack.c.b16 %v589, %v585
  %v1018 = vpack.c.b16 %v590, %v586
  %v1019 = vpack.c.b16 %v595, %v591
  %v1020 = vpack.c.b16 %v596, %v592
  %v1021 = vpack.c.b16 %v597, %v593
  %v1022 = vpack.c.b16 %v598, %v594
  %v1023 = vpack.c.b16 %v603, %v599
  %v1024 = vpack.c.b16 %v604, %v600
  %v1025 = vpack.c.b16 %v605, %v601
  %v1026 = vpack.c.b16 %v606, %v602
  %v1027 = vpack.c.b16 %v611, %v607
  %v1028 = vpack.c.b16 %v612, %v608
  %v1029 = vpack.c.b16 %v613, %v609
  %v1030 = vpack.c.b16 %v614, %v610
  %v1031 = vpack.c.b16 %v619, %v615
  %v1032 = vpack.c.b16 %v620, %v616
  %v1033 = vpack.c.b16 %v621, %v617
  %v1034 = vpack.c.b16 %v622, %v618
  %v1035 = vpack.c.b16 %v627, %v623
  %v1036 = vpack.c.b16 %v628, %v624
  %v1037 = vpack.c.b16 %v629, %v625
  %v1038 = vpack.c.b16 %v630, %v626
  %v1039 = vpack.c.b16 %v635, %v631
  %v1040 = vpack.c.b16 %v636, %v632
  %v1041 = vpack.c.b16 %v637, %v633
  %v1042 = vpack.c.b16 %v638, %v634
  %v1043 = vpack.c.b16 %v643, %v639
  %v1044 = vpack.c.b16 %v644, %v640
  %v1045 = vpack.c.b16 %v645, %v641
  %v1046 = vpack.c.b16 %v646, %v642
  %v1047 = vpack.c.b16 %v651, %v647
  %v1048 = vpack.c.b16 %v652, %v648
  %v1049 = vpack.c.b16 %v653, %v649
  %v1050 = vpack.c.b16 %v654, %v650
  %v1051 = vpack.c.b16 %v659, %v655
  %v1052 = vpack.c.b16 %v660, %v656
  %v1053 = vpack.c.b16 %v661, %v657
  %v1054 = vpack.c.b16 %v662, %v658
  %v1055 = vpack.c.b16 %v667, %v663
  %v1056 = vpack.c.b16 %v668, %v664
  %v1057 = vpack.c.b16 %v669, %v665
  %v1058 = vpack.c.b16 %v670, %v666
  %v1059 = vpack.c.b16 %v675, %v671
  %v1060 = vpack.c.b16 %v676, %v672
  %v1061 = vpack.c.b16 %v677, %v673
  %v1062 = vpack.c.b16 %v678, %v674
  %v1063 = vpack.c.b16 %v683, %v679
  %v1064 = vpack.c.b16 %v684, %v680
  %v1065 = vpack.c.b16 %v685, %v681
  %v1066 = vpack.c.b16 %v686, %v682
  %v1067 = vpack.c.b16 %v691, %v687
  %v1068 = vpack.c.b16 %v692, %v688
  %v1069 = vpack.c.b16 %v693, %v689
  %v1070 = vpack.c.b16 %v694, %v690
  %v1071 = vpack.c.b16 %v699, %v695
  %v1072 = vpack.c.b16 %v700, %v696
  %v1073 = vpack.c.b16 %v701, %v697
  %v1074 = vpack.c.b16 %v702, %v698
  %v1075 = vpack.c.b16 %v707, %v703
  %v1076 = vpack.c.b16 %v708, %v704
  %v1077 = vpack.c.b16 %v709, %v705
  %v1078 = vpack.c.b16 %v710, %v706
  %v1079 = vpack.c.b16 %v715, %v711
  %v1080 = vpack.c.b16 %v716, %v712
  %v1081 = vpack.c.b16 %v717, %v713
  %v1082 = vpack.c.b16 %v718, %v714
  %v1083 = vpack.c.b16 %v723, %v719
  %v1084 = vpack.c.b16 %v724, %v720
  %v1085 = vpack.c.b16 %v725, %v721
  %v1086 = vpack.c.b16 %v726, %v722
  %v1087 = vpack.c.b16 %v731, %v727
  %v1088 = vpack.c.b16 %v732, %v728
  %v1089 = vpack.c.b16 %v733, %v729
  %v1090 = vpack.c.b16 %v734, %v730
  %v1091 = vpack.c.b16 %v739, %v735
  %v1092 = vpack.c.b16 %v740, %v736
  %v1093 = vpack.c.b16 %v741, %v737
  %v1094 = vpack.c.b16 %v742, %v738
  %v1095 = vpack.c.b16 %v747, %v743
  %v1096 = vpack.c.b16 %v748, %v744
  %v1097 = vpack.c.b16 %v749, %v745
  %v1098 = vpack.c.b16 %v750, %v746
  %v1099 = vpack.c.b16 %v755, %v751
  %v1100 = vpack.c.b16 %v756, %v752
  %v1101 = vpack.c.b16 %v757, %v753
  %v1102 = vpack.c.b16 %v758, %v754
  %v1103 = vpack.c.b16 %v763, %v759
  %v1104 = vpack.c.b16 %v764, %v760
  %v1105 = vpack.c.b16 %v765, %v761
  %v1106 = vpack.c.b16 %v766, %v762
  %v1107 = vpack.c.b16 %v771, %v767
  %v1108 = vpack.c.b16 %v772, %v768
  %v1109 = vpack.c.b16 %v773, %v769
  %v1110 = vpack.c.b16 %v774, %v770
  %v1111 = vpack.c.b16 %v779, %v775
  %v1112 = vpack.c.b16 %v780, %v776
  %v1113 = vpack.c.b16 %v781, %v777
  %v1114 = vpack.c.b16 %v782, %v778
  %v1115 = vpack.c.b16 %v787, %v783
  %v1116 = vpack.c.b16 %v788, %v784
  %v1117 = vpack.c.b16 %v789, %v785
  %v1118 = vpack.c.b16 %v790, %v786
  %v1119 = vpack.c.b16 %v795, %v791
  %v1120 = vpack.c.b16 %v796, %v792
  %v1121 = vpack.c.b16 %v797, %v793
  %v1122 = vpack.c.b16 %v798, %v794
  %v1123 = vpack.c.b16 %v803, %v799
  %v1124 = vpack.c.b16 %v804, %v800
  %v1125 = vpack.c.b16 %v805, %v801
  %v1126 = vpack.c.b16 %v806, %v802
  %v1127 = vpack.c.b16 %v811, %v807
  %v1128 = vpack.c.b16 %v812, %v808
  %v1129 = vpack.c.b16 %v813, %v809
  %v1130 = vpack.c.b16 %v814, %v810
  %v1131 = vpack.c.b16 %v819, %v815
  %v1132 = vpack.c.b16 %v820, %v816
  %v1133 = vpack.c.b16 %v821, %v817
  %v1134 = vpack.c.b16 %v822, %v818
  %v1135 = vpack.c.b16 %v827, %v823
  %v1136 = vpack.c.b16 %v828, %v824
  %v1137 = vpack.c.b16 %v829, %v825
  %v1138 = vpack.c.b16 %v830, %v826
  %v1139 = vpack.c.b16 %v835, %v831
  %v1140 = vpack.c.b16 %v836, %v832
  %v1141 = vpack.c.b16 %v837, %v833
  %v1142 = vpack.c.b16 %v838, %v834
  %v1143 = vpack.c.b16 %v843, %v839
  %v1144 = vpack.c.b16 %v844, %v840
  %v1145 = vpack.c.b16 %v845, %v841
  %v1146 = vpack.c.b16 %v846, %v842
  %v1147 = vpack.c.b16 %v851, %v847
  %v1148 = vpack.c.b16 %v852, %v848
  %v1149 = vpack.c.b16 %v853, %v849
  %v1150 = vpack.c.b16 %v854, %v850
  %v1151 = vpack.c.b16 %v859, %v855
  %v1152 = vpack.c.b16 %v860, %v856
  %v1153 = vpack.c.b16 %v861, %v857
  %v1154 = vpack.c.b16 %v862, %v858
  %v1155 = vpack.c.b16 %v867, %v863
  %v1156 = vpack.c.b16 %v868, %v864
  %v1157 = vpack.c.b16 %v869, %v865
  %v1158 = vpack.c.b16 %v870, %v866
  %v1159 = vpack.c.b16 %v875, %v871
  %v1160 = vpack.c.b16 %v876, %v872
  %v1161 = vpack.c.b16 %v877, %v873
  %v1162 = vpack.c.b16 %v878, %v874
  %v1163 = vpack.c.b16 %v883, %v879
  %v1164 = vpack.c.b16 %v884, %v880
  %v1165 = vpack.c.b16 %v885, %v881
  %v1166 = vpack.c.b16 %v886, %v882
  %v1167 = vpack.c.b16 %v891, %v887
  %v1168 = vpack.c.b16 %v892, %v888
  %v1169 = vpack.c.b16 %v893, %v889
  %v1170 = vpack.c.b16 %v894, %v890
  %v1171 = vpack.c.b16 %v899, %v895
  %v1172 = vpack.c.b16 %v900, %v896
  %v1173 = vpack.c.b16 %v901, %v897
  %v1174 = vpack.c.b16 %v902, %v898
  %v1175 = vpack.c.b16 %v907, %v903
  %v1176 = vpack.c.b16 %v908, %v904
  %v1177 = vpack.c.b16 %v909, %v905
  %v1178 = vpack.c.b16 %v910, %v906
  %v1179 = vpack.c.b16 %v915, %v911
  %v1180 = vpack.c.b16 %v916, %v912
  %v1181 = vpack.c.b16 %v917, %v913
  %v1182 = vpack.c.b16 %v918, %v914
  %v1183 = vpack.c.b16 %v923, %v919
  %v1184 = vpack.c.b16 %v924, %v920
  %v1185 = vpack.c.b16 %v925, %v921
  %v1186 = vpack.c.b16 %v926, %v922
  %v1187 = vpack.c.b16 %v931, %v927
  %v1188 = vpack.c.b16 %v932, %v928
  %v1189 = vpack.c.b16 %v933, %v929
  %v1190 = vpack.c.b16 %v934, %v930
  %v1191 = vpack.c.b16 %v939, %v935
  %v1192 = vpack.c.b16 %v940, %v936
  %v1193 = vpack.c.b16 %v941, %v937
  %v1194 = vpack.c.b16 %v942, %v938
  %v1195 = vpack.c.b16 %v947, %v943
  %v1196 = vpack.c.b16 %v948, %v944
  %v1197 = vpack.c.b16 %v949, %v945
  %v1198 = vpack.c.b16 %v950, %v946
  %v1199 = vpack.c.b16 %v955, %v951
  %v1200 = vpack.c.b16 %v956, %v952
  %v1201 = vpack.c.b16 %v957, %v953
  %v1202 = vpack.c.b16 %v958, %v954
  %v1203 = vpack.c.b16 %v963, %v959
  %v1204 = vpack.c.b16 %v964, %v960
  %v1205 = vpack.c.b16 %v965, %v961
  %v1206 = vpack.c.b16 %v966, %v962
  %v1207 = vpack.c.b16 %v971, %v967
  %v1208 = vpack.c.b16 %v972, %v968
  %v1209 = vpack.c.b16 %v973, %v969
  %v1210 = vpack.c.b16 %v974, %v970
  %v1211 = vpack.c.b16 %v979, %v975
  %v1212 = vpack.c.b16 %v980, %v976
  %v1213 = vpack.c.b16 %v981, %v977
  %v1214 = vpack.c.b16 %v982, %v978
  %v1215 = vpack.c.b16 %v987, %v983
  %v1216 = vpack.c.b16 %v988, %v984
  %v1217 = vpack.c.b16 %v989, %v985
  %v1218 = vpack.c.b16 %v990, %v986
  %v1219 = vpack.c.b16 %v995, %v991
  %v1220 = vpack.c.b16 %v996, %v992
  %v1221 = vpack.c.b16 %v997, %v993
  %v1222 = vpack.c.b16 %v998, %v994
  %v1511 = vunpack.c.l.b16 %v263
  %v1512 = vunpack.c.h.b16 %v263
  %v1513 = vunpack.c.l.b16 %v264
  %v1514 = vunpack.c.h.b16 %v264
  %v1515 = vunpack.c.l.b16 %v265
  %v1516 = vunpack.c.h.b16 %v265
  %v1517 = vunpack.c.l.b16 %v266
  %v1518 = vunpack.c.h.b16 %v266
  %v1519 = vunpack.c.l.b16 %v267
  %v1520 = vunpack.c.h.b16 %v267
  %v1521 = vunpack.c.l.b16 %v268
  %v1522 = vunpack.c.h.b16 %v268
  %v1523 = vunpack.c.l.b16 %v269
  %v1524 = vunpack.c.h.b16 %v269
  %v1525 = vunpack.c.l.b16 %v270
  %v1526 = vunpack.c.h.b16 %v270
  %v1527 = vunpack.c.l.b16 %v271
  %v1528 = vunpack.c.h.b16 %v271
  %v1529 = vunpack.c.l.b16 %v272
  %v1530 = vunpack.c.h.b16 %v272
  %v1531 = vunpack.c.l.b16 %v273
  %v1532 = vunpack.c.h.b16 %v273
  %v1533 = vunpack.c.l.b16 %v274
  %v1534 = vunpack.c.h.b16 %v274
  %v1535 = vunpack.c.l.b16 %v275
  %v1536 = vunpack.c.h.b16 %v275
  %v1537 = vunpack.c.l.b16 %v276
  %v1538 = vunpack.c.h.b16 %v276
  %v1539 = vunpack.c.l.b16 %v277
  %v1540 = vunpack.c.h.b16 %v277
  %v1541 = vunpack.c.l.b16 %v278
  %v1542 = vunpack.c.h.b16 %v278
  %v1543 = vunpack.c.l.b16 %v279
  %v1544 = vunpack.c.h.b16 %v279
  %v1545 = vunpack.c.l.b16 %v280
  %v1546 = vunpack.c.h.b16 %v280
  %v1547 = vunpack.c.l.b16 %v281
  %v1548 = vunpack.c.h.b16 %v281
  %v1549 = vunpack.c.l.b16 %v282
  %v1550 = vunpack.c.h.b16 %v282
  %v1551 = vunpack.c.l.b16 %v283
  %v1552 = vunpack.c.h.b16 %v283
  %v1553 = vunpack.c.l.b16 %v284
  %v1554 = vunpack.c.h.b16 %v284
  %v1555 = vunpack.c.l.b16 %v285
  %v1556 = vunpack.c.h.b16 %v285
  %v1557 = vunpack.c.l.b16 %v286
  %v1558 = vunpack.c.h.b16 %v286
  %v1559 = vunpack.c.l.b16 %v287
  %v1560 = vunpack.c.h.b16 %v287
  %v1561 = vunpack.c.l.b16 %v288
  %v1562 = vunpack.c.h.b16 %v288
  %v1563 = vunpack.c.l.b16 %v289
  %v1564 = vunpack.c.h.b16 %v289
  %v1565 = vunpack.c.l.b16 %v290
  %v1566 = vunpack.c.h.b16 %v290
  %v1567 = vunpack.c.l.b16 %v291
  %v1568 = vunpack.c.h.b16 %v291
  %v1569 = vunpack.c.l.b16 %v292
  %v1570 = vunpack.c.h.b16 %v292
  %v1571 = vunpack.c.l.b16 %v293
  %v1572 = vunpack.c.h.b16 %v293
  %v1573 = vunpack.c.l.b16 %v294
  %v1574 = vunpack.c.h.b16 %v294
  %v1575 = vunpack.c.l.b16 %v295
  %v1576 = vunpack.c.h.b16 %v295
  %v1577 = vunpack.c.l.b16 %v296
  %v1578 = vunpack.c.h.b16 %v296
  %v1579 = vunpack.c.l.b16 %v297
  %v1580 = vunpack.c.h.b16 %v297
  %v1581 = vunpack.c.l.b16 %v298
  %v1582 = vunpack.c.h.b16 %v298
  %v1583 = vunpack.c.l.b16 %v299
  %v1584 = vunpack.c.h.b16 %v299
  %v1585 = vunpack.c.l.b16 %v300
  %v1586 = vunpack.c.h.b16 %v300
  %v1587 = vunpack.c.l.b16 %v301
  %v1588 = vunpack.c.h.b16 %v301
  %v1589 = vunpack.c.l.b16 %v302
  %v1590 = vunpack.c.h.b16 %v302
  %v1591 = vunpack.c.l.b16 %v303
  %v1592 = vunpack.c.h.b16 %v303
  %v1593 = vunpack.c.l.b16 %v304
  %v1594 = vunpack.c.h.b16 %v304
  %v1595 = vunpack.c.l.b16 %v305
  %v1596 = vunpack.c.h.b16 %v305
  %v1597 = vunpack.c.l.b16 %v306
  %v1598 = vunpack.c.h.b16 %v306
  %v1599 = vunpack.c.l.b16 %v307
  %v1600 = vunpack.c.h.b16 %v307
  %v1601 = vunpack.c.l.b16 %v308
  %v1602 = vunpack.c.h.b16 %v308
  %v1603 = vunpack.c.l.b16 %v309
  %v1604 = vunpack.c.h.b16 %v309
  %v1605 = vunpack.c.l.b16 %v310
  %v1606 = vunpack.c.h.b16 %v310
  %v1607 = vunpack.c.l.b16 %v311
  %v1608 = vunpack.c.h.b16 %v311
  %v1609 = vunpack.c.l.b16 %v312
  %v1610 = vunpack.c.h.b16 %v312
  %v1611 = vunpack.c.l.b16 %v313
  %v1612 = vunpack.c.h.b16 %v313
  %v1613 = vunpack.c.l.b16 %v314
  %v1614 = vunpack.c.h.b16 %v314
  %v1615 = vunpack.c.l.b16 %v315
  %v1616 = vunpack.c.h.b16 %v315
  %v1617 = vunpack.c.l.b16 %v316
  %v1618 = vunpack.c.h.b16 %v316
  %v1619 = vunpack.c.l.b16 %v317
  %v1620 = vunpack.c.h.b16 %v317
  %v1621 = vunpack.c.l.b16 %v318
  %v1622 = vunpack.c.h.b16 %v318
  %v1623 = vunpack.c.l.b16 %v319
  %v1624 = vunpack.c.h.b16 %v319
  %v1625 = vunpack.c.l.b16 %v320
  %v1626 = vunpack.c.h.b16 %v320
  %v1627 = vunpack.c.l.b16 %v321
  %v1628 = vunpack.c.h.b16 %v321
  %v1629 = vunpack.c.l.b16 %v322
  %v1630 = vunpack.c.h.b16 %v322
  %v1631 = vunpack.c.l.b16 %v323
  %v1632 = vunpack.c.h.b16 %v323
  %v1633 = vunpack.c.l.b16 %v324
  %v1634 = vunpack.c.h.b16 %v324
  %v1635 = vunpack.c.l.b16 %v325
  %v1636 = vunpack.c.h.b16 %v325
  %v1637 = vunpack.c.l.b16 %v326
  %v1638 = vunpack.c.h.b16 %v326
  %v1639 = vpack.c.b16 %v1513, %v1511
  %v1640 = vpack.c.b16 %v1514, %v1512
  %v1641 = vpack.c.b16 %v1517, %v1515
  %v1642 = vpack.c.b16 %v1518, %v1516
  %v1643 = vpack.c.b16 %v1521, %v1519
  %v1644 = vpack.c.b16 %v1522, %v1520
  %v1645 = vpack.c.b16 %v1525, %v1523
  %v1646 = vpack.c.b16 %v1526, %v1524
  %v1647 = vpack.c.b16 %v1529, %v1527
  %v1648 = vpack.c.b16 %v1530, %v1528
  %v1649 = vpack.c.b16 %v1533, %v1531
  %v1650 = vpack.c.b16 %v1534, %v1532
  %v1651 = vpack.c.b16 %v1537, %v1535
  %v1652 = vpack.c.b16 %v1538, %v1536
  %v1653 = vpack.c.b16 %v1541, %v1539
  %v1654 = vpack.c.b16 %v1542, %v1540
  %v1655 = vpack.c.b16 %v1545, %v1543
  %v1656 = vpack.c.b16 %v1546, %v1544
  %v1657 = vpack.c.b16 %v1549, %v1547
  %v1658 = vpack.c.b16 %v1550, %v1548
  %v1659 = vpack.c.b16 %v1553, %v1551
  %v1660 = vpack.c.b16 %v1554, %v1552
  %v1661 = vpack.c.b16 %v1557, %v1555
  %v1662 = vpack.c.b16 %v1558, %v1556
  %v1663 = vpack.c.b16 %v1561, %v1559
  %v1664 = vpack.c.b16 %v1562, %v1560
  %v1665 = vpack.c.b16 %v1565, %v1563
  %v1666 = vpack.c.b16 %v1566, %v1564
  %v1667 = vpack.c.b16 %v1569, %v1567
  %v1668 = vpack.c.b16 %v1570, %v1568
  %v1669 = vpack.c.b16 %v1573, %v1571
  %v1670 = vpack.c.b16 %v1574, %v1572
  %v1671 = vpack.c.b16 %v1577, %v1575
  %v1672 = vpack.c.b16 %v1578, %v1576
  %v1673 = vpack.c.b16 %v1581, %v1579
  %v1674 = vpack.c.b16 %v1582, %v1580
  %v1675 = vpack.c.b16 %v1585, %v1583
  %v1676 = vpack.c.b16 %v1586, %v1584
  %v1677 = vpack.c.b16 %v1589, %v1587
  %v1678 = vpack.c.b16 %v1590, %v1588
  %v1679 = vpack.c.b16 %v1593, %v1591
  %v1680 = vpack.c.b16 %v1594, %v1592
  %v1681 = vpack.c.b16 %v1597, %v1595
  %v1682 = vpack.c.b16 %v1598, %v1596
  %v1683 = vpack.c.b16 %v1601, %v1599
  %v1684 = vpack.c.b16 %v1602, %v1600
  %v1685 = vpack.c.b16 %v1605, %v1603
  %v1686 = vpack.c.b16 %v1606, %v1604
  %v1687 = vpack.c.b16 %v1609, %v1607
  %v1688 = vpack.c.b16 %v1610, %v1608
  %v1689 = vpack.c.b16 %v1613, %v1611
  %v1690 = vpack.c.b16 %v1614, %v1612
  %v1691 = vpack.c.b16 %v1617, %v1615
  %v1692 = vpack.c.b16 %v1618, %v1616
  %v1693 = vpack.c.b16 %v1621, %v1619
  %v1694 = vpack.c.b16 %v1622, %v1620
  %v1695 = vpack.c.b16 %v1625, %v1623
  %v1696 = vpack.c.b16 %v1626, %v1624
  %v1697 = vpack.c.b16 %v1629, %v1627
  %v1698 = vpack.c.b16 %v1630, %v1628
  %v1699 = vpack.c.b16 %v1633, %v1631
  %v1700 = vpack.c.b16 %v1634, %v1632
  %v1701 = vpack.c.b16 %v1637, %v1635
  %v1702 = vpack.c.b16 %v1638, %v1636
  %1767 = vmatprep.subr.bf16.mxu0 %v1640
  %1768 = vmatpush1.bf16.msra.mxu0 %v1639
  %1769 = vmatprep.subr.bf16.mxu0 %v1642
  %1770 = vmatpush1.bf16.msra.mxu0 %v1641
  %1771 = vmatprep.subr.bf16.mxu0 %v1644
  %1772 = vmatpush1.bf16.msra.mxu0 %v1643
  %1773 = vmatprep.subr.bf16.mxu0 %v1646
  %1774 = vmatpush1.bf16.msra.mxu0 %v1645
  %1775 = vmatprep.subr.bf16.mxu0 %v1648
  %1776 = vmatpush1.bf16.msra.mxu0 %v1647
  %1777 = vmatprep.subr.bf16.mxu0 %v1650
  %1778 = vmatpush1.bf16.msra.mxu0 %v1649
  %1779 = vmatprep.subr.bf16.mxu0 %v1652
  %1780 = vmatpush1.bf16.msra.mxu0 %v1651
  %1781 = vmatprep.subr.bf16.mxu0 %v1654
  %1782 = vmatpush1.bf16.msra.mxu0 %v1653
  %1783 = vmatprep.subr.bf16.mxu0 %v1656
  %1784 = vmatpush1.bf16.msra.mxu0 %v1655
  %1785 = vmatprep.subr.bf16.mxu0 %v1658
  %1786 = vmatpush1.bf16.msra.mxu0 %v1657
  %1787 = vmatprep.subr.bf16.mxu0 %v1660
  %1788 = vmatpush1.bf16.msra.mxu0 %v1659
  %1789 = vmatprep.subr.bf16.mxu0 %v1662
  %1790 = vmatpush1.bf16.msra.mxu0 %v1661
  %1791 = vmatprep.subr.bf16.mxu0 %v1664
  %1792 = vmatpush1.bf16.msra.mxu0 %v1663
  %1793 = vmatprep.subr.bf16.mxu0 %v1666
  %1794 = vmatpush1.bf16.msra.mxu0 %v1665
  %1795 = vmatprep.subr.bf16.mxu0 %v1668
  %1796 = vmatpush1.bf16.msra.mxu0 %v1667
  %1797 = vmatprep.subr.bf16.mxu0 %v1670
  %1798 = vmatpush1.bf16.msra.mxu0 %v1669
  %1799 = vmatprep.mubr.bf16.mxu0 %v1000
  %1800 = vmatmul.mubr.bf16.gmra.mrb[0].mxu0 %v999
  %v1801 = vpop.f32.mrb[0].mxu0
  %v1802 = vadd.f32 0.0, %v1801
  %v1803 = vpop.f32.mrb[0].mxu0
  %v1804 = vadd.f32 0.0, %v1803
  %v1805 = vpop.f32.mrb[0].mxu0
  %v1806 = vadd.f32 0.0, %v1805
  %v1807 = vpop.f32.mrb[0].mxu0
  %v1808 = vadd.f32 0.0, %v1807
  %1809 = vmatprep.mubr.bf16.mxu0 %v1004
  %1810 = vmatmul.mubr.bf16.gmra.mrb[0].mxu0 %v1003
  %v1811 = vpop.f32.mrb[0].mxu0
  %v1812 = vadd.f32 0.0, %v1811
  %v1813 = vpop.f32.mrb[0].mxu0
  %v1814 = vadd.f32 0.0, %v1813
  %v1815 = vpop.f32.mrb[0].mxu0
  %v1816 = vadd.f32 0.0, %v1815
  %v1817 = vpop.f32.mrb[0].mxu0
  %v1818 = vadd.f32 0.0, %v1817
  %1819 = vmatprep.mubr.bf16.mxu0 %v1008
  %1820 = vmatmul.mubr.bf16.gmra.mrb[0].mxu0 %v1007
  %v1821 = vpop.f32.mrb[0].mxu0
  %v1822 = vadd.f32 0.0, %v1821
  %v1823 = vpop.f32.mrb[0].mxu0
  %v1824 = vadd.f32 0.0, %v1823
  %v1825 = vpop.f32.mrb[0].mxu0
  %v1826 = vadd.f32 0.0, %v1825
  %v1827 = vpop.f32.mrb[0].mxu0
  %v1828 = vadd.f32 0.0, %v1827
  %1829 = vmatprep.mubr.bf16.mxu0 %v1012
  %1830 = vmatmul.mubr.bf16.gmra.mrb[0].mxu0 %v1011
  %v1831 = vpop.f32.mrb[0].mxu0
  %v1832 = vadd.f32 0.0, %v1831
  %v1833 = vpop.f32.mrb[0].mxu0
  %v1834 = vadd.f32 0.0, %v1833
  %v1835 = vpop.f32.mrb[0].mxu0
  %v1836 = vadd.f32 0.0, %v1835
  %v1837 = vpop.f32.mrb[0].mxu0
  %v1838 = vadd.f32 0.0, %v1837
  %1839 = vmatprep.mubr.bf16.mxu0 %v1016
  %1840 = vmatmul.mubr.bf16.gmra.mrb[0].mxu0 %v1015
  %v1841 = vpop.f32.mrb[0].mxu0
  %v1842 = vadd.f32 0.0, %v1841
  %v1843 = vpop.f32.mrb[0].mxu0
  %v1844 = vadd.f32 0.0, %v1843
  %v1845 = vpop.f32.mrb[0].mxu0
  %v1846 = vadd.f32 0.0, %v1845
  %v1847 = vpop.f32.mrb[0].mxu0
  %v1848 = vadd.f32 0.0, %v1847
  %1849 = vmatprep.mubr.bf16.mxu0 %v1020
  %1850 = vmatmul.mubr.bf16.gmra.mrb[0].mxu0 %v1019
  %v1851 = vpop.f32.mrb[0].mxu0
  %v1852 = vadd.f32 0.0, %v1851
  %v1853 = vpop.f32.mrb[0].mxu0
  %v1854 = vadd.f32 0.0, %v1853
  %v1855 = vpop.f32.mrb[0].mxu0
  %v1856 = vadd.f32 0.0, %v1855
  %v1857 = vpop.f32.mrb[0].mxu0
  %v1858 = vadd.f32 0.0, %v1857
  %1859 = vmatprep.mubr.bf16.mxu0 %v1024
  %1860 = vmatmul.mubr.bf16.gmra.mrb[0].mxu0 %v1023
  %v1861 = vpop.f32.mrb[0].mxu0
  %v1862 = vadd.f32 0.0, %v1861
  %v1863 = vpop.f32.mrb[0].mxu0
  %v1864 = vadd.f32 0.0, %v1863
  %v1865 = vpop.f32.mrb[0].mxu0
  %v1866 = vadd.f32 0.0, %v1865
  %v1867 = vpop.f32.mrb[0].mxu0
  %v1868 = vadd.f32 0.0, %v1867
  %1869 = vmatprep.mubr.bf16.mxu0 %v1028
  %1870 = vmatmul.mubr.bf16.gmra.mrb[0].mxu0 %v1027
  %v1871 = vpop.f32.mrb[0].mxu0
  %v1872 = vadd.f32 0.0, %v1871
  %v1873 = vpop.f32.mrb[0].mxu0
  %v1874 = vadd.f32 0.0, %v1873
  %v1875 = vpop.f32.mrb[0].mxu0
  %v1876 = vadd.f32 0.0, %v1875
  %v1877 = vpop.f32.mrb[0].mxu0
  %v1878 = vadd.f32 0.0, %v1877
  %1879 = vmatprep.mubr.bf16.mxu0 %v1032
  %1880 = vmatmul.mubr.bf16.gmra.mrb[0].mxu0 %v1031
  %v1881 = vpop.f32.mrb[0].mxu0
  %v1882 = vadd.f32 0.0, %v1881
  %v1883 = vpop.f32.mrb[0].mxu0
  %v1884 = vadd.f32 0.0, %v1883
  %v1885 = vpop.f32.mrb[0].mxu0
  %v1886 = vadd.f32 0.0, %v1885
  %v1887 = vpop.f32.mrb[0].mxu0
  %v1888 = vadd.f32 0.0, %v1887
  %1889 = vmatprep.mubr.bf16.mxu0 %v1036
  %1890 = vmatmul.mubr.bf16.gmra.mrb[0].mxu0 %v1035
  %v1891 = vpop.f32.mrb[0].mxu0
  %v1892 = vadd.f32 0.0, %v1891
  %v1893 = vpop.f32.mrb[0].mxu0
  %v1894 = vadd.f32 0.0, %v1893
  %v1895 = vpop.f32.mrb[0].mxu0
  %v1896 = vadd.f32 0.0, %v1895
  %v1897 = vpop.f32.mrb[0].mxu0
  %v1898 = vadd.f32 0.0, %v1897
  %1899 = vmatprep.mubr.bf16.mxu0 %v1040
  %1900 = vmatmul.mubr.bf16.gmra.mrb[0].mxu0 %v1039
  %v1901 = vpop.f32.mrb[0].mxu0
  %v1902 = vadd.f32 0.0, %v1901
  %v1903 = vpop.f32.mrb[0].mxu0
  %v1904 = vadd.f32 0.0, %v1903
  %v1905 = vpop.f32.mrb[0].mxu0
  %v1906 = vadd.f32 0.0, %v1905
  %v1907 = vpop.f32.mrb[0].mxu0
  %v1908 = vadd.f32 0.0, %v1907
  %1909 = vmatprep.mubr.bf16.mxu0 %v1044
  %1910 = vmatmul.mubr.bf16.gmra.mrb[0].mxu0 %v1043
  %v1911 = vpop.f32.mrb[0].mxu0
  %v1912 = vadd.f32 0.0, %v1911
  %v1913 = vpop.f32.mrb[0].mxu0
  %v1914 = vadd.f32 0.0, %v1913
  %v1915 = vpop.f32.mrb[0].mxu0
  %v1916 = vadd.f32 0.0, %v1915
  %v1917 = vpop.f32.mrb[0].mxu0
  %v1918 = vadd.f32 0.0, %v1917
  %1919 = vmatprep.mubr.bf16.mxu0 %v1048
  %1920 = vmatmul.mubr.bf16.gmra.mrb[0].mxu0 %v1047
  %v1921 = vpop.f32.mrb[0].mxu0
  %v1922 = vadd.f32 0.0, %v1921
  %v1923 = vpop.f32.mrb[0].mxu0
  %v1924 = vadd.f32 0.0, %v1923
  %v1925 = vpop.f32.mrb[0].mxu0
  %v1926 = vadd.f32 0.0, %v1925
  %v1927 = vpop.f32.mrb[0].mxu0
  %v1928 = vadd.f32 0.0, %v1927
  %1929 = vmatprep.mubr.bf16.mxu0 %v1052
  %1930 = vmatmul.mubr.bf16.gmra.mrb[0].mxu0 %v1051
  %v1931 = vpop.f32.mrb[0].mxu0
  %v1932 = vadd.f32 0.0, %v1931
  %v1933 = vpop.f32.mrb[0].mxu0
  %v1934 = vadd.f32 0.0, %v1933
  %v1935 = vpop.f32.mrb[0].mxu0
  %v1936 = vadd.f32 0.0, %v1935
  %v1937 = vpop.f32.mrb[0].mxu0
  %v1938 = vadd.f32 0.0, %v1937
  %1939 = vmatprep.mubr.bf16.mxu0 %v1056
  %1940 = vmatmul.mubr.bf16.gmra.mrb[0].mxu0 %v1055
  %v1941 = vpop.f32.mrb[0].mxu0
  %v1942 = vadd.f32 0.0, %v1941
  %v1943 = vpop.f32.mrb[0].mxu0
  %v1944 = vadd.f32 0.0, %v1943
  %v1945 = vpop.f32.mrb[0].mxu0
  %v1946 = vadd.f32 0.0, %v1945
  %v1947 = vpop.f32.mrb[0].mxu0
  %v1948 = vadd.f32 0.0, %v1947
  %1949 = vmatprep.mubr.bf16.mxu0 %v1060
  %1950 = vmatmul.mubr.bf16.gmra.mrb[0].mxu0 %v1059
  %v1951 = vpop.f32.mrb[0].mxu0
  %v1952 = vadd.f32 0.0, %v1951
  %v1953 = vpop.f32.mrb[0].mxu0
  %v1954 = vadd.f32 0.0, %v1953
  %v1955 = vpop.f32.mrb[0].mxu0
  %v1956 = vadd.f32 0.0, %v1955
  %v1957 = vpop.f32.mrb[0].mxu0
  %v1958 = vadd.f32 0.0, %v1957
  %1959 = vmatprep.mubr.bf16.mxu0 %v1064
  %1960 = vmatmul.mubr.bf16.gmra.mrb[0].mxu0 %v1063
  %v1961 = vpop.f32.mrb[0].mxu0
  %v1962 = vadd.f32 0.0, %v1961
  %v1963 = vpop.f32.mrb[0].mxu0
  %v1964 = vadd.f32 0.0, %v1963
  %v1965 = vpop.f32.mrb[0].mxu0
  %v1966 = vadd.f32 0.0, %v1965
  %v1967 = vpop.f32.mrb[0].mxu0
  %v1968 = vadd.f32 0.0, %v1967
  %1969 = vmatprep.mubr.bf16.mxu0 %v1068
  %1970 = vmatmul.mubr.bf16.gmra.mrb[0].mxu0 %v1067
  %v1971 = vpop.f32.mrb[0].mxu0
  %v1972 = vadd.f32 0.0, %v1971
  %v1973 = vpop.f32.mrb[0].mxu0
  %v1974 = vadd.f32 0.0, %v1973
  %v1975 = vpop.f32.mrb[0].mxu0
  %v1976 = vadd.f32 0.0, %v1975
  %v1977 = vpop.f32.mrb[0].mxu0
  %v1978 = vadd.f32 0.0, %v1977
  %1979 = vmatprep.mubr.bf16.mxu0 %v1072
  %1980 = vmatmul.mubr.bf16.gmra.mrb[0].mxu0 %v1071
  %v1981 = vpop.f32.mrb[0].mxu0
  %v1982 = vadd.f32 0.0, %v1981
  %v1983 = vpop.f32.mrb[0].mxu0
  %v1984 = vadd.f32 0.0, %v1983
  %v1985 = vpop.f32.mrb[0].mxu0
  %v1986 = vadd.f32 0.0, %v1985
  %v1987 = vpop.f32.mrb[0].mxu0
  %v1988 = vadd.f32 0.0, %v1987
  %1989 = vmatprep.mubr.bf16.mxu0 %v1076
  %1990 = vmatmul.mubr.bf16.gmra.mrb[0].mxu0 %v1075
  %v1991 = vpop.f32.mrb[0].mxu0
  %v1992 = vadd.f32 0.0, %v1991
  %v1993 = vpop.f32.mrb[0].mxu0
  %v1994 = vadd.f32 0.0, %v1993
  %v1995 = vpop.f32.mrb[0].mxu0
  %v1996 = vadd.f32 0.0, %v1995
  %v1997 = vpop.f32.mrb[0].mxu0
  %v1998 = vadd.f32 0.0, %v1997
  %1999 = vmatprep.mubr.bf16.mxu0 %v1080
  %2000 = vmatmul.mubr.bf16.gmra.mrb[0].mxu0 %v1079
  %v2001 = vpop.f32.mrb[0].mxu0
  %v2002 = vadd.f32 0.0, %v2001
  %v2003 = vpop.f32.mrb[0].mxu0
  %v2004 = vadd.f32 0.0, %v2003
  %v2005 = vpop.f32.mrb[0].mxu0
  %v2006 = vadd.f32 0.0, %v2005
  %v2007 = vpop.f32.mrb[0].mxu0
  %v2008 = vadd.f32 0.0, %v2007
  %2009 = vmatprep.mubr.bf16.mxu0 %v1084
  %2010 = vmatmul.mubr.bf16.gmra.mrb[0].mxu0 %v1083
  %v2011 = vpop.f32.mrb[0].mxu0
  %v2012 = vadd.f32 0.0, %v2011
  %v2013 = vpop.f32.mrb[0].mxu0
  %v2014 = vadd.f32 0.0, %v2013
  %v2015 = vpop.f32.mrb[0].mxu0
  %v2016 = vadd.f32 0.0, %v2015
  %v2017 = vpop.f32.mrb[0].mxu0
  %v2018 = vadd.f32 0.0, %v2017
  %2019 = vmatprep.mubr.bf16.mxu0 %v1088
  %2020 = vmatmul.mubr.bf16.gmra.mrb[0].mxu0 %v1087
  %v2021 = vpop.f32.mrb[0].mxu0
  %v2022 = vadd.f32 0.0, %v2021
  %v2023 = vpop.f32.mrb[0].mxu0
  %v2024 = vadd.f32 0.0, %v2023
  %v2025 = vpop.f32.mrb[0].mxu0
  %v2026 = vadd.f32 0.0, %v2025
  %v2027 = vpop.f32.mrb[0].mxu0
  %v2028 = vadd.f32 0.0, %v2027
  %2029 = vmatprep.mubr.bf16.mxu0 %v1092
  %2030 = vmatmul.mubr.bf16.gmra.mrb[0].mxu0 %v1091
  %v2031 = vpop.f32.mrb[0].mxu0
  %v2032 = vadd.f32 0.0, %v2031
  %v2033 = vpop.f32.mrb[0].mxu0
  %v2034 = vadd.f32 0.0, %v2033
  %v2035 = vpop.f32.mrb[0].mxu0
  %v2036 = vadd.f32 0.0, %v2035
  %v2037 = vpop.f32.mrb[0].mxu0
  %v2038 = vadd.f32 0.0, %v2037
  %2039 = vmatprep.mubr.bf16.mxu0 %v1096
  %2040 = vmatmul.mubr.bf16.gmra.mrb[0].mxu0 %v1095
  %v2041 = vpop.f32.mrb[0].mxu0
  %v2042 = vadd.f32 0.0, %v2041
  %v2043 = vpop.f32.mrb[0].mxu0
  %v2044 = vadd.f32 0.0, %v2043
  %v2045 = vpop.f32.mrb[0].mxu0
  %v2046 = vadd.f32 0.0, %v2045
  %v2047 = vpop.f32.mrb[0].mxu0
  %v2048 = vadd.f32 0.0, %v2047
  %2049 = vmatprep.mubr.bf16.mxu0 %v1100
  %2050 = vmatmul.mubr.bf16.gmra.mrb[0].mxu0 %v1099
  %v2051 = vpop.f32.mrb[0].mxu0
  %v2052 = vadd.f32 0.0, %v2051
  %v2053 = vpop.f32.mrb[0].mxu0
  %v2054 = vadd.f32 0.0, %v2053
  %v2055 = vpop.f32.mrb[0].mxu0
  %v2056 = vadd.f32 0.0, %v2055
  %v2057 = vpop.f32.mrb[0].mxu0
  %v2058 = vadd.f32 0.0, %v2057
  %2059 = vmatprep.mubr.bf16.mxu0 %v1104
  %2060 = vmatmul.mubr.bf16.gmra.mrb[0].mxu0 %v1103
  %v2061 = vpop.f32.mrb[0].mxu0
  %v2062 = vadd.f32 0.0, %v2061
  %v2063 = vpop.f32.mrb[0].mxu0
  %v2064 = vadd.f32 0.0, %v2063
  %v2065 = vpop.f32.mrb[0].mxu0
  %v2066 = vadd.f32 0.0, %v2065
  %v2067 = vpop.f32.mrb[0].mxu0
  %v2068 = vadd.f32 0.0, %v2067
  %2069 = vmatprep.mubr.bf16.mxu0 %v1108
  %2070 = vmatmul.mubr.bf16.gmra.mrb[0].mxu0 %v1107
  %v2071 = vpop.f32.mrb[0].mxu0
  %v2072 = vadd.f32 0.0, %v2071
  %v2073 = vpop.f32.mrb[0].mxu0
  %v2074 = vadd.f32 0.0, %v2073
  %v2075 = vpop.f32.mrb[0].mxu0
  %v2076 = vadd.f32 0.0, %v2075
  %v2077 = vpop.f32.mrb[0].mxu0
  %v2078 = vadd.f32 0.0, %v2077
  %2079 = vmatprep.mubr.bf16.mxu0 %v1112
  %2080 = vmatmul.mubr.bf16.gmra.mrb[0].mxu0 %v1111
  %v2081 = vpop.f32.mrb[0].mxu0
  %v2082 = vadd.f32 0.0, %v2081
  %v2083 = vpop.f32.mrb[0].mxu0
  %v2084 = vadd.f32 0.0, %v2083
  %v2085 = vpop.f32.mrb[0].mxu0
  %v2086 = vadd.f32 0.0, %v2085
  %v2087 = vpop.f32.mrb[0].mxu0
  %v2088 = vadd.f32 0.0, %v2087
  %2089 = vmatprep.mubr.bf16.mxu0 %v1116
  %2090 = vmatmul.mubr.bf16.gmra.mrb[0].mxu0 %v1115
  %v2091 = vpop.f32.mrb[0].mxu0
  %v2092 = vadd.f32 0.0, %v2091
  %v2093 = vpop.f32.mrb[0].mxu0
  %v2094 = vadd.f32 0.0, %v2093
  %v2095 = vpop.f32.mrb[0].mxu0
  %v2096 = vadd.f32 0.0, %v2095
  %v2097 = vpop.f32.mrb[0].mxu0
  %v2098 = vadd.f32 0.0, %v2097
  %2099 = vmatprep.mubr.bf16.mxu0 %v1120
  %2100 = vmatmul.mubr.bf16.gmra.mrb[0].mxu0 %v1119
  %v2101 = vpop.f32.mrb[0].mxu0
  %v2102 = vadd.f32 0.0, %v2101
  %v2103 = vpop.f32.mrb[0].mxu0
  %v2104 = vadd.f32 0.0, %v2103
  %v2105 = vpop.f32.mrb[0].mxu0
  %v2106 = vadd.f32 0.0, %v2105
  %v2107 = vpop.f32.mrb[0].mxu0
  %v2108 = vadd.f32 0.0, %v2107
  %2109 = vmatprep.mubr.bf16.mxu0 %v1124
  %2110 = vmatmul.mubr.bf16.gmra.mrb[0].mxu0 %v1123
  %v2111 = vpop.f32.mrb[0].mxu0
  %v2112 = vadd.f32 0.0, %v2111
  %v2113 = vpop.f32.mrb[0].mxu0
  %v2114 = vadd.f32 0.0, %v2113
  %v2115 = vpop.f32.mrb[0].mxu0
  %v2116 = vadd.f32 0.0, %v2115
  %v2117 = vpop.f32.mrb[0].mxu0
  %v2118 = vadd.f32 0.0, %v2117
  %2119 = vmatprep.mubr.bf16.mxu0 %v1128
  %2120 = vmatmul.mubr.bf16.gmra.mrb[0].mxu0 %v1127
  %v2121 = vpop.f32.mrb[0].mxu0
  %v2122 = vadd.f32 0.0, %v2121
  %v2123 = vpop.f32.mrb[0].mxu0
  %v2124 = vadd.f32 0.0, %v2123
  %v2125 = vpop.f32.mrb[0].mxu0
  %v2126 = vadd.f32 0.0, %v2125
  %v2127 = vpop.f32.mrb[0].mxu0
  %v2128 = vadd.f32 0.0, %v2127
  %2129 = vmatprep.mubr.bf16.mxu0 %v1132
  %2130 = vmatmul.mubr.bf16.gmra.mrb[0].mxu0 %v1131
  %v2131 = vpop.f32.mrb[0].mxu0
  %v2132 = vadd.f32 0.0, %v2131
  %v2133 = vpop.f32.mrb[0].mxu0
  %v2134 = vadd.f32 0.0, %v2133
  %v2135 = vpop.f32.mrb[0].mxu0
  %v2136 = vadd.f32 0.0, %v2135
  %v2137 = vpop.f32.mrb[0].mxu0
  %v2138 = vadd.f32 0.0, %v2137
  %2139 = vmatprep.mubr.bf16.mxu0 %v1136
  %2140 = vmatmul.mubr.bf16.gmra.mrb[0].mxu0 %v1135
  %v2141 = vpop.f32.mrb[0].mxu0
  %v2142 = vadd.f32 0.0, %v2141
  %v2143 = vpop.f32.mrb[0].mxu0
  %v2144 = vadd.f32 0.0, %v2143
  %v2145 = vpop.f32.mrb[0].mxu0
  %v2146 = vadd.f32 0.0, %v2145
  %v2147 = vpop.f32.mrb[0].mxu0
  %v2148 = vadd.f32 0.0, %v2147
  %2149 = vmatprep.mubr.bf16.mxu0 %v1140
  %2150 = vmatmul.mubr.bf16.gmra.mrb[0].mxu0 %v1139
  %v2151 = vpop.f32.mrb[0].mxu0
  %v2152 = vadd.f32 0.0, %v2151
  %v2153 = vpop.f32.mrb[0].mxu0
  %v2154 = vadd.f32 0.0, %v2153
  %v2155 = vpop.f32.mrb[0].mxu0
  %v2156 = vadd.f32 0.0, %v2155
  %v2157 = vpop.f32.mrb[0].mxu0
  %v2158 = vadd.f32 0.0, %v2157
  %2159 = vmatprep.mubr.bf16.mxu0 %v1144
  %2160 = vmatmul.mubr.bf16.gmra.mrb[0].mxu0 %v1143
  %v2161 = vpop.f32.mrb[0].mxu0
  %v2162 = vadd.f32 0.0, %v2161
  %v2163 = vpop.f32.mrb[0].mxu0
  %v2164 = vadd.f32 0.0, %v2163
  %v2165 = vpop.f32.mrb[0].mxu0
  %v2166 = vadd.f32 0.0, %v2165
  %v2167 = vpop.f32.mrb[0].mxu0
  %v2168 = vadd.f32 0.0, %v2167
  %2169 = vmatprep.mubr.bf16.mxu0 %v1148
  %2170 = vmatmul.mubr.bf16.gmra.mrb[0].mxu0 %v1147
  %v2171 = vpop.f32.mrb[0].mxu0
  %v2172 = vadd.f32 0.0, %v2171
  %v2173 = vpop.f32.mrb[0].mxu0
  %v2174 = vadd.f32 0.0, %v2173
  %v2175 = vpop.f32.mrb[0].mxu0
  %v2176 = vadd.f32 0.0, %v2175
  %v2177 = vpop.f32.mrb[0].mxu0
  %v2178 = vadd.f32 0.0, %v2177
  %2179 = vmatprep.mubr.bf16.mxu0 %v1152
  %2180 = vmatmul.mubr.bf16.gmra.mrb[0].mxu0 %v1151
  %v2181 = vpop.f32.mrb[0].mxu0
  %v2182 = vadd.f32 0.0, %v2181
  %v2183 = vpop.f32.mrb[0].mxu0
  %v2184 = vadd.f32 0.0, %v2183
  %v2185 = vpop.f32.mrb[0].mxu0
  %v2186 = vadd.f32 0.0, %v2185
  %v2187 = vpop.f32.mrb[0].mxu0
  %v2188 = vadd.f32 0.0, %v2187
  %2189 = vmatprep.mubr.bf16.mxu0 %v1156
  %2190 = vmatmul.mubr.bf16.gmra.mrb[0].mxu0 %v1155
  %v2191 = vpop.f32.mrb[0].mxu0
  %v2192 = vadd.f32 0.0, %v2191
  %v2193 = vpop.f32.mrb[0].mxu0
  %v2194 = vadd.f32 0.0, %v2193
  %v2195 = vpop.f32.mrb[0].mxu0
  %v2196 = vadd.f32 0.0, %v2195
  %v2197 = vpop.f32.mrb[0].mxu0
  %v2198 = vadd.f32 0.0, %v2197
  %2199 = vmatprep.mubr.bf16.mxu0 %v1160
  %2200 = vmatmul.mubr.bf16.gmra.mrb[0].mxu0 %v1159
  %v2201 = vpop.f32.mrb[0].mxu0
  %v2202 = vadd.f32 0.0, %v2201
  %v2203 = vpop.f32.mrb[0].mxu0
  %v2204 = vadd.f32 0.0, %v2203
  %v2205 = vpop.f32.mrb[0].mxu0
  %v2206 = vadd.f32 0.0, %v2205
  %v2207 = vpop.f32.mrb[0].mxu0
  %v2208 = vadd.f32 0.0, %v2207
  %2209 = vmatprep.mubr.bf16.mxu0 %v1164
  %2210 = vmatmul.mubr.bf16.gmra.mrb[0].mxu0 %v1163
  %v2211 = vpop.f32.mrb[0].mxu0
  %v2212 = vadd.f32 0.0, %v2211
  %v2213 = vpop.f32.mrb[0].mxu0
  %v2214 = vadd.f32 0.0, %v2213
  %v2215 = vpop.f32.mrb[0].mxu0
  %v2216 = vadd.f32 0.0, %v2215
  %v2217 = vpop.f32.mrb[0].mxu0
  %v2218 = vadd.f32 0.0, %v2217
  %2219 = vmatprep.mubr.bf16.mxu0 %v1168
  %2220 = vmatmul.mubr.bf16.gmra.mrb[0].mxu0 %v1167
  %v2221 = vpop.f32.mrb[0].mxu0
  %v2222 = vadd.f32 0.0, %v2221
  %v2223 = vpop.f32.mrb[0].mxu0
  %v2224 = vadd.f32 0.0, %v2223
  %v2225 = vpop.f32.mrb[0].mxu0
  %v2226 = vadd.f32 0.0, %v2225
  %v2227 = vpop.f32.mrb[0].mxu0
  %v2228 = vadd.f32 0.0, %v2227
  %2229 = vmatprep.mubr.bf16.mxu0 %v1172
  %2230 = vmatmul.mubr.bf16.gmra.mrb[0].mxu0 %v1171
  %v2231 = vpop.f32.mrb[0].mxu0
  %v2232 = vadd.f32 0.0, %v2231
  %v2233 = vpop.f32.mrb[0].mxu0
  %v2234 = vadd.f32 0.0, %v2233
  %v2235 = vpop.f32.mrb[0].mxu0
  %v2236 = vadd.f32 0.0, %v2235
  %v2237 = vpop.f32.mrb[0].mxu0
  %v2238 = vadd.f32 0.0, %v2237
  %2239 = vmatprep.mubr.bf16.mxu0 %v1176
  %2240 = vmatmul.mubr.bf16.gmra.mrb[0].mxu0 %v1175
  %v2241 = vpop.f32.mrb[0].mxu0
  %v2242 = vadd.f32 0.0, %v2241
  %v2243 = vpop.f32.mrb[0].mxu0
  %v2244 = vadd.f32 0.0, %v2243
  %v2245 = vpop.f32.mrb[0].mxu0
  %v2246 = vadd.f32 0.0, %v2245
  %v2247 = vpop.f32.mrb[0].mxu0
  %v2248 = vadd.f32 0.0, %v2247
  %2249 = vmatprep.mubr.bf16.mxu0 %v1180
  %2250 = vmatmul.mubr.bf16.gmra.mrb[0].mxu0 %v1179
  %v2251 = vpop.f32.mrb[0].mxu0
  %v2252 = vadd.f32 0.0, %v2251
  %v2253 = vpop.f32.mrb[0].mxu0
  %v2254 = vadd.f32 0.0, %v2253
  %v2255 = vpop.f32.mrb[0].mxu0
  %v2256 = vadd.f32 0.0, %v2255
  %v2257 = vpop.f32.mrb[0].mxu0
  %v2258 = vadd.f32 0.0, %v2257
  %2259 = vmatprep.mubr.bf16.mxu0 %v1184
  %2260 = vmatmul.mubr.bf16.gmra.mrb[0].mxu0 %v1183
  %v2261 = vpop.f32.mrb[0].mxu0
  %v2262 = vadd.f32 0.0, %v2261
  %v2263 = vpop.f32.mrb[0].mxu0
  %v2264 = vadd.f32 0.0, %v2263
  %v2265 = vpop.f32.mrb[0].mxu0
  %v2266 = vadd.f32 0.0, %v2265
  %v2267 = vpop.f32.mrb[0].mxu0
  %v2268 = vadd.f32 0.0, %v2267
  %2269 = vmatprep.mubr.bf16.mxu0 %v1188
  %2270 = vmatmul.mubr.bf16.gmra.mrb[0].mxu0 %v1187
  %v2271 = vpop.f32.mrb[0].mxu0
  %v2272 = vadd.f32 0.0, %v2271
  %v2273 = vpop.f32.mrb[0].mxu0
  %v2274 = vadd.f32 0.0, %v2273
  %v2275 = vpop.f32.mrb[0].mxu0
  %v2276 = vadd.f32 0.0, %v2275
  %v2277 = vpop.f32.mrb[0].mxu0
  %v2278 = vadd.f32 0.0, %v2277
  %2279 = vmatprep.mubr.bf16.mxu0 %v1192
  %2280 = vmatmul.mubr.bf16.gmra.mrb[0].mxu0 %v1191
  %v2281 = vpop.f32.mrb[0].mxu0
  %v2282 = vadd.f32 0.0, %v2281
  %v2283 = vpop.f32.mrb[0].mxu0
  %v2284 = vadd.f32 0.0, %v2283
  %v2285 = vpop.f32.mrb[0].mxu0
  %v2286 = vadd.f32 0.0, %v2285
  %v2287 = vpop.f32.mrb[0].mxu0
  %v2288 = vadd.f32 0.0, %v2287
  %2289 = vmatprep.mubr.bf16.mxu0 %v1196
  %2290 = vmatmul.mubr.bf16.gmra.mrb[0].mxu0 %v1195
  %v2291 = vpop.f32.mrb[0].mxu0
  %v2292 = vadd.f32 0.0, %v2291
  %v2293 = vpop.f32.mrb[0].mxu0
  %v2294 = vadd.f32 0.0, %v2293
  %v2295 = vpop.f32.mrb[0].mxu0
  %v2296 = vadd.f32 0.0, %v2295
  %v2297 = vpop.f32.mrb[0].mxu0
  %v2298 = vadd.f32 0.0, %v2297
  %2299 = vmatprep.mubr.bf16.mxu0 %v1200
  %2300 = vmatmul.mubr.bf16.gmra.mrb[0].mxu0 %v1199
  %v2301 = vpop.f32.mrb[0].mxu0
  %v2302 = vadd.f32 0.0, %v2301
  %v2303 = vpop.f32.mrb[0].mxu0
  %v2304 = vadd.f32 0.0, %v2303
  %v2305 = vpop.f32.mrb[0].mxu0
  %v2306 = vadd.f32 0.0, %v2305
  %v2307 = vpop.f32.mrb[0].mxu0
  %v2308 = vadd.f32 0.0, %v2307
  %2309 = vmatprep.mubr.bf16.mxu0 %v1204
  %2310 = vmatmul.mubr.bf16.gmra.mrb[0].mxu0 %v1203
  %v2311 = vpop.f32.mrb[0].mxu0
  %v2312 = vadd.f32 0.0, %v2311
  %v2313 = vpop.f32.mrb[0].mxu0
  %v2314 = vadd.f32 0.0, %v2313
  %v2315 = vpop.f32.mrb[0].mxu0
  %v2316 = vadd.f32 0.0, %v2315
  %v2317 = vpop.f32.mrb[0].mxu0
  %v2318 = vadd.f32 0.0, %v2317
  %2319 = vmatprep.mubr.bf16.mxu0 %v1208
  %2320 = vmatmul.mubr.bf16.gmra.mrb[0].mxu0 %v1207
  %v2321 = vpop.f32.mrb[0].mxu0
  %v2322 = vadd.f32 0.0, %v2321
  %v2323 = vpop.f32.mrb[0].mxu0
  %v2324 = vadd.f32 0.0, %v2323
  %v2325 = vpop.f32.mrb[0].mxu0
  %v2326 = vadd.f32 0.0, %v2325
  %v2327 = vpop.f32.mrb[0].mxu0
  %v2328 = vadd.f32 0.0, %v2327
  %2329 = vmatprep.mubr.bf16.mxu0 %v1212
  %2330 = vmatmul.mubr.bf16.gmra.mrb[0].mxu0 %v1211
  %v2331 = vpop.f32.mrb[0].mxu0
  %v2332 = vadd.f32 0.0, %v2331
  %v2333 = vpop.f32.mrb[0].mxu0
  %v2334 = vadd.f32 0.0, %v2333
  %v2335 = vpop.f32.mrb[0].mxu0
  %v2336 = vadd.f32 0.0, %v2335
  %v2337 = vpop.f32.mrb[0].mxu0
  %v2338 = vadd.f32 0.0, %v2337
  %2339 = vmatprep.mubr.bf16.mxu0 %v1216
  %2340 = vmatmul.mubr.bf16.gmra.mrb[0].mxu0 %v1215
  %v2341 = vpop.f32.mrb[0].mxu0
  %v2342 = vadd.f32 0.0, %v2341
  %v2343 = vpop.f32.mrb[0].mxu0
  %v2344 = vadd.f32 0.0, %v2343
  %v2345 = vpop.f32.mrb[0].mxu0
  %v2346 = vadd.f32 0.0, %v2345
  %v2347 = vpop.f32.mrb[0].mxu0
  %v2348 = vadd.f32 0.0, %v2347
  %2349 = vmatprep.mubr.bf16.mxu0 %v1220
  %2350 = vmatmul.mubr.bf16.gmra.mrb[0].mxu0 %v1219
  %v2351 = vpop.f32.mrb[0].mxu0
  %v2352 = vadd.f32 0.0, %v2351
  %v2353 = vpop.f32.mrb[0].mxu0
  %v2354 = vadd.f32 0.0, %v2353
  %v2355 = vpop.f32.mrb[0].mxu0
  %v2356 = vadd.f32 0.0, %v2355
  %v2357 = vpop.f32.mrb[0].mxu0
  %v2358 = vadd.f32 0.0, %v2357
  %2359 = vdwg.mxu0
  %2360 = vmatprep.subr.bf16.mxu0 %v1672
  %2361 = vmatpush1.bf16.msra.mxu0 %v1671
  %2362 = vmatprep.subr.bf16.mxu0 %v1674
  %2363 = vmatpush1.bf16.msra.mxu0 %v1673
  %2364 = vmatprep.subr.bf16.mxu0 %v1676
  %2365 = vmatpush1.bf16.msra.mxu0 %v1675
  %2366 = vmatprep.subr.bf16.mxu0 %v1678
  %2367 = vmatpush1.bf16.msra.mxu0 %v1677
  %2368 = vmatprep.subr.bf16.mxu0 %v1680
  %2369 = vmatpush1.bf16.msra.mxu0 %v1679
  %2370 = vmatprep.subr.bf16.mxu0 %v1682
  %2371 = vmatpush1.bf16.msra.mxu0 %v1681
  %2372 = vmatprep.subr.bf16.mxu0 %v1684
  %2373 = vmatpush1.bf16.msra.mxu0 %v1683
  %2374 = vmatprep.subr.bf16.mxu0 %v1686
  %2375 = vmatpush1.bf16.msra.mxu0 %v1685
  %2376 = vmatprep.subr.bf16.mxu0 %v1688
  %2377 = vmatpush1.bf16.msra.mxu0 %v1687
  %2378 = vmatprep.subr.bf16.mxu0 %v1690
  %2379 = vmatpush1.bf16.msra.mxu0 %v1689
  %2380 = vmatprep.subr.bf16.mxu0 %v1692
  %2381 = vmatpush1.bf16.msra.mxu0 %v1691
  %2382 = vmatprep.subr.bf16.mxu0 %v1694
  %2383 = vmatpush1.bf16.msra.mxu0 %v1693
  %2384 = vmatprep.subr.bf16.mxu0 %v1696
  %2385 = vmatpush1.bf16.msra.mxu0 %v1695
  %2386 = vmatprep.subr.bf16.mxu0 %v1698
  %2387 = vmatpush1.bf16.msra.mxu0 %v1697
  %2388 = vmatprep.subr.bf16.mxu0 %v1700
  %2389 = vmatpush1.bf16.msra.mxu0 %v1699
  %2390 = vmatprep.subr.bf16.mxu0 %v1702
  %2391 = vmatpush1.bf16.msra.mxu0 %v1701
  %2392 = vmatprep.mubr.bf16.mxu0 %v1002
  %2393 = vmatmul.mubr.bf16.gmra.mrb[0].mxu0 %v1001
  %v2394 = vpop.f32.mrb[0].mxu0
  %v2395 = vadd.f32 %v1802, %v2394
  %v2396 = vpop.f32.mrb[0].mxu0
  %v2397 = vadd.f32 %v1804, %v2396
  %v2398 = vpop.f32.mrb[0].mxu0
  %v2399 = vadd.f32 %v1806, %v2398
  %v2400 = vpop.f32.mrb[0].mxu0
  %v2401 = vadd.f32 %v1808, %v2400
  %2402 = vmatprep.mubr.bf16.mxu0 %v1006
  %2403 = vmatmul.mubr.bf16.gmra.mrb[0].mxu0 %v1005
  %v2404 = vpop.f32.mrb[0].mxu0
  %v2405 = vadd.f32 %v1812, %v2404
  %v2406 = vpop.f32.mrb[0].mxu0
  %v2407 = vadd.f32 %v1814, %v2406
  %v2408 = vpop.f32.mrb[0].mxu0
  %v2409 = vadd.f32 %v1816, %v2408
  %v2410 = vpop.f32.mrb[0].mxu0
  %v2411 = vadd.f32 %v1818, %v2410
  %2412 = vmatprep.mubr.bf16.mxu0 %v1010
  %2413 = vmatmul.mubr.bf16.gmra.mrb[0].mxu0 %v1009
  %v2414 = vpop.f32.mrb[0].mxu0
  %v2415 = vadd.f32 %v1822, %v2414
  %v2416 = vpop.f32.mrb[0].mxu0
  %v2417 = vadd.f32 %v1824, %v2416
  %v2418 = vpop.f32.mrb[0].mxu0
  %v2419 = vadd.f32 %v1826, %v2418
  %v2420 = vpop.f32.mrb[0].mxu0
  %v2421 = vadd.f32 %v1828, %v2420
  %2422 = vmatprep.mubr.bf16.mxu0 %v1014
  %2423 = vmatmul.mubr.bf16.gmra.mrb[0].mxu0 %v1013
  %v2424 = vpop.f32.mrb[0].mxu0
  %v2425 = vadd.f32 %v1832, %v2424
  %v2426 = vpop.f32.mrb[0].mxu0
  %v2427 = vadd.f32 %v1834, %v2426
  %v2428 = vpop.f32.mrb[0].mxu0
  %v2429 = vadd.f32 %v1836, %v2428
  %v2430 = vpop.f32.mrb[0].mxu0
  %v2431 = vadd.f32 %v1838, %v2430
  %2432 = vmatprep.mubr.bf16.mxu0 %v1018
  %2433 = vmatmul.mubr.bf16.gmra.mrb[0].mxu0 %v1017
  %v2434 = vpop.f32.mrb[0].mxu0
  %v2435 = vadd.f32 %v1842, %v2434
  %v2436 = vpop.f32.mrb[0].mxu0
  %v2437 = vadd.f32 %v1844, %v2436
  %v2438 = vpop.f32.mrb[0].mxu0
  %v2439 = vadd.f32 %v1846, %v2438
  %v2440 = vpop.f32.mrb[0].mxu0
  %v2441 = vadd.f32 %v1848, %v2440
  %2442 = vmatprep.mubr.bf16.mxu0 %v1022
  %2443 = vmatmul.mubr.bf16.gmra.mrb[0].mxu0 %v1021
  %v2444 = vpop.f32.mrb[0].mxu0
  %v2445 = vadd.f32 %v1852, %v2444
  %v2446 = vpop.f32.mrb[0].mxu0
  %v2447 = vadd.f32 %v1854, %v2446
  %v2448 = vpop.f32.mrb[0].mxu0
  %v2449 = vadd.f32 %v1856, %v2448
  %v2450 = vpop.f32.mrb[0].mxu0
  %v2451 = vadd.f32 %v1858, %v2450
  %2452 = vmatprep.mubr.bf16.mxu0 %v1026
  %2453 = vmatmul.mubr.bf16.gmra.mrb[0].mxu0 %v1025
  %v2454 = vpop.f32.mrb[0].mxu0
  %v2455 = vadd.f32 %v1862, %v2454
  %v2456 = vpop.f32.mrb[0].mxu0
  %v2457 = vadd.f32 %v1864, %v2456
  %v2458 = vpop.f32.mrb[0].mxu0
  %v2459 = vadd.f32 %v1866, %v2458
  %v2460 = vpop.f32.mrb[0].mxu0
  %v2461 = vadd.f32 %v1868, %v2460
  %2462 = vmatprep.mubr.bf16.mxu0 %v1030
  %2463 = vmatmul.mubr.bf16.gmra.mrb[0].mxu0 %v1029
  %v2464 = vpop.f32.mrb[0].mxu0
  %v2465 = vadd.f32 %v1872, %v2464
  %v2466 = vpop.f32.mrb[0].mxu0
  %v2467 = vadd.f32 %v1874, %v2466
  %v2468 = vpop.f32.mrb[0].mxu0
  %v2469 = vadd.f32 %v1876, %v2468
  %v2470 = vpop.f32.mrb[0].mxu0
  %v2471 = vadd.f32 %v1878, %v2470
  %2472 = vmatprep.mubr.bf16.mxu0 %v1034
  %2473 = vmatmul.mubr.bf16.gmra.mrb[0].mxu0 %v1033
  %v2474 = vpop.f32.mrb[0].mxu0
  %v2475 = vadd.f32 %v1882, %v2474
  %v2476 = vpop.f32.mrb[0].mxu0
  %v2477 = vadd.f32 %v1884, %v2476
  %v2478 = vpop.f32.mrb[0].mxu0
  %v2479 = vadd.f32 %v1886, %v2478
  %v2480 = vpop.f32.mrb[0].mxu0
  %v2481 = vadd.f32 %v1888, %v2480
  %2482 = vmatprep.mubr.bf16.mxu0 %v1038
  %2483 = vmatmul.mubr.bf16.gmra.mrb[0].mxu0 %v1037
  %v2484 = vpop.f32.mrb[0].mxu0
  %v2485 = vadd.f32 %v1892, %v2484
  %v2486 = vpop.f32.mrb[0].mxu0
  %v2487 = vadd.f32 %v1894, %v2486
  %v2488 = vpop.f32.mrb[0].mxu0
  %v2489 = vadd.f32 %v1896, %v2488
  %v2490 = vpop.f32.mrb[0].mxu0
  %v2491 = vadd.f32 %v1898, %v2490
  %2492 = vmatprep.mubr.bf16.mxu0 %v1042
  %2493 = vmatmul.mubr.bf16.gmra.mrb[0].mxu0 %v1041
  %v2494 = vpop.f32.mrb[0].mxu0
  %v2495 = vadd.f32 %v1902, %v2494
  %v2496 = vpop.f32.mrb[0].mxu0
  %v2497 = vadd.f32 %v1904, %v2496
  %v2498 = vpop.f32.mrb[0].mxu0
  %v2499 = vadd.f32 %v1906, %v2498
  %v2500 = vpop.f32.mrb[0].mxu0
  %v2501 = vadd.f32 %v1908, %v2500
  %2502 = vmatprep.mubr.bf16.mxu0 %v1046
  %2503 = vmatmul.mubr.bf16.gmra.mrb[0].mxu0 %v1045
  %v2504 = vpop.f32.mrb[0].mxu0
  %v2505 = vadd.f32 %v1912, %v2504
  %v2506 = vpop.f32.mrb[0].mxu0
  %v2507 = vadd.f32 %v1914, %v2506
  %v2508 = vpop.f32.mrb[0].mxu0
  %v2509 = vadd.f32 %v1916, %v2508
  %v2510 = vpop.f32.mrb[0].mxu0
  %v2511 = vadd.f32 %v1918, %v2510
  %2512 = vmatprep.mubr.bf16.mxu0 %v1050
  %2513 = vmatmul.mubr.bf16.gmra.mrb[0].mxu0 %v1049
  %v2514 = vpop.f32.mrb[0].mxu0
  %v2515 = vadd.f32 %v1922, %v2514
  %v2516 = vpop.f32.mrb[0].mxu0
  %v2517 = vadd.f32 %v1924, %v2516
  %v2518 = vpop.f32.mrb[0].mxu0
  %v2519 = vadd.f32 %v1926, %v2518
  %v2520 = vpop.f32.mrb[0].mxu0
  %v2521 = vadd.f32 %v1928, %v2520
  %2522 = vmatprep.mubr.bf16.mxu0 %v1054
  %2523 = vmatmul.mubr.bf16.gmra.mrb[0].mxu0 %v1053
  %v2524 = vpop.f32.mrb[0].mxu0
  %v2525 = vadd.f32 %v1932, %v2524
  %v2526 = vpop.f32.mrb[0].mxu0
  %v2527 = vadd.f32 %v1934, %v2526
  %v2528 = vpop.f32.mrb[0].mxu0
  %v2529 = vadd.f32 %v1936, %v2528
  %v2530 = vpop.f32.mrb[0].mxu0
  %v2531 = vadd.f32 %v1938, %v2530
  %2532 = vmatprep.mubr.bf16.mxu0 %v1058
  %2533 = vmatmul.mubr.bf16.gmra.mrb[0].mxu0 %v1057
  %v2534 = vpop.f32.mrb[0].mxu0
  %v2535 = vadd.f32 %v1942, %v2534
  %v2536 = vpop.f32.mrb[0].mxu0
  %v2537 = vadd.f32 %v1944, %v2536
  %v2538 = vpop.f32.mrb[0].mxu0
  %v2539 = vadd.f32 %v1946, %v2538
  %v2540 = vpop.f32.mrb[0].mxu0
  %v2541 = vadd.f32 %v1948, %v2540
  %2542 = vmatprep.mubr.bf16.mxu0 %v1062
  %2543 = vmatmul.mubr.bf16.gmra.mrb[0].mxu0 %v1061
  %v2544 = vpop.f32.mrb[0].mxu0
  %v2545 = vadd.f32 %v1952, %v2544
  %v2546 = vpop.f32.mrb[0].mxu0
  %v2547 = vadd.f32 %v1954, %v2546
  %v2548 = vpop.f32.mrb[0].mxu0
  %v2549 = vadd.f32 %v1956, %v2548
  %v2550 = vpop.f32.mrb[0].mxu0
  %v2551 = vadd.f32 %v1958, %v2550
  %2552 = vmatprep.mubr.bf16.mxu0 %v1066
  %2553 = vmatmul.mubr.bf16.gmra.mrb[0].mxu0 %v1065
  %v2554 = vpop.f32.mrb[0].mxu0
  %v2555 = vadd.f32 %v1962, %v2554
  %v2556 = vpop.f32.mrb[0].mxu0
  %v2557 = vadd.f32 %v1964, %v2556
  %v2558 = vpop.f32.mrb[0].mxu0
  %v2559 = vadd.f32 %v1966, %v2558
  %v2560 = vpop.f32.mrb[0].mxu0
  %v2561 = vadd.f32 %v1968, %v2560
  %2562 = vmatprep.mubr.bf16.mxu0 %v1070
  %2563 = vmatmul.mubr.bf16.gmra.mrb[0].mxu0 %v1069
  %v2564 = vpop.f32.mrb[0].mxu0
  %v2565 = vadd.f32 %v1972, %v2564
  %v2566 = vpop.f32.mrb[0].mxu0
  %v2567 = vadd.f32 %v1974, %v2566
  %v2568 = vpop.f32.mrb[0].mxu0
  %v2569 = vadd.f32 %v1976, %v2568
  %v2570 = vpop.f32.mrb[0].mxu0
  %v2571 = vadd.f32 %v1978, %v2570
  %2572 = vmatprep.mubr.bf16.mxu0 %v1074
  %2573 = vmatmul.mubr.bf16.gmra.mrb[0].mxu0 %v1073
  %v2574 = vpop.f32.mrb[0].mxu0
  %v2575 = vadd.f32 %v1982, %v2574
  %v2576 = vpop.f32.mrb[0].mxu0
  %v2577 = vadd.f32 %v1984, %v2576
  %v2578 = vpop.f32.mrb[0].mxu0
  %v2579 = vadd.f32 %v1986, %v2578
  %v2580 = vpop.f32.mrb[0].mxu0
  %v2581 = vadd.f32 %v1988, %v2580
  %2582 = vmatprep.mubr.bf16.mxu0 %v1078
  %2583 = vmatmul.mubr.bf16.gmra.mrb[0].mxu0 %v1077
  %v2584 = vpop.f32.mrb[0].mxu0
  %v2585 = vadd.f32 %v1992, %v2584
  %v2586 = vpop.f32.mrb[0].mxu0
  %v2587 = vadd.f32 %v1994, %v2586
  %v2588 = vpop.f32.mrb[0].mxu0
  %v2589 = vadd.f32 %v1996, %v2588
  %v2590 = vpop.f32.mrb[0].mxu0
  %v2591 = vadd.f32 %v1998, %v2590
  %2592 = vmatprep.mubr.bf16.mxu0 %v1082
  %2593 = vmatmul.mubr.bf16.gmra.mrb[0].mxu0 %v1081
  %v2594 = vpop.f32.mrb[0].mxu0
  %v2595 = vadd.f32 %v2002, %v2594
  %v2596 = vpop.f32.mrb[0].mxu0
  %v2597 = vadd.f32 %v2004, %v2596
  %v2598 = vpop.f32.mrb[0].mxu0
  %v2599 = vadd.f32 %v2006, %v2598
  %v2600 = vpop.f32.mrb[0].mxu0
  %v2601 = vadd.f32 %v2008, %v2600
  %2602 = vmatprep.mubr.bf16.mxu0 %v1086
  %2603 = vmatmul.mubr.bf16.gmra.mrb[0].mxu0 %v1085
  %v2604 = vpop.f32.mrb[0].mxu0
  %v2605 = vadd.f32 %v2012, %v2604
  %v2606 = vpop.f32.mrb[0].mxu0
  %v2607 = vadd.f32 %v2014, %v2606
  %v2608 = vpop.f32.mrb[0].mxu0
  %v2609 = vadd.f32 %v2016, %v2608
  %v2610 = vpop.f32.mrb[0].mxu0
  %v2611 = vadd.f32 %v2018, %v2610
  %2612 = vmatprep.mubr.bf16.mxu0 %v1090
  %2613 = vmatmul.mubr.bf16.gmra.mrb[0].mxu0 %v1089
  %v2614 = vpop.f32.mrb[0].mxu0
  %v2615 = vadd.f32 %v2022, %v2614
  %v2616 = vpop.f32.mrb[0].mxu0
  %v2617 = vadd.f32 %v2024, %v2616
  %v2618 = vpop.f32.mrb[0].mxu0
  %v2619 = vadd.f32 %v2026, %v2618
  %v2620 = vpop.f32.mrb[0].mxu0
  %v2621 = vadd.f32 %v2028, %v2620
  %2622 = vmatprep.mubr.bf16.mxu0 %v1094
  %2623 = vmatmul.mubr.bf16.gmra.mrb[0].mxu0 %v1093
  %v2624 = vpop.f32.mrb[0].mxu0
  %v2625 = vadd.f32 %v2032, %v2624
  %v2626 = vpop.f32.mrb[0].mxu0
  %v2627 = vadd.f32 %v2034, %v2626
  %v2628 = vpop.f32.mrb[0].mxu0
  %v2629 = vadd.f32 %v2036, %v2628
  %v2630 = vpop.f32.mrb[0].mxu0
  %v2631 = vadd.f32 %v2038, %v2630
  %2632 = vmatprep.mubr.bf16.mxu0 %v1098
  %2633 = vmatmul.mubr.bf16.gmra.mrb[0].mxu0 %v1097
  %v2634 = vpop.f32.mrb[0].mxu0
  %v2635 = vadd.f32 %v2042, %v2634
  %v2636 = vpop.f32.mrb[0].mxu0
  %v2637 = vadd.f32 %v2044, %v2636
  %v2638 = vpop.f32.mrb[0].mxu0
  %v2639 = vadd.f32 %v2046, %v2638
  %v2640 = vpop.f32.mrb[0].mxu0
  %v2641 = vadd.f32 %v2048, %v2640
  %2642 = vmatprep.mubr.bf16.mxu0 %v1102
  %2643 = vmatmul.mubr.bf16.gmra.mrb[0].mxu0 %v1101
  %v2644 = vpop.f32.mrb[0].mxu0
  %v2645 = vadd.f32 %v2052, %v2644
  %v2646 = vpop.f32.mrb[0].mxu0
  %v2647 = vadd.f32 %v2054, %v2646
  %v2648 = vpop.f32.mrb[0].mxu0
  %v2649 = vadd.f32 %v2056, %v2648
  %v2650 = vpop.f32.mrb[0].mxu0
  %v2651 = vadd.f32 %v2058, %v2650
  %2652 = vmatprep.mubr.bf16.mxu0 %v1106
  %2653 = vmatmul.mubr.bf16.gmra.mrb[0].mxu0 %v1105
  %v2654 = vpop.f32.mrb[0].mxu0
  %v2655 = vadd.f32 %v2062, %v2654
  %v2656 = vpop.f32.mrb[0].mxu0
  %v2657 = vadd.f32 %v2064, %v2656
  %v2658 = vpop.f32.mrb[0].mxu0
  %v2659 = vadd.f32 %v2066, %v2658
  %v2660 = vpop.f32.mrb[0].mxu0
  %v2661 = vadd.f32 %v2068, %v2660
  %2662 = vmatprep.mubr.bf16.mxu0 %v1110
  %2663 = vmatmul.mubr.bf16.gmra.mrb[0].mxu0 %v1109
  %v2664 = vpop.f32.mrb[0].mxu0
  %v2665 = vadd.f32 %v2072, %v2664
  %v2666 = vpop.f32.mrb[0].mxu0
  %v2667 = vadd.f32 %v2074, %v2666
  %v2668 = vpop.f32.mrb[0].mxu0
  %v2669 = vadd.f32 %v2076, %v2668
  %v2670 = vpop.f32.mrb[0].mxu0
  %v2671 = vadd.f32 %v2078, %v2670
  %2672 = vmatprep.mubr.bf16.mxu0 %v1114
  %2673 = vmatmul.mubr.bf16.gmra.mrb[0].mxu0 %v1113
  %v2674 = vpop.f32.mrb[0].mxu0
  %v2675 = vadd.f32 %v2082, %v2674
  %v2676 = vpop.f32.mrb[0].mxu0
  %v2677 = vadd.f32 %v2084, %v2676
  %v2678 = vpop.f32.mrb[0].mxu0
  %v2679 = vadd.f32 %v2086, %v2678
  %v2680 = vpop.f32.mrb[0].mxu0
  %v2681 = vadd.f32 %v2088, %v2680
  %2682 = vmatprep.mubr.bf16.mxu0 %v1118
  %2683 = vmatmul.mubr.bf16.gmra.mrb[0].mxu0 %v1117
  %v2684 = vpop.f32.mrb[0].mxu0
  %v2685 = vadd.f32 %v2092, %v2684
  %v2686 = vpop.f32.mrb[0].mxu0
  %v2687 = vadd.f32 %v2094, %v2686
  %v2688 = vpop.f32.mrb[0].mxu0
  %v2689 = vadd.f32 %v2096, %v2688
  %v2690 = vpop.f32.mrb[0].mxu0
  %v2691 = vadd.f32 %v2098, %v2690
  %2692 = vmatprep.mubr.bf16.mxu0 %v1122
  %2693 = vmatmul.mubr.bf16.gmra.mrb[0].mxu0 %v1121
  %v2694 = vpop.f32.mrb[0].mxu0
  %v2695 = vadd.f32 %v2102, %v2694
  %v2696 = vpop.f32.mrb[0].mxu0
  %v2697 = vadd.f32 %v2104, %v2696
  %v2698 = vpop.f32.mrb[0].mxu0
  %v2699 = vadd.f32 %v2106, %v2698
  %v2700 = vpop.f32.mrb[0].mxu0
  %v2701 = vadd.f32 %v2108, %v2700
  %2702 = vmatprep.mubr.bf16.mxu0 %v1126
  %2703 = vmatmul.mubr.bf16.gmra.mrb[0].mxu0 %v1125
  %v2704 = vpop.f32.mrb[0].mxu0
  %v2705 = vadd.f32 %v2112, %v2704
  %v2706 = vpop.f32.mrb[0].mxu0
  %v2707 = vadd.f32 %v2114, %v2706
  %v2708 = vpop.f32.mrb[0].mxu0
  %v2709 = vadd.f32 %v2116, %v2708
  %v2710 = vpop.f32.mrb[0].mxu0
  %v2711 = vadd.f32 %v2118, %v2710
  %2712 = vmatprep.mubr.bf16.mxu0 %v1130
  %2713 = vmatmul.mubr.bf16.gmra.mrb[0].mxu0 %v1129
  %v2714 = vpop.f32.mrb[0].mxu0
  %v2715 = vadd.f32 %v2122, %v2714
  %v2716 = vpop.f32.mrb[0].mxu0
  %v2717 = vadd.f32 %v2124, %v2716
  %v2718 = vpop.f32.mrb[0].mxu0
  %v2719 = vadd.f32 %v2126, %v2718
  %v2720 = vpop.f32.mrb[0].mxu0
  %v2721 = vadd.f32 %v2128, %v2720
  %2722 = vmatprep.mubr.bf16.mxu0 %v1134
  %2723 = vmatmul.mubr.bf16.gmra.mrb[0].mxu0 %v1133
  %v2724 = vpop.f32.mrb[0].mxu0
  %v2725 = vadd.f32 %v2132, %v2724
  %v2726 = vpop.f32.mrb[0].mxu0
  %v2727 = vadd.f32 %v2134, %v2726
  %v2728 = vpop.f32.mrb[0].mxu0
  %v2729 = vadd.f32 %v2136, %v2728
  %v2730 = vpop.f32.mrb[0].mxu0
  %v2731 = vadd.f32 %v2138, %v2730
  %2732 = vmatprep.mubr.bf16.mxu0 %v1138
  %2733 = vmatmul.mubr.bf16.gmra.mrb[0].mxu0 %v1137
  %v2734 = vpop.f32.mrb[0].mxu0
  %v2735 = vadd.f32 %v2142, %v2734
  %v2736 = vpop.f32.mrb[0].mxu0
  %v2737 = vadd.f32 %v2144, %v2736
  %v2738 = vpop.f32.mrb[0].mxu0
  %v2739 = vadd.f32 %v2146, %v2738
  %v2740 = vpop.f32.mrb[0].mxu0
  %v2741 = vadd.f32 %v2148, %v2740
  %2742 = vmatprep.mubr.bf16.mxu0 %v1142
  %2743 = vmatmul.mubr.bf16.gmra.mrb[0].mxu0 %v1141
  %v2744 = vpop.f32.mrb[0].mxu0
  %v2745 = vadd.f32 %v2152, %v2744
  %v2746 = vpop.f32.mrb[0].mxu0
  %v2747 = vadd.f32 %v2154, %v2746
  %v2748 = vpop.f32.mrb[0].mxu0
  %v2749 = vadd.f32 %v2156, %v2748
  %v2750 = vpop.f32.mrb[0].mxu0
  %v2751 = vadd.f32 %v2158, %v2750
  %2752 = vmatprep.mubr.bf16.mxu0 %v1146
  %2753 = vmatmul.mubr.bf16.gmra.mrb[0].mxu0 %v1145
  %v2754 = vpop.f32.mrb[0].mxu0
  %v2755 = vadd.f32 %v2162, %v2754
  %v2756 = vpop.f32.mrb[0].mxu0
  %v2757 = vadd.f32 %v2164, %v2756
  %v2758 = vpop.f32.mrb[0].mxu0
  %v2759 = vadd.f32 %v2166, %v2758
  %v2760 = vpop.f32.mrb[0].mxu0
  %v2761 = vadd.f32 %v2168, %v2760
  %2762 = vmatprep.mubr.bf16.mxu0 %v1150
  %2763 = vmatmul.mubr.bf16.gmra.mrb[0].mxu0 %v1149
  %v2764 = vpop.f32.mrb[0].mxu0
  %v2765 = vadd.f32 %v2172, %v2764
  %v2766 = vpop.f32.mrb[0].mxu0
  %v2767 = vadd.f32 %v2174, %v2766
  %v2768 = vpop.f32.mrb[0].mxu0
  %v2769 = vadd.f32 %v2176, %v2768
  %v2770 = vpop.f32.mrb[0].mxu0
  %v2771 = vadd.f32 %v2178, %v2770
  %2772 = vmatprep.mubr.bf16.mxu0 %v1154
  %2773 = vmatmul.mubr.bf16.gmra.mrb[0].mxu0 %v1153
  %v2774 = vpop.f32.mrb[0].mxu0
  %v2775 = vadd.f32 %v2182, %v2774
  %v2776 = vpop.f32.mrb[0].mxu0
  %v2777 = vadd.f32 %v2184, %v2776
  %v2778 = vpop.f32.mrb[0].mxu0
  %v2779 = vadd.f32 %v2186, %v2778
  %v2780 = vpop.f32.mrb[0].mxu0
  %v2781 = vadd.f32 %v2188, %v2780
  %2782 = vmatprep.mubr.bf16.mxu0 %v1158
  %2783 = vmatmul.mubr.bf16.gmra.mrb[0].mxu0 %v1157
  %v2784 = vpop.f32.mrb[0].mxu0
  %v2785 = vadd.f32 %v2192, %v2784
  %v2786 = vpop.f32.mrb[0].mxu0
  %v2787 = vadd.f32 %v2194, %v2786
  %v2788 = vpop.f32.mrb[0].mxu0
  %v2789 = vadd.f32 %v2196, %v2788
  %v2790 = vpop.f32.mrb[0].mxu0
  %v2791 = vadd.f32 %v2198, %v2790
  %2792 = vmatprep.mubr.bf16.mxu0 %v1162
  %2793 = vmatmul.mubr.bf16.gmra.mrb[0].mxu0 %v1161
  %v2794 = vpop.f32.mrb[0].mxu0
  %v2795 = vadd.f32 %v2202, %v2794
  %v2796 = vpop.f32.mrb[0].mxu0
  %v2797 = vadd.f32 %v2204, %v2796
  %v2798 = vpop.f32.mrb[0].mxu0
  %v2799 = vadd.f32 %v2206, %v2798
  %v2800 = vpop.f32.mrb[0].mxu0
  %v2801 = vadd.f32 %v2208, %v2800
  %2802 = vmatprep.mubr.bf16.mxu0 %v1166
  %2803 = vmatmul.mubr.bf16.gmra.mrb[0].mxu0 %v1165
  %v2804 = vpop.f32.mrb[0].mxu0
  %v2805 = vadd.f32 %v2212, %v2804
  %v2806 = vpop.f32.mrb[0].mxu0
  %v2807 = vadd.f32 %v2214, %v2806
  %v2808 = vpop.f32.mrb[0].mxu0
  %v2809 = vadd.f32 %v2216, %v2808
  %v2810 = vpop.f32.mrb[0].mxu0
  %v2811 = vadd.f32 %v2218, %v2810
  %2812 = vmatprep.mubr.bf16.mxu0 %v1170
  %2813 = vmatmul.mubr.bf16.gmra.mrb[0].mxu0 %v1169
  %v2814 = vpop.f32.mrb[0].mxu0
  %v2815 = vadd.f32 %v2222, %v2814
  %v2816 = vpop.f32.mrb[0].mxu0
  %v2817 = vadd.f32 %v2224, %v2816
  %v2818 = vpop.f32.mrb[0].mxu0
  %v2819 = vadd.f32 %v2226, %v2818
  %v2820 = vpop.f32.mrb[0].mxu0
  %v2821 = vadd.f32 %v2228, %v2820
  %2822 = vmatprep.mubr.bf16.mxu0 %v1174
  %2823 = vmatmul.mubr.bf16.gmra.mrb[0].mxu0 %v1173
  %v2824 = vpop.f32.mrb[0].mxu0
  %v2825 = vadd.f32 %v2232, %v2824
  %v2826 = vpop.f32.mrb[0].mxu0
  %v2827 = vadd.f32 %v2234, %v2826
  %v2828 = vpop.f32.mrb[0].mxu0
  %v2829 = vadd.f32 %v2236, %v2828
  %v2830 = vpop.f32.mrb[0].mxu0
  %v2831 = vadd.f32 %v2238, %v2830
  %2832 = vmatprep.mubr.bf16.mxu0 %v1178
  %2833 = vmatmul.mubr.bf16.gmra.mrb[0].mxu0 %v1177
  %v2834 = vpop.f32.mrb[0].mxu0
  %v2835 = vadd.f32 %v2242, %v2834
  %v2836 = vpop.f32.mrb[0].mxu0
  %v2837 = vadd.f32 %v2244, %v2836
  %v2838 = vpop.f32.mrb[0].mxu0
  %v2839 = vadd.f32 %v2246, %v2838
  %v2840 = vpop.f32.mrb[0].mxu0
  %v2841 = vadd.f32 %v2248, %v2840
  %2842 = vmatprep.mubr.bf16.mxu0 %v1182
  %2843 = vmatmul.mubr.bf16.gmra.mrb[0].mxu0 %v1181
  %v2844 = vpop.f32.mrb[0].mxu0
  %v2845 = vadd.f32 %v2252, %v2844
  %v2846 = vpop.f32.mrb[0].mxu0
  %v2847 = vadd.f32 %v2254, %v2846
  %v2848 = vpop.f32.mrb[0].mxu0
  %v2849 = vadd.f32 %v2256, %v2848
  %v2850 = vpop.f32.mrb[0].mxu0
  %v2851 = vadd.f32 %v2258, %v2850
  %2852 = vmatprep.mubr.bf16.mxu0 %v1186
  %2853 = vmatmul.mubr.bf16.gmra.mrb[0].mxu0 %v1185
  %v2854 = vpop.f32.mrb[0].mxu0
  %v2855 = vadd.f32 %v2262, %v2854
  %v2856 = vpop.f32.mrb[0].mxu0
  %v2857 = vadd.f32 %v2264, %v2856
  %v2858 = vpop.f32.mrb[0].mxu0
  %v2859 = vadd.f32 %v2266, %v2858
  %v2860 = vpop.f32.mrb[0].mxu0
  %v2861 = vadd.f32 %v2268, %v2860
  %2862 = vmatprep.mubr.bf16.mxu0 %v1190
  %2863 = vmatmul.mubr.bf16.gmra.mrb[0].mxu0 %v1189
  %v2864 = vpop.f32.mrb[0].mxu0
  %v2865 = vadd.f32 %v2272, %v2864
  %v2866 = vpop.f32.mrb[0].mxu0
  %v2867 = vadd.f32 %v2274, %v2866
  %v2868 = vpop.f32.mrb[0].mxu0
  %v2869 = vadd.f32 %v2276, %v2868
  %v2870 = vpop.f32.mrb[0].mxu0
  %v2871 = vadd.f32 %v2278, %v2870
  %2872 = vmatprep.mubr.bf16.mxu0 %v1194
  %2873 = vmatmul.mubr.bf16.gmra.mrb[0].mxu0 %v1193
  %v2874 = vpop.f32.mrb[0].mxu0
  %v2875 = vadd.f32 %v2282, %v2874
  %v2876 = vpop.f32.mrb[0].mxu0
  %v2877 = vadd.f32 %v2284, %v2876
  %v2878 = vpop.f32.mrb[0].mxu0
  %v2879 = vadd.f32 %v2286, %v2878
  %v2880 = vpop.f32.mrb[0].mxu0
  %v2881 = vadd.f32 %v2288, %v2880
  %2882 = vmatprep.mubr.bf16.mxu0 %v1198
  %2883 = vmatmul.mubr.bf16.gmra.mrb[0].mxu0 %v1197
  %v2884 = vpop.f32.mrb[0].mxu0
  %v2885 = vadd.f32 %v2292, %v2884
  %v2886 = vpop.f32.mrb[0].mxu0
  %v2887 = vadd.f32 %v2294, %v2886
  %v2888 = vpop.f32.mrb[0].mxu0
  %v2889 = vadd.f32 %v2296, %v2888
  %v2890 = vpop.f32.mrb[0].mxu0
  %v2891 = vadd.f32 %v2298, %v2890
  %2892 = vmatprep.mubr.bf16.mxu0 %v1202
  %2893 = vmatmul.mubr.bf16.gmra.mrb[0].mxu0 %v1201
  %v2894 = vpop.f32.mrb[0].mxu0
  %v2895 = vadd.f32 %v2302, %v2894
  %v2896 = vpop.f32.mrb[0].mxu0
  %v2897 = vadd.f32 %v2304, %v2896
  %v2898 = vpop.f32.mrb[0].mxu0
  %v2899 = vadd.f32 %v2306, %v2898
  %v2900 = vpop.f32.mrb[0].mxu0
  %v2901 = vadd.f32 %v2308, %v2900
  %2902 = vmatprep.mubr.bf16.mxu0 %v1206
  %2903 = vmatmul.mubr.bf16.gmra.mrb[0].mxu0 %v1205
  %v2904 = vpop.f32.mrb[0].mxu0
  %v2905 = vadd.f32 %v2312, %v2904
  %v2906 = vpop.f32.mrb[0].mxu0
  %v2907 = vadd.f32 %v2314, %v2906
  %v2908 = vpop.f32.mrb[0].mxu0
  %v2909 = vadd.f32 %v2316, %v2908
  %v2910 = vpop.f32.mrb[0].mxu0
  %v2911 = vadd.f32 %v2318, %v2910
  %2912 = vmatprep.mubr.bf16.mxu0 %v1210
  %2913 = vmatmul.mubr.bf16.gmra.mrb[0].mxu0 %v1209
  %v2914 = vpop.f32.mrb[0].mxu0
  %v2915 = vadd.f32 %v2322, %v2914
  %v2916 = vpop.f32.mrb[0].mxu0
  %v2917 = vadd.f32 %v2324, %v2916
  %v2918 = vpop.f32.mrb[0].mxu0
  %v2919 = vadd.f32 %v2326, %v2918
  %v2920 = vpop.f32.mrb[0].mxu0
  %v2921 = vadd.f32 %v2328, %v2920
  %2922 = vmatprep.mubr.bf16.mxu0 %v1214
  %2923 = vmatmul.mubr.bf16.gmra.mrb[0].mxu0 %v1213
  %v2924 = vpop.f32.mrb[0].mxu0
  %v2925 = vadd.f32 %v2332, %v2924
  %v2926 = vpop.f32.mrb[0].mxu0
  %v2927 = vadd.f32 %v2334, %v2926
  %v2928 = vpop.f32.mrb[0].mxu0
  %v2929 = vadd.f32 %v2336, %v2928
  %v2930 = vpop.f32.mrb[0].mxu0
  %v2931 = vadd.f32 %v2338, %v2930
  %2932 = vmatprep.mubr.bf16.mxu0 %v1218
  %2933 = vmatmul.mubr.bf16.gmra.mrb[0].mxu0 %v1217
  %v2934 = vpop.f32.mrb[0].mxu0
  %v2935 = vadd.f32 %v2342, %v2934
  %v2936 = vpop.f32.mrb[0].mxu0
  %v2937 = vadd.f32 %v2344, %v2936
  %v2938 = vpop.f32.mrb[0].mxu0
  %v2939 = vadd.f32 %v2346, %v2938
  %v2940 = vpop.f32.mrb[0].mxu0
  %v2941 = vadd.f32 %v2348, %v2940
  %2942 = vmatprep.mubr.bf16.mxu0 %v1222
  %2943 = vmatmul.mubr.bf16.gmra.mrb[0].mxu0 %v1221
  %v2944 = vpop.f32.mrb[0].mxu0
  %v2945 = vadd.f32 %v2352, %v2944
  %v2946 = vpop.f32.mrb[0].mxu0
  %v2947 = vadd.f32 %v2354, %v2946
  %v2948 = vpop.f32.mrb[0].mxu0
  %v2949 = vadd.f32 %v2356, %v2948
  %v2950 = vpop.f32.mrb[0].mxu0
  %v2951 = vadd.f32 %v2358, %v2950
  %2952 = vdwg.mxu0
  %v2953 = vmax.f32 %v2395, %v2675
  %v2954 = vmax.f32 %v2397, %v2677
  %v2955 = vmax.f32 %v2399, %v2679
  %v2956 = vmax.f32 %v2401, %v2681
  %v2957 = vmax.f32 %v2405, %v2685
  %v2958 = vmax.f32 %v2407, %v2687
  %v2959 = vmax.f32 %v2409, %v2689
  %v2960 = vmax.f32 %v2411, %v2691
  %v2961 = vmax.f32 %v2415, %v2695
  %v2962 = vmax.f32 %v2417, %v2697
  %v2963 = vmax.f32 %v2419, %v2699
  %v2964 = vmax.f32 %v2421, %v2701
  %v2965 = vmax.f32 %v2425, %v2705
  %v2966 = vmax.f32 %v2427, %v2707
  %v2967 = vmax.f32 %v2429, %v2709
  %v2968 = vmax.f32 %v2431, %v2711
  %v2969 = vmax.f32 %v2435, %v2715
  %v2970 = vmax.f32 %v2437, %v2717
  %v2971 = vmax.f32 %v2439, %v2719
  %v2972 = vmax.f32 %v2441, %v2721
  %v2973 = vmax.f32 %v2445, %v2725
  %v2974 = vmax.f32 %v2447, %v2727
  %v2975 = vmax.f32 %v2449, %v2729
  %v2976 = vmax.f32 %v2451, %v2731
  %v2977 = vmax.f32 %v2455, %v2735
  %v2978 = vmax.f32 %v2457, %v2737
  %v2979 = vmax.f32 %v2459, %v2739
  %v2980 = vmax.f32 %v2461, %v2741
  %v2981 = vmax.f32 %v2465, %v2745
  %v2982 = vmax.f32 %v2467, %v2747
  %v2983 = vmax.f32 %v2469, %v2749
  %v2984 = vmax.f32 %v2471, %v2751
  %v2985 = vmax.f32 %v2475, %v2755
  %v2986 = vmax.f32 %v2477, %v2757
  %v2987 = vmax.f32 %v2479, %v2759
  %v2988 = vmax.f32 %v2481, %v2761
  %v2989 = vmax.f32 %v2485, %v2765
  %v2990 = vmax.f32 %v2487, %v2767
  %v2991 = vmax.f32 %v2489, %v2769
  %v2992 = vmax.f32 %v2491, %v2771
  %v2993 = vmax.f32 %v2495, %v2775
  %v2994 = vmax.f32 %v2497, %v2777
  %v2995 = vmax.f32 %v2499, %v2779
  %v2996 = vmax.f32 %v2501, %v2781
  %v2997 = vmax.f32 %v2505, %v2785
  %v2998 = vmax.f32 %v2507, %v2787
  %v2999 = vmax.f32 %v2509, %v2789
  %v3000 = vmax.f32 %v2511, %v2791
  %v3001 = vmax.f32 %v2515, %v2795
  %v3002 = vmax.f32 %v2517, %v2797
  %v3003 = vmax.f32 %v2519, %v2799
  %v3004 = vmax.f32 %v2521, %v2801
  %v3005 = vmax.f32 %v2525, %v2805
  %v3006 = vmax.f32 %v2527, %v2807
  %v3007 = vmax.f32 %v2529, %v2809
  %v3008 = vmax.f32 %v2531, %v2811
  %v3009 = vmax.f32 %v2535, %v2815
  %v3010 = vmax.f32 %v2537, %v2817
  %v3011 = vmax.f32 %v2539, %v2819
  %v3012 = vmax.f32 %v2541, %v2821
  %v3013 = vmax.f32 %v2545, %v2825
  %v3014 = vmax.f32 %v2547, %v2827
  %v3015 = vmax.f32 %v2549, %v2829
  %v3016 = vmax.f32 %v2551, %v2831
  %v3017 = vmax.f32 %v2555, %v2835
  %v3018 = vmax.f32 %v2557, %v2837
  %v3019 = vmax.f32 %v2559, %v2839
  %v3020 = vmax.f32 %v2561, %v2841
  %v3021 = vmax.f32 %v2565, %v2845
  %v3022 = vmax.f32 %v2567, %v2847
  %v3023 = vmax.f32 %v2569, %v2849
  %v3024 = vmax.f32 %v2571, %v2851
  %v3025 = vmax.f32 %v2575, %v2855
  %v3026 = vmax.f32 %v2577, %v2857
  %v3027 = vmax.f32 %v2579, %v2859
  %v3028 = vmax.f32 %v2581, %v2861
  %v3029 = vmax.f32 %v2585, %v2865
  %v3030 = vmax.f32 %v2587, %v2867
  %v3031 = vmax.f32 %v2589, %v2869
  %v3032 = vmax.f32 %v2591, %v2871
  %v3033 = vmax.f32 %v2595, %v2875
  %v3034 = vmax.f32 %v2597, %v2877
  %v3035 = vmax.f32 %v2599, %v2879
  %v3036 = vmax.f32 %v2601, %v2881
  %v3037 = vmax.f32 %v2605, %v2885
  %v3038 = vmax.f32 %v2607, %v2887
  %v3039 = vmax.f32 %v2609, %v2889
  %v3040 = vmax.f32 %v2611, %v2891
  %v3041 = vmax.f32 %v2615, %v2895
  %v3042 = vmax.f32 %v2617, %v2897
  %v3043 = vmax.f32 %v2619, %v2899
  %v3044 = vmax.f32 %v2621, %v2901
  %v3045 = vmax.f32 %v2625, %v2905
  %v3046 = vmax.f32 %v2627, %v2907
  %v3047 = vmax.f32 %v2629, %v2909
  %v3048 = vmax.f32 %v2631, %v2911
  %v3049 = vmax.f32 %v2635, %v2915
  %v3050 = vmax.f32 %v2637, %v2917
  %v3051 = vmax.f32 %v2639, %v2919
  %v3052 = vmax.f32 %v2641, %v2921
  %v3053 = vmax.f32 %v2645, %v2925
  %v3054 = vmax.f32 %v2647, %v2927
  %v3055 = vmax.f32 %v2649, %v2929
  %v3056 = vmax.f32 %v2651, %v2931
  %v3057 = vmax.f32 %v2655, %v2935
  %v3058 = vmax.f32 %v2657, %v2937
  %v3059 = vmax.f32 %v2659, %v2939
  %v3060 = vmax.f32 %v2661, %v2941
  %v3061 = vmax.f32 %v2665, %v2945
  %v3062 = vmax.f32 %v2667, %v2947
  %v3063 = vmax.f32 %v2669, %v2949
  %v3064 = vmax.f32 %v2671, %v2951
  %v3065 = vmax.f32 %v2953, %v2954
  %v3066 = vmax.f32 %v2955, %v2956
  %v3067 = vmax.f32 %v2957, %v2958
  %v3068 = vmax.f32 %v2959, %v2960
  %v3069 = vmax.f32 %v2961, %v2962
  %v3070 = vmax.f32 %v2963, %v2964
  %v3071 = vmax.f32 %v2965, %v2966
  %v3072 = vmax.f32 %v2967, %v2968
  %v3073 = vmax.f32 %v2969, %v2970
  %v3074 = vmax.f32 %v2971, %v2972
  %v3075 = vmax.f32 %v2973, %v2974
  %v3076 = vmax.f32 %v2975, %v2976
  %v3077 = vmax.f32 %v2977, %v2978
  %v3078 = vmax.f32 %v2979, %v2980
  %v3079 = vmax.f32 %v2981, %v2982
  %v3080 = vmax.f32 %v2983, %v2984
  %v3081 = vmax.f32 %v2985, %v2986
  %v3082 = vmax.f32 %v2987, %v2988
  %v3083 = vmax.f32 %v2989, %v2990
  %v3084 = vmax.f32 %v2991, %v2992
  %v3085 = vmax.f32 %v2993, %v2994
  %v3086 = vmax.f32 %v2995, %v2996
  %v3087 = vmax.f32 %v2997, %v2998
  %v3088 = vmax.f32 %v2999, %v3000
  %v3089 = vmax.f32 %v3001, %v3002
  %v3090 = vmax.f32 %v3003, %v3004
  %v3091 = vmax.f32 %v3005, %v3006
  %v3092 = vmax.f32 %v3007, %v3008
  %v3093 = vmax.f32 %v3009, %v3010
  %v3094 = vmax.f32 %v3011, %v3012
  %v3095 = vmax.f32 %v3013, %v3014
  %v3096 = vmax.f32 %v3015, %v3016
  %v3097 = vmax.f32 %v3017, %v3018
  %v3098 = vmax.f32 %v3019, %v3020
  %v3099 = vmax.f32 %v3021, %v3022
  %v3100 = vmax.f32 %v3023, %v3024
  %v3101 = vmax.f32 %v3025, %v3026
  %v3102 = vmax.f32 %v3027, %v3028
  %v3103 = vmax.f32 %v3029, %v3030
  %v3104 = vmax.f32 %v3031, %v3032
  %v3105 = vmax.f32 %v3033, %v3034
  %v3106 = vmax.f32 %v3035, %v3036
  %v3107 = vmax.f32 %v3037, %v3038
  %v3108 = vmax.f32 %v3039, %v3040
  %v3109 = vmax.f32 %v3041, %v3042
  %v3110 = vmax.f32 %v3043, %v3044
  %v3111 = vmax.f32 %v3045, %v3046
  %v3112 = vmax.f32 %v3047, %v3048
  %v3113 = vmax.f32 %v3049, %v3050
  %v3114 = vmax.f32 %v3051, %v3052
  %v3115 = vmax.f32 %v3053, %v3054
  %v3116 = vmax.f32 %v3055, %v3056
  %v3117 = vmax.f32 %v3057, %v3058
  %v3118 = vmax.f32 %v3059, %v3060
  %v3119 = vmax.f32 %v3061, %v3062
  %v3120 = vmax.f32 %v3063, %v3064
  %v3121 = vld [vmem:[%s2] sm:$0x1]
  %v3123 = vlaneseq
  %v3124 = vshrl.u32 %v3123, 7
  %v3125 = vsub.s32 0, %v3124
  %v3126 = vrot.slane %v3121, %v3125
  %v3128 = vadd.f32 %v3065, %v3126
  %v3129 = vadd.f32 %v3066, %v3126
  %v3130 = vadd.f32 %v3067, %v3126
  %v3131 = vadd.f32 %v3068, %v3126
  %v3132 = vadd.f32 %v3069, %v3126
  %v3133 = vadd.f32 %v3070, %v3126
  %v3134 = vadd.f32 %v3071, %v3126
  %v3135 = vadd.f32 %v3072, %v3126
  %v3136 = vadd.f32 %v3073, %v3126
  %v3137 = vadd.f32 %v3074, %v3126
  %v3138 = vadd.f32 %v3075, %v3126
  %v3139 = vadd.f32 %v3076, %v3126
  %v3140 = vadd.f32 %v3077, %v3126
  %v3141 = vadd.f32 %v3078, %v3126
  %v3142 = vadd.f32 %v3079, %v3126
  %v3143 = vadd.f32 %v3080, %v3126
  %v3144 = vadd.f32 %v3081, %v3126
  %v3145 = vadd.f32 %v3082, %v3126
  %v3146 = vadd.f32 %v3083, %v3126
  %v3147 = vadd.f32 %v3084, %v3126
  %v3148 = vadd.f32 %v3085, %v3126
  %v3149 = vadd.f32 %v3086, %v3126
  %v3150 = vadd.f32 %v3087, %v3126
  %v3151 = vadd.f32 %v3088, %v3126
  %v3152 = vadd.f32 %v3089, %v3126
  %v3153 = vadd.f32 %v3090, %v3126
  %v3154 = vadd.f32 %v3091, %v3126
  %v3155 = vadd.f32 %v3092, %v3126
  %v3156 = vadd.f32 %v3093, %v3126
  %v3157 = vadd.f32 %v3094, %v3126
  %v3158 = vadd.f32 %v3095, %v3126
  %v3159 = vadd.f32 %v3096, %v3126
  %v3160 = vadd.f32 %v3097, %v3126
  %v3161 = vadd.f32 %v3098, %v3126
  %v3162 = vadd.f32 %v3099, %v3126
  %v3163 = vadd.f32 %v3100, %v3126
  %v3164 = vadd.f32 %v3101, %v3126
  %v3165 = vadd.f32 %v3102, %v3126
  %v3166 = vadd.f32 %v3103, %v3126
  %v3167 = vadd.f32 %v3104, %v3126
  %v3168 = vadd.f32 %v3105, %v3126
  %v3169 = vadd.f32 %v3106, %v3126
  %v3170 = vadd.f32 %v3107, %v3126
  %v3171 = vadd.f32 %v3108, %v3126
  %v3172 = vadd.f32 %v3109, %v3126
  %v3173 = vadd.f32 %v3110, %v3126
  %v3174 = vadd.f32 %v3111, %v3126
  %v3175 = vadd.f32 %v3112, %v3126
  %v3176 = vadd.f32 %v3113, %v3126
  %v3177 = vadd.f32 %v3114, %v3126
  %v3178 = vadd.f32 %v3115, %v3126
  %v3179 = vadd.f32 %v3116, %v3126
  %v3180 = vadd.f32 %v3117, %v3126
  %v3181 = vadd.f32 %v3118, %v3126
  %v3182 = vadd.f32 %v3119, %v3126
  %v3183 = vadd.f32 %v3120, %v3126
  %v3184 = vmax.f32 %v3128, 0.0
  %v3185 = vmax.f32 %v3129, 0.0
  %v3186 = vmax.f32 %v3130, 0.0
  %v3187 = vmax.f32 %v3131, 0.0
  %v3188 = vmax.f32 %v3132, 0.0
  %v3189 = vmax.f32 %v3133, 0.0
  %v3190 = vmax.f32 %v3134, 0.0
  %v3191 = vmax.f32 %v3135, 0.0
  %v3192 = vmax.f32 %v3136, 0.0
  %v3193 = vmax.f32 %v3137, 0.0
  %v3194 = vmax.f32 %v3138, 0.0
  %v3195 = vmax.f32 %v3139, 0.0
  %v3196 = vmax.f32 %v3140, 0.0
  %v3197 = vmax.f32 %v3141, 0.0
  %v3198 = vmax.f32 %v3142, 0.0
  %v3199 = vmax.f32 %v3143, 0.0
  %v3200 = vmax.f32 %v3144, 0.0
  %v3201 = vmax.f32 %v3145, 0.0
  %v3202 = vmax.f32 %v3146, 0.0
  %v3203 = vmax.f32 %v3147, 0.0
  %v3204 = vmax.f32 %v3148, 0.0
  %v3205 = vmax.f32 %v3149, 0.0
  %v3206 = vmax.f32 %v3150, 0.0
  %v3207 = vmax.f32 %v3151, 0.0
  %v3208 = vmax.f32 %v3152, 0.0
  %v3209 = vmax.f32 %v3153, 0.0
  %v3210 = vmax.f32 %v3154, 0.0
  %v3211 = vmax.f32 %v3155, 0.0
  %v3212 = vmax.f32 %v3156, 0.0
  %v3213 = vmax.f32 %v3157, 0.0
  %v3214 = vmax.f32 %v3158, 0.0
  %v3215 = vmax.f32 %v3159, 0.0
  %v3216 = vmax.f32 %v3160, 0.0
  %v3217 = vmax.f32 %v3161, 0.0
  %v3218 = vmax.f32 %v3162, 0.0
  %v3219 = vmax.f32 %v3163, 0.0
  %v3220 = vmax.f32 %v3164, 0.0
  %v3221 = vmax.f32 %v3165, 0.0
  %v3222 = vmax.f32 %v3166, 0.0
  %v3223 = vmax.f32 %v3167, 0.0
  %v3224 = vmax.f32 %v3168, 0.0
  %v3225 = vmax.f32 %v3169, 0.0
  %v3226 = vmax.f32 %v3170, 0.0
  %v3227 = vmax.f32 %v3171, 0.0
  %v3228 = vmax.f32 %v3172, 0.0
  %v3229 = vmax.f32 %v3173, 0.0
  %v3230 = vmax.f32 %v3174, 0.0
  %v3231 = vmax.f32 %v3175, 0.0
  %v3232 = vmax.f32 %v3176, 0.0
  %v3233 = vmax.f32 %v3177, 0.0
  %v3234 = vmax.f32 %v3178, 0.0
  %v3235 = vmax.f32 %v3179, 0.0
  %v3236 = vmax.f32 %v3180, 0.0
  %v3237 = vmax.f32 %v3181, 0.0
  %v3238 = vmax.f32 %v3182, 0.0
  %v3239 = vmax.f32 %v3183, 0.0
  %v3240 = vpack.c.bf16 %v3185, %v3184
  %v3241 = vpack.c.bf16 %v3187, %v3186
  %v3242 = vpack.c.bf16 %v3189, %v3188
  %v3243 = vpack.c.bf16 %v3191, %v3190
  %v3244 = vpack.c.bf16 %v3193, %v3192
  %v3245 = vpack.c.bf16 %v3195, %v3194
  %v3246 = vpack.c.bf16 %v3197, %v3196
  %v3247 = vpack.c.bf16 %v3199, %v3198
  %v3248 = vpack.c.bf16 %v3201, %v3200
  %v3249 = vpack.c.bf16 %v3203, %v3202
  %v3250 = vpack.c.bf16 %v3205, %v3204
  %v3251 = vpack.c.bf16 %v3207, %v3206
  %v3252 = vpack.c.bf16 %v3209, %v3208
  %v3253 = vpack.c.bf16 %v3211, %v3210
  %v3254 = vpack.c.bf16 %v3213, %v3212
  %v3255 = vpack.c.bf16 %v3215, %v3214
  %v3256 = vpack.c.bf16 %v3217, %v3216
  %v3257 = vpack.c.bf16 %v3219, %v3218
  %v3258 = vpack.c.bf16 %v3221, %v3220
  %v3259 = vpack.c.bf16 %v3223, %v3222
  %v3260 = vpack.c.bf16 %v3225, %v3224
  %v3261 = vpack.c.bf16 %v3227, %v3226
  %v3262 = vpack.c.bf16 %v3229, %v3228
  %v3263 = vpack.c.bf16 %v3231, %v3230
  %v3264 = vpack.c.bf16 %v3233, %v3232
  %v3265 = vpack.c.bf16 %v3235, %v3234
  %v3266 = vpack.c.bf16 %v3237, %v3236
  %v3267 = vpack.c.bf16 %v3239, %v3238
  %v3268 = vld [vmem:[%s3] sm:$0xff]
  %v3269 = vld [vmem:[%s3 + $0x8] sm:$0xff]
  %v3270 = vld [vmem:[%s3 + $0x10] sm:$0xff]
  %v3271 = vld [vmem:[%s3 + $0x18] sm:$0xff]
  %v3272 = vld [vmem:[%s3 + $0x20] sm:$0xff]
  %v3273 = vld [vmem:[%s3 + $0x28] sm:$0xff]
  %v3274 = vld [vmem:[%s3 + $0x30] sm:$0xff]
  %v3275 = vld [vmem:[%s3 + $0x38] sm:$0xff]
  %v3276 = vld [vmem:[%s3 + $0x40] sm:$0xff]
  %v3277 = vld [vmem:[%s3 + $0x48] sm:$0xff]
  %v3278 = vld [vmem:[%s3 + $0x50] sm:$0xff]
  %v3279 = vld [vmem:[%s3 + $0x58] sm:$0xff]
  %v3280 = vld [vmem:[%s3 + $0x60] sm:$0xff]
  %v3281 = vld [vmem:[%s3 + $0x68] sm:$0xff]
  %v3282 = vld [vmem:[%s3 + $0x70] sm:$0xff]
  %v3283 = vld [vmem:[%s3 + $0x78] sm:$0xff]
  %s3284 = scalar_lea.vmem %s3, 128
  %v3285 = vld [vmem:[%s3284] sm:$0xff]
  %v3286 = vld [vmem:[%s3284 + $0x8] sm:$0xff]
  %v3287 = vld [vmem:[%s3284 + $0x10] sm:$0xff]
  %v3288 = vld [vmem:[%s3284 + $0x18] sm:$0xff]
  %v3289 = vld [vmem:[%s3284 + $0x20] sm:$0xff]
  %v3290 = vld [vmem:[%s3284 + $0x28] sm:$0xff]
  %v3291 = vld [vmem:[%s3284 + $0x30] sm:$0xff]
  %v3292 = vld [vmem:[%s3284 + $0x38] sm:$0xff]
  %v3293 = vld [vmem:[%s3284 + $0x40] sm:$0xff]
  %v3294 = vld [vmem:[%s3284 + $0x48] sm:$0xff]
  %v3295 = vld [vmem:[%s3284 + $0x50] sm:$0xff]
  %v3296 = vld [vmem:[%s3284 + $0x58] sm:$0xff]
  %v3297 = vld [vmem:[%s3284 + $0x60] sm:$0xff]
  %v3298 = vld [vmem:[%s3284 + $0x68] sm:$0xff]
  %v3299 = vld [vmem:[%s3284 + $0x70] sm:$0xff]
  %v3300 = vld [vmem:[%s3284 + $0x78] sm:$0xff]
  %v3317 = vunpack.c.l.b16 %v3285
  %v3318 = vunpack.c.h.b16 %v3285
  %v3319 = vunpack.c.l.b16 %v3286
  %v3320 = vunpack.c.h.b16 %v3286
  %v3321 = vunpack.c.l.b16 %v3287
  %v3322 = vunpack.c.h.b16 %v3287
  %v3323 = vunpack.c.l.b16 %v3288
  %v3324 = vunpack.c.h.b16 %v3288
  %v3325 = vunpack.c.l.b16 %v3289
  %v3326 = vunpack.c.h.b16 %v3289
  %v3327 = vunpack.c.l.b16 %v3290
  %v3328 = vunpack.c.h.b16 %v3290
  %v3329 = vunpack.c.l.b16 %v3291
  %v3330 = vunpack.c.h.b16 %v3291
  %v3331 = vunpack.c.l.b16 %v3292
  %v3332 = vunpack.c.h.b16 %v3292
  %v3333 = vunpack.c.l.b16 %v3293
  %v3334 = vunpack.c.h.b16 %v3293
  %v3335 = vunpack.c.l.b16 %v3294
  %v3336 = vunpack.c.h.b16 %v3294
  %v3337 = vunpack.c.l.b16 %v3295
  %v3338 = vunpack.c.h.b16 %v3295
  %v3339 = vunpack.c.l.b16 %v3296
  %v3340 = vunpack.c.h.b16 %v3296
  %v3341 = vunpack.c.l.b16 %v3297
  %v3342 = vunpack.c.h.b16 %v3297
  %v3343 = vunpack.c.l.b16 %v3298
  %v3344 = vunpack.c.h.b16 %v3298
  %v3345 = vunpack.c.l.b16 %v3299
  %v3346 = vunpack.c.h.b16 %v3299
  %v3347 = vunpack.c.l.b16 %v3300
  %v3348 = vunpack.c.h.b16 %v3300
  %v3349 = vpack.c.b16 %v3319, %v3317
  %v3350 = vpack.c.b16 %v3320, %v3318
  %v3351 = vpack.c.b16 %v3323, %v3321
  %v3352 = vpack.c.b16 %v3324, %v3322
  %v3353 = vpack.c.b16 %v3327, %v3325
  %v3354 = vpack.c.b16 %v3328, %v3326
  %v3355 = vpack.c.b16 %v3331, %v3329
  %v3356 = vpack.c.b16 %v3332, %v3330
  %v3357 = vpack.c.b16 %v3335, %v3333
  %v3358 = vpack.c.b16 %v3336, %v3334
  %v3359 = vpack.c.b16 %v3339, %v3337
  %v3360 = vpack.c.b16 %v3340, %v3338
  %v3361 = vpack.c.b16 %v3343, %v3341
  %v3362 = vpack.c.b16 %v3344, %v3342
  %v3363 = vpack.c.b16 %v3347, %v3345
  %v3364 = vpack.c.b16 %v3348, %v3346
  %3381 = vmatprep.subr.bf16.mxu0 %v3350
  %3382 = vmatpush1.bf16.msra.mxu0 %v3349
  %3383 = vmatprep.subr.bf16.mxu0 %v3352
  %3384 = vmatpush1.bf16.msra.mxu0 %v3351
  %3385 = vmatprep.subr.bf16.mxu0 %v3354
  %3386 = vmatpush1.bf16.msra.mxu0 %v3353
  %3387 = vmatprep.subr.bf16.mxu0 %v3356
  %3388 = vmatpush1.bf16.msra.mxu0 %v3355
  %3389 = vmatprep.subr.bf16.mxu0 %v3358
  %3390 = vmatpush1.bf16.msra.mxu0 %v3357
  %3391 = vmatprep.subr.bf16.mxu0 %v3360
  %3392 = vmatpush1.bf16.msra.mxu0 %v3359
  %3393 = vmatprep.subr.bf16.mxu0 %v3362
  %3394 = vmatpush1.bf16.msra.mxu0 %v3361
  %3395 = vmatprep.subr.bf16.mxu0 %v3364
  %3396 = vmatpush1.bf16.msra.mxu0 %v3363
  %3397 = vmatprep.subr.bf16.mxu0 0
  %3398 = vmatpush1.bf16.msra.mxu0 0
  %3399 = vmatprep.subr.bf16.mxu0 0
  %3400 = vmatpush1.bf16.msra.mxu0 0
  %3401 = vmatprep.subr.bf16.mxu0 0
  %3402 = vmatpush1.bf16.msra.mxu0 0
  %3403 = vmatprep.subr.bf16.mxu0 0
  %3404 = vmatpush1.bf16.msra.mxu0 0
  %3405 = vmatprep.subr.bf16.mxu0 0
  %3406 = vmatpush1.bf16.msra.mxu0 0
  %3407 = vmatprep.subr.bf16.mxu0 0
  %3408 = vmatpush1.bf16.msra.mxu0 0
  %3409 = vmatprep.subr.bf16.mxu0 0
  %3410 = vmatpush1.bf16.msra.mxu0 0
  %3411 = vmatprep.subr.bf16.mxu0 0
  %3412 = vmatpush1.bf16.msra.mxu0 0
  %3413 = vmatprep.mubr.bf16.mxu0 0
  %3414 = vmatmul.mubr.bf16.gmra.mrb[0].mxu0 %v3254
  %v3415 = vpop.f32.mrb[0].mxu0
  %v3416 = vadd.f32 0.0, %v3415
  %v3417 = vpop.f32.mrb[0].mxu0
  %v3418 = vadd.f32 0.0, %v3417
  %v3419 = vpop.f32.mrb[0].mxu0
  %v3420 = vadd.f32 0.0, %v3419
  %v3421 = vpop.f32.mrb[0].mxu0
  %v3422 = vadd.f32 0.0, %v3421
  %3423 = vmatprep.mubr.bf16.mxu0 0
  %3424 = vmatmul.mubr.bf16.gmra.mrb[0].mxu0 %v3255
  %v3425 = vpop.f32.mrb[0].mxu0
  %v3426 = vadd.f32 0.0, %v3425
  %v3427 = vpop.f32.mrb[0].mxu0
  %v3428 = vadd.f32 0.0, %v3427
  %v3429 = vpop.f32.mrb[0].mxu0
  %v3430 = vadd.f32 0.0, %v3429
  %v3431 = vpop.f32.mrb[0].mxu0
  %v3432 = vadd.f32 0.0, %v3431
  %3433 = vmatprep.mubr.bf16.mxu0 0
  %3434 = vmatmul.mubr.bf16.gmra.mrb[0].mxu0 %v3256
  %v3435 = vpop.f32.mrb[0].mxu0
  %v3436 = vadd.f32 0.0, %v3435
  %v3437 = vpop.f32.mrb[0].mxu0
  %v3438 = vadd.f32 0.0, %v3437
  %v3439 = vpop.f32.mrb[0].mxu0
  %v3440 = vadd.f32 0.0, %v3439
  %v3441 = vpop.f32.mrb[0].mxu0
  %v3442 = vadd.f32 0.0, %v3441
  %3443 = vmatprep.mubr.bf16.mxu0 0
  %3444 = vmatmul.mubr.bf16.gmra.mrb[0].mxu0 %v3257
  %v3445 = vpop.f32.mrb[0].mxu0
  %v3446 = vadd.f32 0.0, %v3445
  %v3447 = vpop.f32.mrb[0].mxu0
  %v3448 = vadd.f32 0.0, %v3447
  %v3449 = vpop.f32.mrb[0].mxu0
  %v3450 = vadd.f32 0.0, %v3449
  %v3451 = vpop.f32.mrb[0].mxu0
  %v3452 = vadd.f32 0.0, %v3451
  %3453 = vmatprep.mubr.bf16.mxu0 0
  %3454 = vmatmul.mubr.bf16.gmra.mrb[0].mxu0 %v3258
  %v3455 = vpop.f32.mrb[0].mxu0
  %v3456 = vadd.f32 0.0, %v3455
  %v3457 = vpop.f32.mrb[0].mxu0
  %v3458 = vadd.f32 0.0, %v3457
  %v3459 = vpop.f32.mrb[0].mxu0
  %v3460 = vadd.f32 0.0, %v3459
  %v3461 = vpop.f32.mrb[0].mxu0
  %v3462 = vadd.f32 0.0, %v3461
  %3463 = vmatprep.mubr.bf16.mxu0 0
  %3464 = vmatmul.mubr.bf16.gmra.mrb[0].mxu0 %v3259
  %v3465 = vpop.f32.mrb[0].mxu0
  %v3466 = vadd.f32 0.0, %v3465
  %v3467 = vpop.f32.mrb[0].mxu0
  %v3468 = vadd.f32 0.0, %v3467
  %v3469 = vpop.f32.mrb[0].mxu0
  %v3470 = vadd.f32 0.0, %v3469
  %v3471 = vpop.f32.mrb[0].mxu0
  %v3472 = vadd.f32 0.0, %v3471
  %3473 = vmatprep.mubr.bf16.mxu0 0
  %3474 = vmatmul.mubr.bf16.gmra.mrb[0].mxu0 %v3260
  %v3475 = vpop.f32.mrb[0].mxu0
  %v3476 = vadd.f32 0.0, %v3475
  %v3477 = vpop.f32.mrb[0].mxu0
  %v3478 = vadd.f32 0.0, %v3477
  %v3479 = vpop.f32.mrb[0].mxu0
  %v3480 = vadd.f32 0.0, %v3479
  %v3481 = vpop.f32.mrb[0].mxu0
  %v3482 = vadd.f32 0.0, %v3481
  %3483 = vmatprep.mubr.bf16.mxu0 0
  %3484 = vmatmul.mubr.bf16.gmra.mrb[0].mxu0 %v3261
  %v3485 = vpop.f32.mrb[0].mxu0
  %v3486 = vadd.f32 0.0, %v3485
  %v3487 = vpop.f32.mrb[0].mxu0
  %v3488 = vadd.f32 0.0, %v3487
  %v3489 = vpop.f32.mrb[0].mxu0
  %v3490 = vadd.f32 0.0, %v3489
  %v3491 = vpop.f32.mrb[0].mxu0
  %v3492 = vadd.f32 0.0, %v3491
  %3493 = vmatprep.mubr.bf16.mxu0 0
  %3494 = vmatmul.mubr.bf16.gmra.mrb[0].mxu0 %v3262
  %v3495 = vpop.f32.mrb[0].mxu0
  %v3496 = vadd.f32 0.0, %v3495
  %v3497 = vpop.f32.mrb[0].mxu0
  %v3498 = vadd.f32 0.0, %v3497
  %v3499 = vpop.f32.mrb[0].mxu0
  %v3500 = vadd.f32 0.0, %v3499
  %v3501 = vpop.f32.mrb[0].mxu0
  %v3502 = vadd.f32 0.0, %v3501
  %3503 = vmatprep.mubr.bf16.mxu0 0
  %3504 = vmatmul.mubr.bf16.gmra.mrb[0].mxu0 %v3263
  %v3505 = vpop.f32.mrb[0].mxu0
  %v3506 = vadd.f32 0.0, %v3505
  %v3507 = vpop.f32.mrb[0].mxu0
  %v3508 = vadd.f32 0.0, %v3507
  %v3509 = vpop.f32.mrb[0].mxu0
  %v3510 = vadd.f32 0.0, %v3509
  %v3511 = vpop.f32.mrb[0].mxu0
  %v3512 = vadd.f32 0.0, %v3511
  %3513 = vdwg.mxu0
  %v3530 = vunpack.c.l.b16 %v3268
  %v3531 = vunpack.c.h.b16 %v3268
  %v3532 = vunpack.c.l.b16 %v3269
  %v3533 = vunpack.c.h.b16 %v3269
  %v3534 = vunpack.c.l.b16 %v3270
  %v3535 = vunpack.c.h.b16 %v3270
  %v3536 = vunpack.c.l.b16 %v3271
  %v3537 = vunpack.c.h.b16 %v3271
  %v3538 = vunpack.c.l.b16 %v3272
  %v3539 = vunpack.c.h.b16 %v3272
  %v3540 = vunpack.c.l.b16 %v3273
  %v3541 = vunpack.c.h.b16 %v3273
  %v3542 = vunpack.c.l.b16 %v3274
  %v3543 = vunpack.c.h.b16 %v3274
  %v3544 = vunpack.c.l.b16 %v3275
  %v3545 = vunpack.c.h.b16 %v3275
  %v3546 = vunpack.c.l.b16 %v3276
  %v3547 = vunpack.c.h.b16 %v3276
  %v3548 = vunpack.c.l.b16 %v3277
  %v3549 = vunpack.c.h.b16 %v3277
  %v3550 = vunpack.c.l.b16 %v3278
  %v3551 = vunpack.c.h.b16 %v3278
  %v3552 = vunpack.c.l.b16 %v3279
  %v3553 = vunpack.c.h.b16 %v3279
  %v3554 = vunpack.c.l.b16 %v3280
  %v3555 = vunpack.c.h.b16 %v3280
  %v3556 = vunpack.c.l.b16 %v3281
  %v3557 = vunpack.c.h.b16 %v3281
  %v3558 = vunpack.c.l.b16 %v3282
  %v3559 = vunpack.c.h.b16 %v3282
  %v3560 = vunpack.c.l.b16 %v3283
  %v3561 = vunpack.c.h.b16 %v3283
  %v3562 = vpack.c.b16 %v3532, %v3530
  %v3563 = vpack.c.b16 %v3533, %v3531
  %v3564 = vpack.c.b16 %v3536, %v3534
  %v3565 = vpack.c.b16 %v3537, %v3535
  %v3566 = vpack.c.b16 %v3540, %v3538
  %v3567 = vpack.c.b16 %v3541, %v3539
  %v3568 = vpack.c.b16 %v3544, %v3542
  %v3569 = vpack.c.b16 %v3545, %v3543
  %v3570 = vpack.c.b16 %v3548, %v3546
  %v3571 = vpack.c.b16 %v3549, %v3547
  %v3572 = vpack.c.b16 %v3552, %v3550
  %v3573 = vpack.c.b16 %v3553, %v3551
  %v3574 = vpack.c.b16 %v3556, %v3554
  %v3575 = vpack.c.b16 %v3557, %v3555
  %v3576 = vpack.c.b16 %v3560, %v3558
  %v3577 = vpack.c.b16 %v3561, %v3559
  %3594 = vmatprep.subr.bf16.mxu0 %v3563
  %3595 = vmatpush1.bf16.msra.mxu0 %v3562
  %3596 = vmatprep.subr.bf16.mxu0 %v3565
  %3597 = vmatpush1.bf16.msra.mxu0 %v3564
  %3598 = vmatprep.subr.bf16.mxu0 %v3567
  %3599 = vmatpush1.bf16.msra.mxu0 %v3566
  %3600 = vmatprep.subr.bf16.mxu0 %v3569
  %3601 = vmatpush1.bf16.msra.mxu0 %v3568
  %3602 = vmatprep.subr.bf16.mxu0 %v3571
  %3603 = vmatpush1.bf16.msra.mxu0 %v3570
  %3604 = vmatprep.subr.bf16.mxu0 %v3573
  %3605 = vmatpush1.bf16.msra.mxu0 %v3572
  %3606 = vmatprep.subr.bf16.mxu0 %v3575
  %3607 = vmatpush1.bf16.msra.mxu0 %v3574
  %3608 = vmatprep.subr.bf16.mxu0 %v3577
  %3609 = vmatpush1.bf16.msra.mxu0 %v3576
  %3610 = vmatprep.subr.bf16.mxu0 0
  %3611 = vmatpush1.bf16.msra.mxu0 0
  %3612 = vmatprep.subr.bf16.mxu0 0
  %3613 = vmatpush1.bf16.msra.mxu0 0
  %3614 = vmatprep.subr.bf16.mxu0 0
  %3615 = vmatpush1.bf16.msra.mxu0 0
  %3616 = vmatprep.subr.bf16.mxu0 0
  %3617 = vmatpush1.bf16.msra.mxu0 0
  %3618 = vmatprep.subr.bf16.mxu0 0
  %3619 = vmatpush1.bf16.msra.mxu0 0
  %3620 = vmatprep.subr.bf16.mxu0 0
  %3621 = vmatpush1.bf16.msra.mxu0 0
  %3622 = vmatprep.subr.bf16.mxu0 0
  %3623 = vmatpush1.bf16.msra.mxu0 0
  %3624 = vmatprep.subr.bf16.mxu0 0
  %3625 = vmatpush1.bf16.msra.mxu0 0
  %3626 = vmatprep.mubr.bf16.mxu0 0
  %3627 = vmatmul.mubr.bf16.gmra.mrb[0].mxu0 %v3240
  %v3628 = vpop.f32.mrb[0].mxu0
  %v3629 = vadd.f32 %v3416, %v3628
  %v3630 = vpop.f32.mrb[0].mxu0
  %v3631 = vadd.f32 %v3418, %v3630
  %v3632 = vpop.f32.mrb[0].mxu0
  %v3633 = vadd.f32 %v3420, %v3632
  %v3634 = vpop.f32.mrb[0].mxu0
  %v3635 = vadd.f32 %v3422, %v3634
  %3636 = vmatprep.mubr.bf16.mxu0 0
  %3637 = vmatmul.mubr.bf16.gmra.mrb[0].mxu0 %v3241
  %v3638 = vpop.f32.mrb[0].mxu0
  %v3639 = vadd.f32 %v3426, %v3638
  %v3640 = vpop.f32.mrb[0].mxu0
  %v3641 = vadd.f32 %v3428, %v3640
  %v3642 = vpop.f32.mrb[0].mxu0
  %v3643 = vadd.f32 %v3430, %v3642
  %v3644 = vpop.f32.mrb[0].mxu0
  %v3645 = vadd.f32 %v3432, %v3644
  %3646 = vmatprep.mubr.bf16.mxu0 0
  %3647 = vmatmul.mubr.bf16.gmra.mrb[0].mxu0 %v3242
  %v3648 = vpop.f32.mrb[0].mxu0
  %v3649 = vadd.f32 %v3436, %v3648
  %v3650 = vpop.f32.mrb[0].mxu0
  %v3651 = vadd.f32 %v3438, %v3650
  %v3652 = vpop.f32.mrb[0].mxu0
  %v3653 = vadd.f32 %v3440, %v3652
  %v3654 = vpop.f32.mrb[0].mxu0
  %v3655 = vadd.f32 %v3442, %v3654
  %3656 = vmatprep.mubr.bf16.mxu0 0
  %3657 = vmatmul.mubr.bf16.gmra.mrb[0].mxu0 %v3243
  %v3658 = vpop.f32.mrb[0].mxu0
  %v3659 = vadd.f32 %v3446, %v3658
  %v3660 = vpop.f32.mrb[0].mxu0
  %v3661 = vadd.f32 %v3448, %v3660
  %v3662 = vpop.f32.mrb[0].mxu0
  %v3663 = vadd.f32 %v3450, %v3662
  %v3664 = vpop.f32.mrb[0].mxu0
  %v3665 = vadd.f32 %v3452, %v3664
  %3666 = vmatprep.mubr.bf16.mxu0 0
  %3667 = vmatmul.mubr.bf16.gmra.mrb[0].mxu0 %v3244
  %v3668 = vpop.f32.mrb[0].mxu0
  %v3669 = vadd.f32 %v3456, %v3668
  %v3670 = vpop.f32.mrb[0].mxu0
  %v3671 = vadd.f32 %v3458, %v3670
  %v3672 = vpop.f32.mrb[0].mxu0
  %v3673 = vadd.f32 %v3460, %v3672
  %v3674 = vpop.f32.mrb[0].mxu0
  %v3675 = vadd.f32 %v3462, %v3674
  %3676 = vmatprep.mubr.bf16.mxu0 0
  %3677 = vmatmul.mubr.bf16.gmra.mrb[0].mxu0 %v3245
  %v3678 = vpop.f32.mrb[0].mxu0
  %v3679 = vadd.f32 %v3466, %v3678
  %v3680 = vpop.f32.mrb[0].mxu0
  %v3681 = vadd.f32 %v3468, %v3680
  %v3682 = vpop.f32.mrb[0].mxu0
  %v3683 = vadd.f32 %v3470, %v3682
  %v3684 = vpop.f32.mrb[0].mxu0
  %v3685 = vadd.f32 %v3472, %v3684
  %3686 = vmatprep.mubr.bf16.mxu0 0
  %3687 = vmatmul.mubr.bf16.gmra.mrb[0].mxu0 %v3246
  %v3688 = vpop.f32.mrb[0].mxu0
  %v3689 = vadd.f32 %v3476, %v3688
  %v3690 = vpop.f32.mrb[0].mxu0
  %v3691 = vadd.f32 %v3478, %v3690
  %v3692 = vpop.f32.mrb[0].mxu0
  %v3693 = vadd.f32 %v3480, %v3692
  %v3694 = vpop.f32.mrb[0].mxu0
  %v3695 = vadd.f32 %v3482, %v3694
  %3696 = vmatprep.mubr.bf16.mxu0 0
  %3697 = vmatmul.mubr.bf16.gmra.mrb[0].mxu0 %v3247
  %v3698 = vpop.f32.mrb[0].mxu0
  %v3699 = vadd.f32 %v3486, %v3698
  %v3700 = vpop.f32.mrb[0].mxu0
  %v3701 = vadd.f32 %v3488, %v3700
  %v3702 = vpop.f32.mrb[0].mxu0
  %v3703 = vadd.f32 %v3490, %v3702
  %v3704 = vpop.f32.mrb[0].mxu0
  %v3705 = vadd.f32 %v3492, %v3704
  %3706 = vmatprep.mubr.bf16.mxu0 0
  %3707 = vmatmul.mubr.bf16.gmra.mrb[0].mxu0 %v3248
  %v3708 = vpop.f32.mrb[0].mxu0
  %v3709 = vadd.f32 %v3496, %v3708
  %v3710 = vpop.f32.mrb[0].mxu0
  %v3711 = vadd.f32 %v3498, %v3710
  %v3712 = vpop.f32.mrb[0].mxu0
  %v3713 = vadd.f32 %v3500, %v3712
  %v3714 = vpop.f32.mrb[0].mxu0
  %v3715 = vadd.f32 %v3502, %v3714
  %3716 = vmatprep.mubr.bf16.mxu0 0
  %3717 = vmatmul.mubr.bf16.gmra.mrb[0].mxu0 %v3249
  %v3718 = vpop.f32.mrb[0].mxu0
  %v3719 = vadd.f32 %v3506, %v3718
  %v3720 = vpop.f32.mrb[0].mxu0
  %v3721 = vadd.f32 %v3508, %v3720
  %v3722 = vpop.f32.mrb[0].mxu0
  %v3723 = vadd.f32 %v3510, %v3722
  %v3724 = vpop.f32.mrb[0].mxu0
  %v3725 = vadd.f32 %v3512, %v3724
  %3726 = vdwg.mxu0
  %3727 = vmatprep.subr.bf16.mxu0 %v3350
  %3728 = vmatpush1.bf16.msra.mxu0 %v3349
  %3729 = vmatprep.subr.bf16.mxu0 %v3352
  %3730 = vmatpush1.bf16.msra.mxu0 %v3351
  %3731 = vmatprep.subr.bf16.mxu0 %v3354
  %3732 = vmatpush1.bf16.msra.mxu0 %v3353
  %3733 = vmatprep.subr.bf16.mxu0 %v3356
  %3734 = vmatpush1.bf16.msra.mxu0 %v3355
  %3735 = vmatprep.subr.bf16.mxu0 %v3358
  %3736 = vmatpush1.bf16.msra.mxu0 %v3357
  %3737 = vmatprep.subr.bf16.mxu0 %v3360
  %3738 = vmatpush1.bf16.msra.mxu0 %v3359
  %3739 = vmatprep.subr.bf16.mxu0 %v3362
  %3740 = vmatpush1.bf16.msra.mxu0 %v3361
  %3741 = vmatprep.subr.bf16.mxu0 %v3364
  %3742 = vmatpush1.bf16.msra.mxu0 %v3363
  %3743 = vmatprep.subr.bf16.mxu0 0
  %3744 = vmatpush1.bf16.msra.mxu0 0
  %3745 = vmatprep.subr.bf16.mxu0 0
  %3746 = vmatpush1.bf16.msra.mxu0 0
  %3747 = vmatprep.subr.bf16.mxu0 0
  %3748 = vmatpush1.bf16.msra.mxu0 0
  %3749 = vmatprep.subr.bf16.mxu0 0
  %3750 = vmatpush1.bf16.msra.mxu0 0
  %3751 = vmatprep.subr.bf16.mxu0 0
  %3752 = vmatpush1.bf16.msra.mxu0 0
  %3753 = vmatprep.subr.bf16.mxu0 0
  %3754 = vmatpush1.bf16.msra.mxu0 0
  %3755 = vmatprep.subr.bf16.mxu0 0
  %3756 = vmatpush1.bf16.msra.mxu0 0
  %3757 = vmatprep.subr.bf16.mxu0 0
  %3758 = vmatpush1.bf16.msra.mxu0 0
  %3759 = vmatprep.mubr.bf16.mxu0 0
  %3760 = vmatmul.mubr.bf16.gmra.mrb[0].mxu0 %v3242
  %v3761 = vpop.f32.mrb[0].mxu0
  %v3762 = vadd.f32 0.0, %v3761
  %v3763 = vpop.f32.mrb[0].mxu0
  %v3764 = vadd.f32 0.0, %v3763
  %v3765 = vpop.f32.mrb[0].mxu0
  %v3766 = vadd.f32 0.0, %v3765
  %v3767 = vpop.f32.mrb[0].mxu0
  %v3768 = vadd.f32 0.0, %v3767
  %3769 = vmatprep.mubr.bf16.mxu0 0
  %3770 = vmatmul.mubr.bf16.gmra.mrb[0].mxu0 %v3243
  %v3771 = vpop.f32.mrb[0].mxu0
  %v3772 = vadd.f32 0.0, %v3771
  %v3773 = vpop.f32.mrb[0].mxu0
  %v3774 = vadd.f32 0.0, %v3773
  %v3775 = vpop.f32.mrb[0].mxu0
  %v3776 = vadd.f32 0.0, %v3775
  %v3777 = vpop.f32.mrb[0].mxu0
  %v3778 = vadd.f32 0.0, %v3777
  %3779 = vmatprep.mubr.bf16.mxu0 0
  %3780 = vmatmul.mubr.bf16.gmra.mrb[0].mxu0 %v3244
  %v3781 = vpop.f32.mrb[0].mxu0
  %v3782 = vadd.f32 0.0, %v3781
  %v3783 = vpop.f32.mrb[0].mxu0
  %v3784 = vadd.f32 0.0, %v3783
  %v3785 = vpop.f32.mrb[0].mxu0
  %v3786 = vadd.f32 0.0, %v3785
  %v3787 = vpop.f32.mrb[0].mxu0
  %v3788 = vadd.f32 0.0, %v3787
  %3789 = vmatprep.mubr.bf16.mxu0 0
  %3790 = vmatmul.mubr.bf16.gmra.mrb[0].mxu0 %v3245
  %v3791 = vpop.f32.mrb[0].mxu0
  %v3792 = vadd.f32 0.0, %v3791
  %v3793 = vpop.f32.mrb[0].mxu0
  %v3794 = vadd.f32 0.0, %v3793
  %v3795 = vpop.f32.mrb[0].mxu0
  %v3796 = vadd.f32 0.0, %v3795
  %v3797 = vpop.f32.mrb[0].mxu0
  %v3798 = vadd.f32 0.0, %v3797
  %3799 = vmatprep.mubr.bf16.mxu0 0
  %3800 = vmatmul.mubr.bf16.gmra.mrb[0].mxu0 %v3246
  %v3801 = vpop.f32.mrb[0].mxu0
  %v3802 = vadd.f32 0.0, %v3801
  %v3803 = vpop.f32.mrb[0].mxu0
  %v3804 = vadd.f32 0.0, %v3803
  %v3805 = vpop.f32.mrb[0].mxu0
  %v3806 = vadd.f32 0.0, %v3805
  %v3807 = vpop.f32.mrb[0].mxu0
  %v3808 = vadd.f32 0.0, %v3807
  %3809 = vmatprep.mubr.bf16.mxu0 0
  %3810 = vmatmul.mubr.bf16.gmra.mrb[0].mxu0 %v3247
  %v3811 = vpop.f32.mrb[0].mxu0
  %v3812 = vadd.f32 0.0, %v3811
  %v3813 = vpop.f32.mrb[0].mxu0
  %v3814 = vadd.f32 0.0, %v3813
  %v3815 = vpop.f32.mrb[0].mxu0
  %v3816 = vadd.f32 0.0, %v3815
  %v3817 = vpop.f32.mrb[0].mxu0
  %v3818 = vadd.f32 0.0, %v3817
  %3819 = vmatprep.mubr.bf16.mxu0 0
  %3820 = vmatmul.mubr.bf16.gmra.mrb[0].mxu0 %v3248
  %v3821 = vpop.f32.mrb[0].mxu0
  %v3822 = vadd.f32 0.0, %v3821
  %v3823 = vpop.f32.mrb[0].mxu0
  %v3824 = vadd.f32 0.0, %v3823
  %v3825 = vpop.f32.mrb[0].mxu0
  %v3826 = vadd.f32 0.0, %v3825
  %v3827 = vpop.f32.mrb[0].mxu0
  %v3828 = vadd.f32 0.0, %v3827
  %3829 = vmatprep.mubr.bf16.mxu0 0
  %3830 = vmatmul.mubr.bf16.gmra.mrb[0].mxu0 %v3249
  %v3831 = vpop.f32.mrb[0].mxu0
  %v3832 = vadd.f32 0.0, %v3831
  %v3833 = vpop.f32.mrb[0].mxu0
  %v3834 = vadd.f32 0.0, %v3833
  %v3835 = vpop.f32.mrb[0].mxu0
  %v3836 = vadd.f32 0.0, %v3835
  %v3837 = vpop.f32.mrb[0].mxu0
  %v3838 = vadd.f32 0.0, %v3837
  %3839 = vmatprep.mubr.bf16.mxu0 0
  %3840 = vmatmul.mubr.bf16.gmra.mrb[0].mxu0 %v3250
  %v3841 = vpop.f32.mrb[0].mxu0
  %v3842 = vadd.f32 0.0, %v3841
  %v3843 = vpop.f32.mrb[0].mxu0
  %v3844 = vadd.f32 0.0, %v3843
  %v3845 = vpop.f32.mrb[0].mxu0
  %v3846 = vadd.f32 0.0, %v3845
  %v3847 = vpop.f32.mrb[0].mxu0
  %v3848 = vadd.f32 0.0, %v3847
  %3849 = vmatprep.mubr.bf16.mxu0 0
  %3850 = vmatmul.mubr.bf16.gmra.mrb[0].mxu0 %v3251
  %v3851 = vpop.f32.mrb[0].mxu0
  %v3852 = vadd.f32 0.0, %v3851
  %v3853 = vpop.f32.mrb[0].mxu0
  %v3854 = vadd.f32 0.0, %v3853
  %v3855 = vpop.f32.mrb[0].mxu0
  %v3856 = vadd.f32 0.0, %v3855
  %v3857 = vpop.f32.mrb[0].mxu0
  %v3858 = vadd.f32 0.0, %v3857
  %3859 = vdwg.mxu0
  %3860 = vmatprep.subr.bf16.mxu0 %v3563
  %3861 = vmatpush1.bf16.msra.mxu0 %v3562
  %3862 = vmatprep.subr.bf16.mxu0 %v3565
  %3863 = vmatpush1.bf16.msra.mxu0 %v3564
  %3864 = vmatprep.subr.bf16.mxu0 %v3567
  %3865 = vmatpush1.bf16.msra.mxu0 %v3566
  %3866 = vmatprep.subr.bf16.mxu0 %v3569
  %3867 = vmatpush1.bf16.msra.mxu0 %v3568
  %3868 = vmatprep.subr.bf16.mxu0 %v3571
  %3869 = vmatpush1.bf16.msra.mxu0 %v3570
  %3870 = vmatprep.subr.bf16.mxu0 %v3573
  %3871 = vmatpush1.bf16.msra.mxu0 %v3572
  %3872 = vmatprep.subr.bf16.mxu0 %v3575
  %3873 = vmatpush1.bf16.msra.mxu0 %v3574
  %3874 = vmatprep.subr.bf16.mxu0 %v3577
  %3875 = vmatpush1.bf16.msra.mxu0 %v3576
  %3876 = vmatprep.subr.bf16.mxu0 0
  %3877 = vmatpush1.bf16.msra.mxu0 0
  %3878 = vmatprep.subr.bf16.mxu0 0
  %3879 = vmatpush1.bf16.msra.mxu0 0
  %3880 = vmatprep.subr.bf16.mxu0 0
  %3881 = vmatpush1.bf16.msra.mxu0 0
  %3882 = vmatprep.subr.bf16.mxu0 0
  %3883 = vmatpush1.bf16.msra.mxu0 0
  %3884 = vmatprep.subr.bf16.mxu0 0
  %3885 = vmatpush1.bf16.msra.mxu0 0
  %3886 = vmatprep.subr.bf16.mxu0 0
  %3887 = vmatpush1.bf16.msra.mxu0 0
  %3888 = vmatprep.subr.bf16.mxu0 0
  %3889 = vmatpush1.bf16.msra.mxu0 0
  %3890 = vmatprep.subr.bf16.mxu0 0
  %3891 = vmatpush1.bf16.msra.mxu0 0
  %3892 = vmatprep.mubr.bf16.mxu0 0
  %3893 = vmatmul.mubr.bf16.gmra.mrb[0].mxu0 %v3254
  %v3894 = vpop.f32.mrb[0].mxu0
  %v3895 = vadd.f32 %v3762, %v3894
  %v3896 = vpop.f32.mrb[0].mxu0
  %v3897 = vadd.f32 %v3764, %v3896
  %v3898 = vpop.f32.mrb[0].mxu0
  %v3899 = vadd.f32 %v3766, %v3898
  %v3900 = vpop.f32.mrb[0].mxu0
  %v3901 = vadd.f32 %v3768, %v3900
  %3902 = vmatprep.mubr.bf16.mxu0 0
  %3903 = vmatmul.mubr.bf16.gmra.mrb[0].mxu0 %v3255
  %v3904 = vpop.f32.mrb[0].mxu0
  %v3905 = vadd.f32 %v3772, %v3904
  %v3906 = vpop.f32.mrb[0].mxu0
  %v3907 = vadd.f32 %v3774, %v3906
  %v3908 = vpop.f32.mrb[0].mxu0
  %v3909 = vadd.f32 %v3776, %v3908
  %v3910 = vpop.f32.mrb[0].mxu0
  %v3911 = vadd.f32 %v3778, %v3910
  %3912 = vmatprep.mubr.bf16.mxu0 0
  %3913 = vmatmul.mubr.bf16.gmra.mrb[0].mxu0 %v3256
  %v3914 = vpop.f32.mrb[0].mxu0
  %v3915 = vadd.f32 %v3782, %v3914
  %v3916 = vpop.f32.mrb[0].mxu0
  %v3917 = vadd.f32 %v3784, %v3916
  %v3918 = vpop.f32.mrb[0].mxu0
  %v3919 = vadd.f32 %v3786, %v3918
  %v3920 = vpop.f32.mrb[0].mxu0
  %v3921 = vadd.f32 %v3788, %v3920
  %3922 = vmatprep.mubr.bf16.mxu0 0
  %3923 = vmatmul.mubr.bf16.gmra.mrb[0].mxu0 %v3257
  %v3924 = vpop.f32.mrb[0].mxu0
  %v3925 = vadd.f32 %v3792, %v3924
  %v3926 = vpop.f32.mrb[0].mxu0
  %v3927 = vadd.f32 %v3794, %v3926
  %v3928 = vpop.f32.mrb[0].mxu0
  %v3929 = vadd.f32 %v3796, %v3928
  %v3930 = vpop.f32.mrb[0].mxu0
  %v3931 = vadd.f32 %v3798, %v3930
  %3932 = vmatprep.mubr.bf16.mxu0 0
  %3933 = vmatmul.mubr.bf16.gmra.mrb[0].mxu0 %v3258
  %v3934 = vpop.f32.mrb[0].mxu0
  %v3935 = vadd.f32 %v3802, %v3934
  %v3936 = vpop.f32.mrb[0].mxu0
  %v3937 = vadd.f32 %v3804, %v3936
  %v3938 = vpop.f32.mrb[0].mxu0
  %v3939 = vadd.f32 %v3806, %v3938
  %v3940 = vpop.f32.mrb[0].mxu0
  %v3941 = vadd.f32 %v3808, %v3940
  %3942 = vmatprep.mubr.bf16.mxu0 0
  %3943 = vmatmul.mubr.bf16.gmra.mrb[0].mxu0 %v3259
  %v3944 = vpop.f32.mrb[0].mxu0
  %v3945 = vadd.f32 %v3812, %v3944
  %v3946 = vpop.f32.mrb[0].mxu0
  %v3947 = vadd.f32 %v3814, %v3946
  %v3948 = vpop.f32.mrb[0].mxu0
  %v3949 = vadd.f32 %v3816, %v3948
  %v3950 = vpop.f32.mrb[0].mxu0
  %v3951 = vadd.f32 %v3818, %v3950
  %3952 = vmatprep.mubr.bf16.mxu0 0
  %3953 = vmatmul.mubr.bf16.gmra.mrb[0].mxu0 %v3260
  %v3954 = vpop.f32.mrb[0].mxu0
  %v3955 = vadd.f32 %v3822, %v3954
  %v3956 = vpop.f32.mrb[0].mxu0
  %v3957 = vadd.f32 %v3824, %v3956
  %v3958 = vpop.f32.mrb[0].mxu0
  %v3959 = vadd.f32 %v3826, %v3958
  %v3960 = vpop.f32.mrb[0].mxu0
  %v3961 = vadd.f32 %v3828, %v3960
  %3962 = vmatprep.mubr.bf16.mxu0 0
  %3963 = vmatmul.mubr.bf16.gmra.mrb[0].mxu0 %v3261
  %v3964 = vpop.f32.mrb[0].mxu0
  %v3965 = vadd.f32 %v3832, %v3964
  %v3966 = vpop.f32.mrb[0].mxu0
  %v3967 = vadd.f32 %v3834, %v3966
  %v3968 = vpop.f32.mrb[0].mxu0
  %v3969 = vadd.f32 %v3836, %v3968
  %v3970 = vpop.f32.mrb[0].mxu0
  %v3971 = vadd.f32 %v3838, %v3970
  %3972 = vmatprep.mubr.bf16.mxu0 0
  %3973 = vmatmul.mubr.bf16.gmra.mrb[0].mxu0 %v3262
  %v3974 = vpop.f32.mrb[0].mxu0
  %v3975 = vadd.f32 %v3842, %v3974
  %v3976 = vpop.f32.mrb[0].mxu0
  %v3977 = vadd.f32 %v3844, %v3976
  %v3978 = vpop.f32.mrb[0].mxu0
  %v3979 = vadd.f32 %v3846, %v3978
  %v3980 = vpop.f32.mrb[0].mxu0
  %v3981 = vadd.f32 %v3848, %v3980
  %3982 = vmatprep.mubr.bf16.mxu0 0
  %3983 = vmatmul.mubr.bf16.gmra.mrb[0].mxu0 %v3263
  %v3984 = vpop.f32.mrb[0].mxu0
  %v3985 = vadd.f32 %v3852, %v3984
  %v3986 = vpop.f32.mrb[0].mxu0
  %v3987 = vadd.f32 %v3854, %v3986
  %v3988 = vpop.f32.mrb[0].mxu0
  %v3989 = vadd.f32 %v3856, %v3988
  %v3990 = vpop.f32.mrb[0].mxu0
  %v3991 = vadd.f32 %v3858, %v3990
  %3992 = vdwg.mxu0
  %s3993 = scalar_lea.vmem %s3, 256
  %v3994 = vld [vmem:[%s3993] sm:$0xff]
  %v3995 = vld [vmem:[%s3993 + $0x8] sm:$0xff]
  %v3996 = vld [vmem:[%s3993 + $0x10] sm:$0xff]
  %v3997 = vld [vmem:[%s3993 + $0x18] sm:$0xff]
  %v3998 = vld [vmem:[%s3993 + $0x20] sm:$0xff]
  %v3999 = vld [vmem:[%s3993 + $0x28] sm:$0xff]
  %v4000 = vld [vmem:[%s3993 + $0x30] sm:$0xff]
  %v4001 = vld [vmem:[%s3993 + $0x38] sm:$0xff]
  %v4002 = vld [vmem:[%s3993 + $0x40] sm:$0xff]
  %v4003 = vld [vmem:[%s3993 + $0x48] sm:$0xff]
  %v4004 = vld [vmem:[%s3993 + $0x50] sm:$0xff]
  %v4005 = vld [vmem:[%s3993 + $0x58] sm:$0xff]
  %v4006 = vld [vmem:[%s3993 + $0x60] sm:$0xff]
  %v4007 = vld [vmem:[%s3993 + $0x68] sm:$0xff]
  %v4008 = vld [vmem:[%s3993 + $0x70] sm:$0xff]
  %v4009 = vld [vmem:[%s3993 + $0x78] sm:$0xff]
  %v4026 = vunpack.c.l.b16 %v3994
  %v4027 = vunpack.c.h.b16 %v3994
  %v4028 = vunpack.c.l.b16 %v3995
  %v4029 = vunpack.c.h.b16 %v3995
  %v4030 = vunpack.c.l.b16 %v3996
  %v4031 = vunpack.c.h.b16 %v3996
  %v4032 = vunpack.c.l.b16 %v3997
  %v4033 = vunpack.c.h.b16 %v3997
  %v4034 = vunpack.c.l.b16 %v3998
  %v4035 = vunpack.c.h.b16 %v3998
  %v4036 = vunpack.c.l.b16 %v3999
  %v4037 = vunpack.c.h.b16 %v3999
  %v4038 = vunpack.c.l.b16 %v4000
  %v4039 = vunpack.c.h.b16 %v4000
  %v4040 = vunpack.c.l.b16 %v4001
  %v4041 = vunpack.c.h.b16 %v4001
  %v4042 = vunpack.c.l.b16 %v4002
  %v4043 = vunpack.c.h.b16 %v4002
  %v4044 = vunpack.c.l.b16 %v4003
  %v4045 = vunpack.c.h.b16 %v4003
  %v4046 = vunpack.c.l.b16 %v4004
  %v4047 = vunpack.c.h.b16 %v4004
  %v4048 = vunpack.c.l.b16 %v4005
  %v4049 = vunpack.c.h.b16 %v4005
  %v4050 = vunpack.c.l.b16 %v4006
  %v4051 = vunpack.c.h.b16 %v4006
  %v4052 = vunpack.c.l.b16 %v4007
  %v4053 = vunpack.c.h.b16 %v4007
  %v4054 = vunpack.c.l.b16 %v4008
  %v4055 = vunpack.c.h.b16 %v4008
  %v4056 = vunpack.c.l.b16 %v4009
  %v4057 = vunpack.c.h.b16 %v4009
  %v4058 = vpack.c.b16 %v4028, %v4026
  %v4059 = vpack.c.b16 %v4029, %v4027
  %v4060 = vpack.c.b16 %v4032, %v4030
  %v4061 = vpack.c.b16 %v4033, %v4031
  %v4062 = vpack.c.b16 %v4036, %v4034
  %v4063 = vpack.c.b16 %v4037, %v4035
  %v4064 = vpack.c.b16 %v4040, %v4038
  %v4065 = vpack.c.b16 %v4041, %v4039
  %v4066 = vpack.c.b16 %v4044, %v4042
  %v4067 = vpack.c.b16 %v4045, %v4043
  %v4068 = vpack.c.b16 %v4048, %v4046
  %v4069 = vpack.c.b16 %v4049, %v4047
  %v4070 = vpack.c.b16 %v4052, %v4050
  %v4071 = vpack.c.b16 %v4053, %v4051
  %v4072 = vpack.c.b16 %v4056, %v4054
  %v4073 = vpack.c.b16 %v4057, %v4055
  %4090 = vmatprep.subr.bf16.mxu0 %v4059
  %4091 = vmatpush1.bf16.msra.mxu0 %v4058
  %4092 = vmatprep.subr.bf16.mxu0 %v4061
  %4093 = vmatpush1.bf16.msra.mxu0 %v4060
  %4094 = vmatprep.subr.bf16.mxu0 %v4063
  %4095 = vmatpush1.bf16.msra.mxu0 %v4062
  %4096 = vmatprep.subr.bf16.mxu0 %v4065
  %4097 = vmatpush1.bf16.msra.mxu0 %v4064
  %4098 = vmatprep.subr.bf16.mxu0 %v4067
  %4099 = vmatpush1.bf16.msra.mxu0 %v4066
  %4100 = vmatprep.subr.bf16.mxu0 %v4069
  %4101 = vmatpush1.bf16.msra.mxu0 %v4068
  %4102 = vmatprep.subr.bf16.mxu0 %v4071
  %4103 = vmatpush1.bf16.msra.mxu0 %v4070
  %4104 = vmatprep.subr.bf16.mxu0 %v4073
  %4105 = vmatpush1.bf16.msra.mxu0 %v4072
  %4106 = vmatprep.subr.bf16.mxu0 0
  %4107 = vmatpush1.bf16.msra.mxu0 0
  %4108 = vmatprep.subr.bf16.mxu0 0
  %4109 = vmatpush1.bf16.msra.mxu0 0
  %4110 = vmatprep.subr.bf16.mxu0 0
  %4111 = vmatpush1.bf16.msra.mxu0 0
  %4112 = vmatprep.subr.bf16.mxu0 0
  %4113 = vmatpush1.bf16.msra.mxu0 0
  %4114 = vmatprep.subr.bf16.mxu0 0
  %4115 = vmatpush1.bf16.msra.mxu0 0
  %4116 = vmatprep.subr.bf16.mxu0 0
  %4117 = vmatpush1.bf16.msra.mxu0 0
  %4118 = vmatprep.subr.bf16.mxu0 0
  %4119 = vmatpush1.bf16.msra.mxu0 0
  %4120 = vmatprep.subr.bf16.mxu0 0
  %4121 = vmatpush1.bf16.msra.mxu0 0
  %4122 = vmatprep.mubr.bf16.mxu0 0
  %4123 = vmatmul.mubr.bf16.gmra.mrb[0].mxu0 %v3242
  %v4124 = vpop.f32.mrb[0].mxu0
  %v4125 = vadd.f32 0.0, %v4124
  %v4126 = vpop.f32.mrb[0].mxu0
  %v4127 = vadd.f32 0.0, %v4126
  %v4128 = vpop.f32.mrb[0].mxu0
  %v4129 = vadd.f32 0.0, %v4128
  %v4130 = vpop.f32.mrb[0].mxu0
  %v4131 = vadd.f32 0.0, %v4130
  %4132 = vmatprep.mubr.bf16.mxu0 0
  %4133 = vmatmul.mubr.bf16.gmra.mrb[0].mxu0 %v3243
  %v4134 = vpop.f32.mrb[0].mxu0
  %v4135 = vadd.f32 0.0, %v4134
  %v4136 = vpop.f32.mrb[0].mxu0
  %v4137 = vadd.f32 0.0, %v4136
  %v4138 = vpop.f32.mrb[0].mxu0
  %v4139 = vadd.f32 0.0, %v4138
  %v4140 = vpop.f32.mrb[0].mxu0
  %v4141 = vadd.f32 0.0, %v4140
  %4142 = vmatprep.mubr.bf16.mxu0 0
  %4143 = vmatmul.mubr.bf16.gmra.mrb[0].mxu0 %v3244
  %v4144 = vpop.f32.mrb[0].mxu0
  %v4145 = vadd.f32 0.0, %v4144
  %v4146 = vpop.f32.mrb[0].mxu0
  %v4147 = vadd.f32 0.0, %v4146
  %v4148 = vpop.f32.mrb[0].mxu0
  %v4149 = vadd.f32 0.0, %v4148
  %v4150 = vpop.f32.mrb[0].mxu0
  %v4151 = vadd.f32 0.0, %v4150
  %4152 = vmatprep.mubr.bf16.mxu0 0
  %4153 = vmatmul.mubr.bf16.gmra.mrb[0].mxu0 %v3245
  %v4154 = vpop.f32.mrb[0].mxu0
  %v4155 = vadd.f32 0.0, %v4154
  %v4156 = vpop.f32.mrb[0].mxu0
  %v4157 = vadd.f32 0.0, %v4156
  %v4158 = vpop.f32.mrb[0].mxu0
  %v4159 = vadd.f32 0.0, %v4158
  %v4160 = vpop.f32.mrb[0].mxu0
  %v4161 = vadd.f32 0.0, %v4160
  %4162 = vmatprep.mubr.bf16.mxu0 0
  %4163 = vmatmul.mubr.bf16.gmra.mrb[0].mxu0 %v3246
  %v4164 = vpop.f32.mrb[0].mxu0
  %v4165 = vadd.f32 0.0, %v4164
  %v4166 = vpop.f32.mrb[0].mxu0
  %v4167 = vadd.f32 0.0, %v4166
  %v4168 = vpop.f32.mrb[0].mxu0
  %v4169 = vadd.f32 0.0, %v4168
  %v4170 = vpop.f32.mrb[0].mxu0
  %v4171 = vadd.f32 0.0, %v4170
  %4172 = vmatprep.mubr.bf16.mxu0 0
  %4173 = vmatmul.mubr.bf16.gmra.mrb[0].mxu0 %v3247
  %v4174 = vpop.f32.mrb[0].mxu0
  %v4175 = vadd.f32 0.0, %v4174
  %v4176 = vpop.f32.mrb[0].mxu0
  %v4177 = vadd.f32 0.0, %v4176
  %v4178 = vpop.f32.mrb[0].mxu0
  %v4179 = vadd.f32 0.0, %v4178
  %v4180 = vpop.f32.mrb[0].mxu0
  %v4181 = vadd.f32 0.0, %v4180
  %4182 = vmatprep.mubr.bf16.mxu0 0
  %4183 = vmatmul.mubr.bf16.gmra.mrb[0].mxu0 %v3248
  %v4184 = vpop.f32.mrb[0].mxu0
  %v4185 = vadd.f32 0.0, %v4184
  %v4186 = vpop.f32.mrb[0].mxu0
  %v4187 = vadd.f32 0.0, %v4186
  %v4188 = vpop.f32.mrb[0].mxu0
  %v4189 = vadd.f32 0.0, %v4188
  %v4190 = vpop.f32.mrb[0].mxu0
  %v4191 = vadd.f32 0.0, %v4190
  %4192 = vmatprep.mubr.bf16.mxu0 0
  %4193 = vmatmul.mubr.bf16.gmra.mrb[0].mxu0 %v3249
  %v4194 = vpop.f32.mrb[0].mxu0
  %v4195 = vadd.f32 0.0, %v4194
  %v4196 = vpop.f32.mrb[0].mxu0
  %v4197 = vadd.f32 0.0, %v4196
  %v4198 = vpop.f32.mrb[0].mxu0
  %v4199 = vadd.f32 0.0, %v4198
  %v4200 = vpop.f32.mrb[0].mxu0
  %v4201 = vadd.f32 0.0, %v4200
  %4202 = vmatprep.mubr.bf16.mxu0 0
  %4203 = vmatmul.mubr.bf16.gmra.mrb[0].mxu0 %v3250
  %v4204 = vpop.f32.mrb[0].mxu0
  %v4205 = vadd.f32 0.0, %v4204
  %v4206 = vpop.f32.mrb[0].mxu0
  %v4207 = vadd.f32 0.0, %v4206
  %v4208 = vpop.f32.mrb[0].mxu0
  %v4209 = vadd.f32 0.0, %v4208
  %v4210 = vpop.f32.mrb[0].mxu0
  %v4211 = vadd.f32 0.0, %v4210
  %4212 = vmatprep.mubr.bf16.mxu0 0
  %4213 = vmatmul.mubr.bf16.gmra.mrb[0].mxu0 %v3251
  %v4214 = vpop.f32.mrb[0].mxu0
  %v4215 = vadd.f32 0.0, %v4214
  %v4216 = vpop.f32.mrb[0].mxu0
  %v4217 = vadd.f32 0.0, %v4216
  %v4218 = vpop.f32.mrb[0].mxu0
  %v4219 = vadd.f32 0.0, %v4218
  %v4220 = vpop.f32.mrb[0].mxu0
  %v4221 = vadd.f32 0.0, %v4220
  %4222 = vdwg.mxu0
  %v4223 = vadd.f32 %v3629, %v4125
  %v4224 = vadd.f32 %v3631, %v4127
  %v4225 = vadd.f32 %v3633, %v4129
  %v4226 = vadd.f32 %v3635, %v4131
  %v4227 = vadd.f32 %v3639, %v4135
  %v4228 = vadd.f32 %v3641, %v4137
  %v4229 = vadd.f32 %v3643, %v4139
  %v4230 = vadd.f32 %v3645, %v4141
  %v4231 = vadd.f32 %v3649, %v4145
  %v4232 = vadd.f32 %v3651, %v4147
  %v4233 = vadd.f32 %v3653, %v4149
  %v4234 = vadd.f32 %v3655, %v4151
  %v4235 = vadd.f32 %v3659, %v4155
  %v4236 = vadd.f32 %v3661, %v4157
  %v4237 = vadd.f32 %v3663, %v4159
  %v4238 = vadd.f32 %v3665, %v4161
  %v4239 = vadd.f32 %v3669, %v4165
  %v4240 = vadd.f32 %v3671, %v4167
  %v4241 = vadd.f32 %v3673, %v4169
  %v4242 = vadd.f32 %v3675, %v4171
  %v4243 = vadd.f32 %v3679, %v4175
  %v4244 = vadd.f32 %v3681, %v4177
  %v4245 = vadd.f32 %v3683, %v4179
  %v4246 = vadd.f32 %v3685, %v4181
  %v4247 = vadd.f32 %v3689, %v4185
  %v4248 = vadd.f32 %v3691, %v4187
  %v4249 = vadd.f32 %v3693, %v4189
  %v4250 = vadd.f32 %v3695, %v4191
  %v4251 = vadd.f32 %v3699, %v4195
  %v4252 = vadd.f32 %v3701, %v4197
  %v4253 = vadd.f32 %v3703, %v4199
  %v4254 = vadd.f32 %v3705, %v4201
  %v4255 = vadd.f32 %v3709, %v4205
  %v4256 = vadd.f32 %v3711, %v4207
  %v4257 = vadd.f32 %v3713, %v4209
  %v4258 = vadd.f32 %v3715, %v4211
  %v4259 = vadd.f32 %v3719, %v4215
  %v4260 = vadd.f32 %v3721, %v4217
  %v4261 = vadd.f32 %v3723, %v4219
  %v4262 = vadd.f32 %v3725, %v4221
  %4263 = vmatprep.subr.bf16.mxu0 %v4059
  %4264 = vmatpush1.bf16.msra.mxu0 %v4058
  %4265 = vmatprep.subr.bf16.mxu0 %v4061
  %4266 = vmatpush1.bf16.msra.mxu0 %v4060
  %4267 = vmatprep.subr.bf16.mxu0 %v4063
  %4268 = vmatpush1.bf16.msra.mxu0 %v4062
  %4269 = vmatprep.subr.bf16.mxu0 %v4065
  %4270 = vmatpush1.bf16.msra.mxu0 %v4064
  %4271 = vmatprep.subr.bf16.mxu0 %v4067
  %4272 = vmatpush1.bf16.msra.mxu0 %v4066
  %4273 = vmatprep.subr.bf16.mxu0 %v4069
  %4274 = vmatpush1.bf16.msra.mxu0 %v4068
  %4275 = vmatprep.subr.bf16.mxu0 %v4071
  %4276 = vmatpush1.bf16.msra.mxu0 %v4070
  %4277 = vmatprep.subr.bf16.mxu0 %v4073
  %4278 = vmatpush1.bf16.msra.mxu0 %v4072
  %4279 = vmatprep.subr.bf16.mxu0 0
  %4280 = vmatpush1.bf16.msra.mxu0 0
  %4281 = vmatprep.subr.bf16.mxu0 0
  %4282 = vmatpush1.bf16.msra.mxu0 0
  %4283 = vmatprep.subr.bf16.mxu0 0
  %4284 = vmatpush1.bf16.msra.mxu0 0
  %4285 = vmatprep.subr.bf16.mxu0 0
  %4286 = vmatpush1.bf16.msra.mxu0 0
  %4287 = vmatprep.subr.bf16.mxu0 0
  %4288 = vmatpush1.bf16.msra.mxu0 0
  %4289 = vmatprep.subr.bf16.mxu0 0
  %4290 = vmatpush1.bf16.msra.mxu0 0
  %4291 = vmatprep.subr.bf16.mxu0 0
  %4292 = vmatpush1.bf16.msra.mxu0 0
  %4293 = vmatprep.subr.bf16.mxu0 0
  %4294 = vmatpush1.bf16.msra.mxu0 0
  %4295 = vmatprep.mubr.bf16.mxu0 0
  %4296 = vmatmul.mubr.bf16.gmra.mrb[0].mxu0 %v3256
  %v4297 = vpop.f32.mrb[0].mxu0
  %v4298 = vadd.f32 0.0, %v4297
  %v4299 = vpop.f32.mrb[0].mxu0
  %v4300 = vadd.f32 0.0, %v4299
  %v4301 = vpop.f32.mrb[0].mxu0
  %v4302 = vadd.f32 0.0, %v4301
  %v4303 = vpop.f32.mrb[0].mxu0
  %v4304 = vadd.f32 0.0, %v4303
  %4305 = vmatprep.mubr.bf16.mxu0 0
  %4306 = vmatmul.mubr.bf16.gmra.mrb[0].mxu0 %v3257
  %v4307 = vpop.f32.mrb[0].mxu0
  %v4308 = vadd.f32 0.0, %v4307
  %v4309 = vpop.f32.mrb[0].mxu0
  %v4310 = vadd.f32 0.0, %v4309
  %v4311 = vpop.f32.mrb[0].mxu0
  %v4312 = vadd.f32 0.0, %v4311
  %v4313 = vpop.f32.mrb[0].mxu0
  %v4314 = vadd.f32 0.0, %v4313
  %4315 = vmatprep.mubr.bf16.mxu0 0
  %4316 = vmatmul.mubr.bf16.gmra.mrb[0].mxu0 %v3258
  %v4317 = vpop.f32.mrb[0].mxu0
  %v4318 = vadd.f32 0.0, %v4317
  %v4319 = vpop.f32.mrb[0].mxu0
  %v4320 = vadd.f32 0.0, %v4319
  %v4321 = vpop.f32.mrb[0].mxu0
  %v4322 = vadd.f32 0.0, %v4321
  %v4323 = vpop.f32.mrb[0].mxu0
  %v4324 = vadd.f32 0.0, %v4323
  %4325 = vmatprep.mubr.bf16.mxu0 0
  %4326 = vmatmul.mubr.bf16.gmra.mrb[0].mxu0 %v3259
  %v4327 = vpop.f32.mrb[0].mxu0
  %v4328 = vadd.f32 0.0, %v4327
  %v4329 = vpop.f32.mrb[0].mxu0
  %v4330 = vadd.f32 0.0, %v4329
  %v4331 = vpop.f32.mrb[0].mxu0
  %v4332 = vadd.f32 0.0, %v4331
  %v4333 = vpop.f32.mrb[0].mxu0
  %v4334 = vadd.f32 0.0, %v4333
  %4335 = vmatprep.mubr.bf16.mxu0 0
  %4336 = vmatmul.mubr.bf16.gmra.mrb[0].mxu0 %v3260
  %v4337 = vpop.f32.mrb[0].mxu0
  %v4338 = vadd.f32 0.0, %v4337
  %v4339 = vpop.f32.mrb[0].mxu0
  %v4340 = vadd.f32 0.0, %v4339
  %v4341 = vpop.f32.mrb[0].mxu0
  %v4342 = vadd.f32 0.0, %v4341
  %v4343 = vpop.f32.mrb[0].mxu0
  %v4344 = vadd.f32 0.0, %v4343
  %4345 = vmatprep.mubr.bf16.mxu0 0
  %4346 = vmatmul.mubr.bf16.gmra.mrb[0].mxu0 %v3261
  %v4347 = vpop.f32.mrb[0].mxu0
  %v4348 = vadd.f32 0.0, %v4347
  %v4349 = vpop.f32.mrb[0].mxu0
  %v4350 = vadd.f32 0.0, %v4349
  %v4351 = vpop.f32.mrb[0].mxu0
  %v4352 = vadd.f32 0.0, %v4351
  %v4353 = vpop.f32.mrb[0].mxu0
  %v4354 = vadd.f32 0.0, %v4353
  %4355 = vmatprep.mubr.bf16.mxu0 0
  %4356 = vmatmul.mubr.bf16.gmra.mrb[0].mxu0 %v3262
  %v4357 = vpop.f32.mrb[0].mxu0
  %v4358 = vadd.f32 0.0, %v4357
  %v4359 = vpop.f32.mrb[0].mxu0
  %v4360 = vadd.f32 0.0, %v4359
  %v4361 = vpop.f32.mrb[0].mxu0
  %v4362 = vadd.f32 0.0, %v4361
  %v4363 = vpop.f32.mrb[0].mxu0
  %v4364 = vadd.f32 0.0, %v4363
  %4365 = vmatprep.mubr.bf16.mxu0 0
  %4366 = vmatmul.mubr.bf16.gmra.mrb[0].mxu0 %v3263
  %v4367 = vpop.f32.mrb[0].mxu0
  %v4368 = vadd.f32 0.0, %v4367
  %v4369 = vpop.f32.mrb[0].mxu0
  %v4370 = vadd.f32 0.0, %v4369
  %v4371 = vpop.f32.mrb[0].mxu0
  %v4372 = vadd.f32 0.0, %v4371
  %v4373 = vpop.f32.mrb[0].mxu0
  %v4374 = vadd.f32 0.0, %v4373
  %4375 = vmatprep.mubr.bf16.mxu0 0
  %4376 = vmatmul.mubr.bf16.gmra.mrb[0].mxu0 %v3264
  %v4377 = vpop.f32.mrb[0].mxu0
  %v4378 = vadd.f32 0.0, %v4377
  %v4379 = vpop.f32.mrb[0].mxu0
  %v4380 = vadd.f32 0.0, %v4379
  %v4381 = vpop.f32.mrb[0].mxu0
  %v4382 = vadd.f32 0.0, %v4381
  %v4383 = vpop.f32.mrb[0].mxu0
  %v4384 = vadd.f32 0.0, %v4383
  %4385 = vmatprep.mubr.bf16.mxu0 0
  %4386 = vmatmul.mubr.bf16.gmra.mrb[0].mxu0 %v3265
  %v4387 = vpop.f32.mrb[0].mxu0
  %v4388 = vadd.f32 0.0, %v4387
  %v4389 = vpop.f32.mrb[0].mxu0
  %v4390 = vadd.f32 0.0, %v4389
  %v4391 = vpop.f32.mrb[0].mxu0
  %v4392 = vadd.f32 0.0, %v4391
  %v4393 = vpop.f32.mrb[0].mxu0
  %v4394 = vadd.f32 0.0, %v4393
  %4395 = vdwg.mxu0
  %v4396 = vadd.f32 %v3895, %v4298
  %v4397 = vadd.f32 %v3897, %v4300
  %v4398 = vadd.f32 %v3899, %v4302
  %v4399 = vadd.f32 %v3901, %v4304
  %v4400 = vadd.f32 %v3905, %v4308
  %v4401 = vadd.f32 %v3907, %v4310
  %v4402 = vadd.f32 %v3909, %v4312
  %v4403 = vadd.f32 %v3911, %v4314
  %v4404 = vadd.f32 %v3915, %v4318
  %v4405 = vadd.f32 %v3917, %v4320
  %v4406 = vadd.f32 %v3919, %v4322
  %v4407 = vadd.f32 %v3921, %v4324
  %v4408 = vadd.f32 %v3925, %v4328
  %v4409 = vadd.f32 %v3927, %v4330
  %v4410 = vadd.f32 %v3929, %v4332
  %v4411 = vadd.f32 %v3931, %v4334
  %v4412 = vadd.f32 %v3935, %v4338
  %v4413 = vadd.f32 %v3937, %v4340
  %v4414 = vadd.f32 %v3939, %v4342
  %v4415 = vadd.f32 %v3941, %v4344
  %v4416 = vadd.f32 %v3945, %v4348
  %v4417 = vadd.f32 %v3947, %v4350
  %v4418 = vadd.f32 %v3949, %v4352
  %v4419 = vadd.f32 %v3951, %v4354
  %v4420 = vadd.f32 %v3955, %v4358
  %v4421 = vadd.f32 %v3957, %v4360
  %v4422 = vadd.f32 %v3959, %v4362
  %v4423 = vadd.f32 %v3961, %v4364
  %v4424 = vadd.f32 %v3965, %v4368
  %v4425 = vadd.f32 %v3967, %v4370
  %v4426 = vadd.f32 %v3969, %v4372
  %v4427 = vadd.f32 %v3971, %v4374
  %v4428 = vadd.f32 %v3975, %v4378
  %v4429 = vadd.f32 %v3977, %v4380
  %v4430 = vadd.f32 %v3979, %v4382
  %v4431 = vadd.f32 %v3981, %v4384
  %v4432 = vadd.f32 %v3985, %v4388
  %v4433 = vadd.f32 %v3987, %v4390
  %v4434 = vadd.f32 %v3989, %v4392
  %v4435 = vadd.f32 %v3991, %v4394
  %s4436 = scalar_lea.vmem %s3, 384
  %v4437 = vld [vmem:[%s4436] sm:$0xff]
  %v4438 = vld [vmem:[%s4436 + $0x8] sm:$0xff]
  %v4439 = vld [vmem:[%s4436 + $0x10] sm:$0xff]
  %v4440 = vld [vmem:[%s4436 + $0x18] sm:$0xff]
  %v4441 = vld [vmem:[%s4436 + $0x20] sm:$0xff]
  %v4442 = vld [vmem:[%s4436 + $0x28] sm:$0xff]
  %v4443 = vld [vmem:[%s4436 + $0x30] sm:$0xff]
  %v4444 = vld [vmem:[%s4436 + $0x38] sm:$0xff]
  %v4445 = vld [vmem:[%s4436 + $0x40] sm:$0xff]
  %v4446 = vld [vmem:[%s4436 + $0x48] sm:$0xff]
  %v4447 = vld [vmem:[%s4436 + $0x50] sm:$0xff]
  %v4448 = vld [vmem:[%s4436 + $0x58] sm:$0xff]
  %v4449 = vld [vmem:[%s4436 + $0x60] sm:$0xff]
  %v4450 = vld [vmem:[%s4436 + $0x68] sm:$0xff]
  %v4451 = vld [vmem:[%s4436 + $0x70] sm:$0xff]
  %v4452 = vld [vmem:[%s4436 + $0x78] sm:$0xff]
  %v4469 = vunpack.c.l.b16 %v4437
  %v4470 = vunpack.c.h.b16 %v4437
  %v4471 = vunpack.c.l.b16 %v4438
  %v4472 = vunpack.c.h.b16 %v4438
  %v4473 = vunpack.c.l.b16 %v4439
  %v4474 = vunpack.c.h.b16 %v4439
  %v4475 = vunpack.c.l.b16 %v4440
  %v4476 = vunpack.c.h.b16 %v4440
  %v4477 = vunpack.c.l.b16 %v4441
  %v4478 = vunpack.c.h.b16 %v4441
  %v4479 = vunpack.c.l.b16 %v4442
  %v4480 = vunpack.c.h.b16 %v4442
  %v4481 = vunpack.c.l.b16 %v4443
  %v4482 = vunpack.c.h.b16 %v4443
  %v4483 = vunpack.c.l.b16 %v4444
  %v4484 = vunpack.c.h.b16 %v4444
  %v4485 = vunpack.c.l.b16 %v4445
  %v4486 = vunpack.c.h.b16 %v4445
  %v4487 = vunpack.c.l.b16 %v4446
  %v4488 = vunpack.c.h.b16 %v4446
  %v4489 = vunpack.c.l.b16 %v4447
  %v4490 = vunpack.c.h.b16 %v4447
  %v4491 = vunpack.c.l.b16 %v4448
  %v4492 = vunpack.c.h.b16 %v4448
  %v4493 = vunpack.c.l.b16 %v4449
  %v4494 = vunpack.c.h.b16 %v4449
  %v4495 = vunpack.c.l.b16 %v4450
  %v4496 = vunpack.c.h.b16 %v4450
  %v4497 = vunpack.c.l.b16 %v4451
  %v4498 = vunpack.c.h.b16 %v4451
  %v4499 = vunpack.c.l.b16 %v4452
  %v4500 = vunpack.c.h.b16 %v4452
  %v4501 = vpack.c.b16 %v4471, %v4469
  %v4502 = vpack.c.b16 %v4472, %v4470
  %v4503 = vpack.c.b16 %v4475, %v4473
  %v4504 = vpack.c.b16 %v4476, %v4474
  %v4505 = vpack.c.b16 %v4479, %v4477
  %v4506 = vpack.c.b16 %v4480, %v4478
  %v4507 = vpack.c.b16 %v4483, %v4481
  %v4508 = vpack.c.b16 %v4484, %v4482
  %v4509 = vpack.c.b16 %v4487, %v4485
  %v4510 = vpack.c.b16 %v4488, %v4486
  %v4511 = vpack.c.b16 %v4491, %v4489
  %v4512 = vpack.c.b16 %v4492, %v4490
  %v4513 = vpack.c.b16 %v4495, %v4493
  %v4514 = vpack.c.b16 %v4496, %v4494
  %v4515 = vpack.c.b16 %v4499, %v4497
  %v4516 = vpack.c.b16 %v4500, %v4498
  %4533 = vmatprep.subr.bf16.mxu0 %v4502
  %4534 = vmatpush1.bf16.msra.mxu0 %v4501
  %4535 = vmatprep.subr.bf16.mxu0 %v4504
  %4536 = vmatpush1.bf16.msra.mxu0 %v4503
  %4537 = vmatprep.subr.bf16.mxu0 %v4506
  %4538 = vmatpush1.bf16.msra.mxu0 %v4505
  %4539 = vmatprep.subr.bf16.mxu0 %v4508
  %4540 = vmatpush1.bf16.msra.mxu0 %v4507
  %4541 = vmatprep.subr.bf16.mxu0 %v4510
  %4542 = vmatpush1.bf16.msra.mxu0 %v4509
  %4543 = vmatprep.subr.bf16.mxu0 %v4512
  %4544 = vmatpush1.bf16.msra.mxu0 %v4511
  %4545 = vmatprep.subr.bf16.mxu0 %v4514
  %4546 = vmatpush1.bf16.msra.mxu0 %v4513
  %4547 = vmatprep.subr.bf16.mxu0 %v4516
  %4548 = vmatpush1.bf16.msra.mxu0 %v4515
  %4549 = vmatprep.subr.bf16.mxu0 0
  %4550 = vmatpush1.bf16.msra.mxu0 0
  %4551 = vmatprep.subr.bf16.mxu0 0
  %4552 = vmatpush1.bf16.msra.mxu0 0
  %4553 = vmatprep.subr.bf16.mxu0 0
  %4554 = vmatpush1.bf16.msra.mxu0 0
  %4555 = vmatprep.subr.bf16.mxu0 0
  %4556 = vmatpush1.bf16.msra.mxu0 0
  %4557 = vmatprep.subr.bf16.mxu0 0
  %4558 = vmatpush1.bf16.msra.mxu0 0
  %4559 = vmatprep.subr.bf16.mxu0 0
  %4560 = vmatpush1.bf16.msra.mxu0 0
  %4561 = vmatprep.subr.bf16.mxu0 0
  %4562 = vmatpush1.bf16.msra.mxu0 0
  %4563 = vmatprep.subr.bf16.mxu0 0
  %4564 = vmatpush1.bf16.msra.mxu0 0
  %4565 = vmatprep.mubr.bf16.mxu0 0
  %4566 = vmatmul.mubr.bf16.gmra.mrb[0].mxu0 %v3256
  %v4567 = vpop.f32.mrb[0].mxu0
  %v4568 = vadd.f32 0.0, %v4567
  %v4569 = vpop.f32.mrb[0].mxu0
  %v4570 = vadd.f32 0.0, %v4569
  %v4571 = vpop.f32.mrb[0].mxu0
  %v4572 = vadd.f32 0.0, %v4571
  %v4573 = vpop.f32.mrb[0].mxu0
  %v4574 = vadd.f32 0.0, %v4573
  %4575 = vmatprep.mubr.bf16.mxu0 0
  %4576 = vmatmul.mubr.bf16.gmra.mrb[0].mxu0 %v3257
  %v4577 = vpop.f32.mrb[0].mxu0
  %v4578 = vadd.f32 0.0, %v4577
  %v4579 = vpop.f32.mrb[0].mxu0
  %v4580 = vadd.f32 0.0, %v4579
  %v4581 = vpop.f32.mrb[0].mxu0
  %v4582 = vadd.f32 0.0, %v4581
  %v4583 = vpop.f32.mrb[0].mxu0
  %v4584 = vadd.f32 0.0, %v4583
  %4585 = vmatprep.mubr.bf16.mxu0 0
  %4586 = vmatmul.mubr.bf16.gmra.mrb[0].mxu0 %v3258
  %v4587 = vpop.f32.mrb[0].mxu0
  %v4588 = vadd.f32 0.0, %v4587
  %v4589 = vpop.f32.mrb[0].mxu0
  %v4590 = vadd.f32 0.0, %v4589
  %v4591 = vpop.f32.mrb[0].mxu0
  %v4592 = vadd.f32 0.0, %v4591
  %v4593 = vpop.f32.mrb[0].mxu0
  %v4594 = vadd.f32 0.0, %v4593
  %4595 = vmatprep.mubr.bf16.mxu0 0
  %4596 = vmatmul.mubr.bf16.gmra.mrb[0].mxu0 %v3259
  %v4597 = vpop.f32.mrb[0].mxu0
  %v4598 = vadd.f32 0.0, %v4597
  %v4599 = vpop.f32.mrb[0].mxu0
  %v4600 = vadd.f32 0.0, %v4599
  %v4601 = vpop.f32.mrb[0].mxu0
  %v4602 = vadd.f32 0.0, %v4601
  %v4603 = vpop.f32.mrb[0].mxu0
  %v4604 = vadd.f32 0.0, %v4603
  %4605 = vmatprep.mubr.bf16.mxu0 0
  %4606 = vmatmul.mubr.bf16.gmra.mrb[0].mxu0 %v3260
  %v4607 = vpop.f32.mrb[0].mxu0
  %v4608 = vadd.f32 0.0, %v4607
  %v4609 = vpop.f32.mrb[0].mxu0
  %v4610 = vadd.f32 0.0, %v4609
  %v4611 = vpop.f32.mrb[0].mxu0
  %v4612 = vadd.f32 0.0, %v4611
  %v4613 = vpop.f32.mrb[0].mxu0
  %v4614 = vadd.f32 0.0, %v4613
  %4615 = vmatprep.mubr.bf16.mxu0 0
  %4616 = vmatmul.mubr.bf16.gmra.mrb[0].mxu0 %v3261
  %v4617 = vpop.f32.mrb[0].mxu0
  %v4618 = vadd.f32 0.0, %v4617
  %v4619 = vpop.f32.mrb[0].mxu0
  %v4620 = vadd.f32 0.0, %v4619
  %v4621 = vpop.f32.mrb[0].mxu0
  %v4622 = vadd.f32 0.0, %v4621
  %v4623 = vpop.f32.mrb[0].mxu0
  %v4624 = vadd.f32 0.0, %v4623
  %4625 = vmatprep.mubr.bf16.mxu0 0
  %4626 = vmatmul.mubr.bf16.gmra.mrb[0].mxu0 %v3262
  %v4627 = vpop.f32.mrb[0].mxu0
  %v4628 = vadd.f32 0.0, %v4627
  %v4629 = vpop.f32.mrb[0].mxu0
  %v4630 = vadd.f32 0.0, %v4629
  %v4631 = vpop.f32.mrb[0].mxu0
  %v4632 = vadd.f32 0.0, %v4631
  %v4633 = vpop.f32.mrb[0].mxu0
  %v4634 = vadd.f32 0.0, %v4633
  %4635 = vmatprep.mubr.bf16.mxu0 0
  %4636 = vmatmul.mubr.bf16.gmra.mrb[0].mxu0 %v3263
  %v4637 = vpop.f32.mrb[0].mxu0
  %v4638 = vadd.f32 0.0, %v4637
  %v4639 = vpop.f32.mrb[0].mxu0
  %v4640 = vadd.f32 0.0, %v4639
  %v4641 = vpop.f32.mrb[0].mxu0
  %v4642 = vadd.f32 0.0, %v4641
  %v4643 = vpop.f32.mrb[0].mxu0
  %v4644 = vadd.f32 0.0, %v4643
  %4645 = vmatprep.mubr.bf16.mxu0 0
  %4646 = vmatmul.mubr.bf16.gmra.mrb[0].mxu0 %v3264
  %v4647 = vpop.f32.mrb[0].mxu0
  %v4648 = vadd.f32 0.0, %v4647
  %v4649 = vpop.f32.mrb[0].mxu0
  %v4650 = vadd.f32 0.0, %v4649
  %v4651 = vpop.f32.mrb[0].mxu0
  %v4652 = vadd.f32 0.0, %v4651
  %v4653 = vpop.f32.mrb[0].mxu0
  %v4654 = vadd.f32 0.0, %v4653
  %4655 = vmatprep.mubr.bf16.mxu0 0
  %4656 = vmatmul.mubr.bf16.gmra.mrb[0].mxu0 %v3265
  %v4657 = vpop.f32.mrb[0].mxu0
  %v4658 = vadd.f32 0.0, %v4657
  %v4659 = vpop.f32.mrb[0].mxu0
  %v4660 = vadd.f32 0.0, %v4659
  %v4661 = vpop.f32.mrb[0].mxu0
  %v4662 = vadd.f32 0.0, %v4661
  %v4663 = vpop.f32.mrb[0].mxu0
  %v4664 = vadd.f32 0.0, %v4663
  %4665 = vdwg.mxu0
  %v4666 = vadd.f32 %v4223, %v4568
  %v4667 = vadd.f32 %v4224, %v4570
  %v4668 = vadd.f32 %v4225, %v4572
  %v4669 = vadd.f32 %v4226, %v4574
  %v4670 = vadd.f32 %v4227, %v4578
  %v4671 = vadd.f32 %v4228, %v4580
  %v4672 = vadd.f32 %v4229, %v4582
  %v4673 = vadd.f32 %v4230, %v4584
  %v4674 = vadd.f32 %v4231, %v4588
  %v4675 = vadd.f32 %v4232, %v4590
  %v4676 = vadd.f32 %v4233, %v4592
  %v4677 = vadd.f32 %v4234, %v4594
  %v4678 = vadd.f32 %v4235, %v4598
  %v4679 = vadd.f32 %v4236, %v4600
  %v4680 = vadd.f32 %v4237, %v4602
  %v4681 = vadd.f32 %v4238, %v4604
  %v4682 = vadd.f32 %v4239, %v4608
  %v4683 = vadd.f32 %v4240, %v4610
  %v4684 = vadd.f32 %v4241, %v4612
  %v4685 = vadd.f32 %v4242, %v4614
  %v4686 = vadd.f32 %v4243, %v4618
  %v4687 = vadd.f32 %v4244, %v4620
  %v4688 = vadd.f32 %v4245, %v4622
  %v4689 = vadd.f32 %v4246, %v4624
  %v4690 = vadd.f32 %v4247, %v4628
  %v4691 = vadd.f32 %v4248, %v4630
  %v4692 = vadd.f32 %v4249, %v4632
  %v4693 = vadd.f32 %v4250, %v4634
  %v4694 = vadd.f32 %v4251, %v4638
  %v4695 = vadd.f32 %v4252, %v4640
  %v4696 = vadd.f32 %v4253, %v4642
  %v4697 = vadd.f32 %v4254, %v4644
  %v4698 = vadd.f32 %v4255, %v4648
  %v4699 = vadd.f32 %v4256, %v4650
  %v4700 = vadd.f32 %v4257, %v4652
  %v4701 = vadd.f32 %v4258, %v4654
  %v4702 = vadd.f32 %v4259, %v4658
  %v4703 = vadd.f32 %v4260, %v4660
  %v4704 = vadd.f32 %v4261, %v4662
  %v4705 = vadd.f32 %v4262, %v4664
  %4706 = vmatprep.subr.bf16.mxu0 %v4502
  %4707 = vmatpush1.bf16.msra.mxu0 %v4501
  %4708 = vmatprep.subr.bf16.mxu0 %v4504
  %4709 = vmatpush1.bf16.msra.mxu0 %v4503
  %4710 = vmatprep.subr.bf16.mxu0 %v4506
  %4711 = vmatpush1.bf16.msra.mxu0 %v4505
  %4712 = vmatprep.subr.bf16.mxu0 %v4508
  %4713 = vmatpush1.bf16.msra.mxu0 %v4507
  %4714 = vmatprep.subr.bf16.mxu0 %v4510
  %4715 = vmatpush1.bf16.msra.mxu0 %v4509
  %4716 = vmatprep.subr.bf16.mxu0 %v4512
  %4717 = vmatpush1.bf16.msra.mxu0 %v4511
  %4718 = vmatprep.subr.bf16.mxu0 %v4514
  %4719 = vmatpush1.bf16.msra.mxu0 %v4513
  %4720 = vmatprep.subr.bf16.mxu0 %v4516
  %4721 = vmatpush1.bf16.msra.mxu0 %v4515
  %4722 = vmatprep.subr.bf16.mxu0 0
  %4723 = vmatpush1.bf16.msra.mxu0 0
  %4724 = vmatprep.subr.bf16.mxu0 0
  %4725 = vmatpush1.bf16.msra.mxu0 0
  %4726 = vmatprep.subr.bf16.mxu0 0
  %4727 = vmatpush1.bf16.msra.mxu0 0
  %4728 = vmatprep.subr.bf16.mxu0 0
  %4729 = vmatpush1.bf16.msra.mxu0 0
  %4730 = vmatprep.subr.bf16.mxu0 0
  %4731 = vmatpush1.bf16.msra.mxu0 0
  %4732 = vmatprep.subr.bf16.mxu0 0
  %4733 = vmatpush1.bf16.msra.mxu0 0
  %4734 = vmatprep.subr.bf16.mxu0 0
  %4735 = vmatpush1.bf16.msra.mxu0 0
  %4736 = vmatprep.subr.bf16.mxu0 0
  %4737 = vmatpush1.bf16.msra.mxu0 0
  %4738 = vmatprep.mubr.bf16.mxu0 0
  %4739 = vmatmul.mubr.bf16.gmra.mrb[0].mxu0 %v3244
  %v4740 = vpop.f32.mrb[0].mxu0
  %v4741 = vadd.f32 0.0, %v4740
  %v4742 = vpop.f32.mrb[0].mxu0
  %v4743 = vadd.f32 0.0, %v4742
  %v4744 = vpop.f32.mrb[0].mxu0
  %v4745 = vadd.f32 0.0, %v4744
  %v4746 = vpop.f32.mrb[0].mxu0
  %v4747 = vadd.f32 0.0, %v4746
  %4748 = vmatprep.mubr.bf16.mxu0 0
  %4749 = vmatmul.mubr.bf16.gmra.mrb[0].mxu0 %v3245
  %v4750 = vpop.f32.mrb[0].mxu0
  %v4751 = vadd.f32 0.0, %v4750
  %v4752 = vpop.f32.mrb[0].mxu0
  %v4753 = vadd.f32 0.0, %v4752
  %v4754 = vpop.f32.mrb[0].mxu0
  %v4755 = vadd.f32 0.0, %v4754
  %v4756 = vpop.f32.mrb[0].mxu0
  %v4757 = vadd.f32 0.0, %v4756
  %4758 = vmatprep.mubr.bf16.mxu0 0
  %4759 = vmatmul.mubr.bf16.gmra.mrb[0].mxu0 %v3246
  %v4760 = vpop.f32.mrb[0].mxu0
  %v4761 = vadd.f32 0.0, %v4760
  %v4762 = vpop.f32.mrb[0].mxu0
  %v4763 = vadd.f32 0.0, %v4762
  %v4764 = vpop.f32.mrb[0].mxu0
  %v4765 = vadd.f32 0.0, %v4764
  %v4766 = vpop.f32.mrb[0].mxu0
  %v4767 = vadd.f32 0.0, %v4766
  %4768 = vmatprep.mubr.bf16.mxu0 0
  %4769 = vmatmul.mubr.bf16.gmra.mrb[0].mxu0 %v3247
  %v4770 = vpop.f32.mrb[0].mxu0
  %v4771 = vadd.f32 0.0, %v4770
  %v4772 = vpop.f32.mrb[0].mxu0
  %v4773 = vadd.f32 0.0, %v4772
  %v4774 = vpop.f32.mrb[0].mxu0
  %v4775 = vadd.f32 0.0, %v4774
  %v4776 = vpop.f32.mrb[0].mxu0
  %v4777 = vadd.f32 0.0, %v4776
  %4778 = vmatprep.mubr.bf16.mxu0 0
  %4779 = vmatmul.mubr.bf16.gmra.mrb[0].mxu0 %v3248
  %v4780 = vpop.f32.mrb[0].mxu0
  %v4781 = vadd.f32 0.0, %v4780
  %v4782 = vpop.f32.mrb[0].mxu0
  %v4783 = vadd.f32 0.0, %v4782
  %v4784 = vpop.f32.mrb[0].mxu0
  %v4785 = vadd.f32 0.0, %v4784
  %v4786 = vpop.f32.mrb[0].mxu0
  %v4787 = vadd.f32 0.0, %v4786
  %4788 = vmatprep.mubr.bf16.mxu0 0
  %4789 = vmatmul.mubr.bf16.gmra.mrb[0].mxu0 %v3249
  %v4790 = vpop.f32.mrb[0].mxu0
  %v4791 = vadd.f32 0.0, %v4790
  %v4792 = vpop.f32.mrb[0].mxu0
  %v4793 = vadd.f32 0.0, %v4792
  %v4794 = vpop.f32.mrb[0].mxu0
  %v4795 = vadd.f32 0.0, %v4794
  %v4796 = vpop.f32.mrb[0].mxu0
  %v4797 = vadd.f32 0.0, %v4796
  %4798 = vmatprep.mubr.bf16.mxu0 0
  %4799 = vmatmul.mubr.bf16.gmra.mrb[0].mxu0 %v3250
  %v4800 = vpop.f32.mrb[0].mxu0
  %v4801 = vadd.f32 0.0, %v4800
  %v4802 = vpop.f32.mrb[0].mxu0
  %v4803 = vadd.f32 0.0, %v4802
  %v4804 = vpop.f32.mrb[0].mxu0
  %v4805 = vadd.f32 0.0, %v4804
  %v4806 = vpop.f32.mrb[0].mxu0
  %v4807 = vadd.f32 0.0, %v4806
  %4808 = vmatprep.mubr.bf16.mxu0 0
  %4809 = vmatmul.mubr.bf16.gmra.mrb[0].mxu0 %v3251
  %v4810 = vpop.f32.mrb[0].mxu0
  %v4811 = vadd.f32 0.0, %v4810
  %v4812 = vpop.f32.mrb[0].mxu0
  %v4813 = vadd.f32 0.0, %v4812
  %v4814 = vpop.f32.mrb[0].mxu0
  %v4815 = vadd.f32 0.0, %v4814
  %v4816 = vpop.f32.mrb[0].mxu0
  %v4817 = vadd.f32 0.0, %v4816
  %4818 = vmatprep.mubr.bf16.mxu0 0
  %4819 = vmatmul.mubr.bf16.gmra.mrb[0].mxu0 %v3252
  %v4820 = vpop.f32.mrb[0].mxu0
  %v4821 = vadd.f32 0.0, %v4820
  %v4822 = vpop.f32.mrb[0].mxu0
  %v4823 = vadd.f32 0.0, %v4822
  %v4824 = vpop.f32.mrb[0].mxu0
  %v4825 = vadd.f32 0.0, %v4824
  %v4826 = vpop.f32.mrb[0].mxu0
  %v4827 = vadd.f32 0.0, %v4826
  %4828 = vmatprep.mubr.bf16.mxu0 0
  %4829 = vmatmul.mubr.bf16.gmra.mrb[0].mxu0 %v3253
  %v4830 = vpop.f32.mrb[0].mxu0
  %v4831 = vadd.f32 0.0, %v4830
  %v4832 = vpop.f32.mrb[0].mxu0
  %v4833 = vadd.f32 0.0, %v4832
  %v4834 = vpop.f32.mrb[0].mxu0
  %v4835 = vadd.f32 0.0, %v4834
  %v4836 = vpop.f32.mrb[0].mxu0
  %v4837 = vadd.f32 0.0, %v4836
  %4838 = vdwg.mxu0
  %v4839 = vadd.f32 %v4396, %v4741
  %v4840 = vadd.f32 %v4397, %v4743
  %v4841 = vadd.f32 %v4398, %v4745
  %v4842 = vadd.f32 %v4399, %v4747
  %v4843 = vadd.f32 %v4400, %v4751
  %v4844 = vadd.f32 %v4401, %v4753
  %v4845 = vadd.f32 %v4402, %v4755
  %v4846 = vadd.f32 %v4403, %v4757
  %v4847 = vadd.f32 %v4404, %v4761
  %v4848 = vadd.f32 %v4405, %v4763
  %v4849 = vadd.f32 %v4406, %v4765
  %v4850 = vadd.f32 %v4407, %v4767
  %v4851 = vadd.f32 %v4408, %v4771
  %v4852 = vadd.f32 %v4409, %v4773
  %v4853 = vadd.f32 %v4410, %v4775
  %v4854 = vadd.f32 %v4411, %v4777
  %v4855 = vadd.f32 %v4412, %v4781
  %v4856 = vadd.f32 %v4413, %v4783
  %v4857 = vadd.f32 %v4414, %v4785
  %v4858 = vadd.f32 %v4415, %v4787
  %v4859 = vadd.f32 %v4416, %v4791
  %v4860 = vadd.f32 %v4417, %v4793
  %v4861 = vadd.f32 %v4418, %v4795
  %v4862 = vadd.f32 %v4419, %v4797
  %v4863 = vadd.f32 %v4420, %v4801
  %v4864 = vadd.f32 %v4421, %v4803
  %v4865 = vadd.f32 %v4422, %v4805
  %v4866 = vadd.f32 %v4423, %v4807
  %v4867 = vadd.f32 %v4424, %v4811
  %v4868 = vadd.f32 %v4425, %v4813
  %v4869 = vadd.f32 %v4426, %v4815
  %v4870 = vadd.f32 %v4427, %v4817
  %v4871 = vadd.f32 %v4428, %v4821
  %v4872 = vadd.f32 %v4429, %v4823
  %v4873 = vadd.f32 %v4430, %v4825
  %v4874 = vadd.f32 %v4431, %v4827
  %v4875 = vadd.f32 %v4432, %v4831
  %v4876 = vadd.f32 %v4433, %v4833
  %v4877 = vadd.f32 %v4434, %v4835
  %v4878 = vadd.f32 %v4435, %v4837
  %s4879 = scalar_lea.vmem %s3, 512
  %v4880 = vld [vmem:[%s4879] sm:$0xff]
  %v4881 = vld [vmem:[%s4879 + $0x8] sm:$0xff]
  %v4882 = vld [vmem:[%s4879 + $0x10] sm:$0xff]
  %v4883 = vld [vmem:[%s4879 + $0x18] sm:$0xff]
  %v4884 = vld [vmem:[%s4879 + $0x20] sm:$0xff]
  %v4885 = vld [vmem:[%s4879 + $0x28] sm:$0xff]
  %v4886 = vld [vmem:[%s4879 + $0x30] sm:$0xff]
  %v4887 = vld [vmem:[%s4879 + $0x38] sm:$0xff]
  %v4888 = vld [vmem:[%s4879 + $0x40] sm:$0xff]
  %v4889 = vld [vmem:[%s4879 + $0x48] sm:$0xff]
  %v4890 = vld [vmem:[%s4879 + $0x50] sm:$0xff]
  %v4891 = vld [vmem:[%s4879 + $0x58] sm:$0xff]
  %v4892 = vld [vmem:[%s4879 + $0x60] sm:$0xff]
  %v4893 = vld [vmem:[%s4879 + $0x68] sm:$0xff]
  %v4894 = vld [vmem:[%s4879 + $0x70] sm:$0xff]
  %v4895 = vld [vmem:[%s4879 + $0x78] sm:$0xff]
  %v4912 = vunpack.c.l.b16 %v4880
  %v4913 = vunpack.c.h.b16 %v4880
  %v4914 = vunpack.c.l.b16 %v4881
  %v4915 = vunpack.c.h.b16 %v4881
  %v4916 = vunpack.c.l.b16 %v4882
  %v4917 = vunpack.c.h.b16 %v4882
  %v4918 = vunpack.c.l.b16 %v4883
  %v4919 = vunpack.c.h.b16 %v4883
  %v4920 = vunpack.c.l.b16 %v4884
  %v4921 = vunpack.c.h.b16 %v4884
  %v4922 = vunpack.c.l.b16 %v4885
  %v4923 = vunpack.c.h.b16 %v4885
  %v4924 = vunpack.c.l.b16 %v4886
  %v4925 = vunpack.c.h.b16 %v4886
  %v4926 = vunpack.c.l.b16 %v4887
  %v4927 = vunpack.c.h.b16 %v4887
  %v4928 = vunpack.c.l.b16 %v4888
  %v4929 = vunpack.c.h.b16 %v4888
  %v4930 = vunpack.c.l.b16 %v4889
  %v4931 = vunpack.c.h.b16 %v4889
  %v4932 = vunpack.c.l.b16 %v4890
  %v4933 = vunpack.c.h.b16 %v4890
  %v4934 = vunpack.c.l.b16 %v4891
  %v4935 = vunpack.c.h.b16 %v4891
  %v4936 = vunpack.c.l.b16 %v4892
  %v4937 = vunpack.c.h.b16 %v4892
  %v4938 = vunpack.c.l.b16 %v4893
  %v4939 = vunpack.c.h.b16 %v4893
  %v4940 = vunpack.c.l.b16 %v4894
  %v4941 = vunpack.c.h.b16 %v4894
  %v4942 = vunpack.c.l.b16 %v4895
  %v4943 = vunpack.c.h.b16 %v4895
  %v4944 = vpack.c.b16 %v4914, %v4912
  %v4945 = vpack.c.b16 %v4915, %v4913
  %v4946 = vpack.c.b16 %v4918, %v4916
  %v4947 = vpack.c.b16 %v4919, %v4917
  %v4948 = vpack.c.b16 %v4922, %v4920
  %v4949 = vpack.c.b16 %v4923, %v4921
  %v4950 = vpack.c.b16 %v4926, %v4924
  %v4951 = vpack.c.b16 %v4927, %v4925
  %v4952 = vpack.c.b16 %v4930, %v4928
  %v4953 = vpack.c.b16 %v4931, %v4929
  %v4954 = vpack.c.b16 %v4934, %v4932
  %v4955 = vpack.c.b16 %v4935, %v4933
  %v4956 = vpack.c.b16 %v4938, %v4936
  %v4957 = vpack.c.b16 %v4939, %v4937
  %v4958 = vpack.c.b16 %v4942, %v4940
  %v4959 = vpack.c.b16 %v4943, %v4941
  %4976 = vmatprep.subr.bf16.mxu0 %v4945
  %4977 = vmatpush1.bf16.msra.mxu0 %v4944
  %4978 = vmatprep.subr.bf16.mxu0 %v4947
  %4979 = vmatpush1.bf16.msra.mxu0 %v4946
  %4980 = vmatprep.subr.bf16.mxu0 %v4949
  %4981 = vmatpush1.bf16.msra.mxu0 %v4948
  %4982 = vmatprep.subr.bf16.mxu0 %v4951
  %4983 = vmatpush1.bf16.msra.mxu0 %v4950
  %4984 = vmatprep.subr.bf16.mxu0 %v4953
  %4985 = vmatpush1.bf16.msra.mxu0 %v4952
  %4986 = vmatprep.subr.bf16.mxu0 %v4955
  %4987 = vmatpush1.bf16.msra.mxu0 %v4954
  %4988 = vmatprep.subr.bf16.mxu0 %v4957
  %4989 = vmatpush1.bf16.msra.mxu0 %v4956
  %4990 = vmatprep.subr.bf16.mxu0 %v4959
  %4991 = vmatpush1.bf16.msra.mxu0 %v4958
  %4992 = vmatprep.subr.bf16.mxu0 0
  %4993 = vmatpush1.bf16.msra.mxu0 0
  %4994 = vmatprep.subr.bf16.mxu0 0
  %4995 = vmatpush1.bf16.msra.mxu0 0
  %4996 = vmatprep.subr.bf16.mxu0 0
  %4997 = vmatpush1.bf16.msra.mxu0 0
  %4998 = vmatprep.subr.bf16.mxu0 0
  %4999 = vmatpush1.bf16.msra.mxu0 0
  %5000 = vmatprep.subr.bf16.mxu0 0
  %5001 = vmatpush1.bf16.msra.mxu0 0
  %5002 = vmatprep.subr.bf16.mxu0 0
  %5003 = vmatpush1.bf16.msra.mxu0 0
  %5004 = vmatprep.subr.bf16.mxu0 0
  %5005 = vmatpush1.bf16.msra.mxu0 0
  %5006 = vmatprep.subr.bf16.mxu0 0
  %5007 = vmatpush1.bf16.msra.mxu0 0
  %5008 = vmatprep.mubr.bf16.mxu0 0
  %5009 = vmatmul.mubr.bf16.gmra.mrb[0].mxu0 %v3244
  %v5010 = vpop.f32.mrb[0].mxu0
  %v5011 = vadd.f32 0.0, %v5010
  %v5012 = vpop.f32.mrb[0].mxu0
  %v5013 = vadd.f32 0.0, %v5012
  %v5014 = vpop.f32.mrb[0].mxu0
  %v5015 = vadd.f32 0.0, %v5014
  %v5016 = vpop.f32.mrb[0].mxu0
  %v5017 = vadd.f32 0.0, %v5016
  %5018 = vmatprep.mubr.bf16.mxu0 0
  %5019 = vmatmul.mubr.bf16.gmra.mrb[0].mxu0 %v3245
  %v5020 = vpop.f32.mrb[0].mxu0
  %v5021 = vadd.f32 0.0, %v5020
  %v5022 = vpop.f32.mrb[0].mxu0
  %v5023 = vadd.f32 0.0, %v5022
  %v5024 = vpop.f32.mrb[0].mxu0
  %v5025 = vadd.f32 0.0, %v5024
  %v5026 = vpop.f32.mrb[0].mxu0
  %v5027 = vadd.f32 0.0, %v5026
  %5028 = vmatprep.mubr.bf16.mxu0 0
  %5029 = vmatmul.mubr.bf16.gmra.mrb[0].mxu0 %v3246
  %v5030 = vpop.f32.mrb[0].mxu0
  %v5031 = vadd.f32 0.0, %v5030
  %v5032 = vpop.f32.mrb[0].mxu0
  %v5033 = vadd.f32 0.0, %v5032
  %v5034 = vpop.f32.mrb[0].mxu0
  %v5035 = vadd.f32 0.0, %v5034
  %v5036 = vpop.f32.mrb[0].mxu0
  %v5037 = vadd.f32 0.0, %v5036
  %5038 = vmatprep.mubr.bf16.mxu0 0
  %5039 = vmatmul.mubr.bf16.gmra.mrb[0].mxu0 %v3247
  %v5040 = vpop.f32.mrb[0].mxu0
  %v5041 = vadd.f32 0.0, %v5040
  %v5042 = vpop.f32.mrb[0].mxu0
  %v5043 = vadd.f32 0.0, %v5042
  %v5044 = vpop.f32.mrb[0].mxu0
  %v5045 = vadd.f32 0.0, %v5044
  %v5046 = vpop.f32.mrb[0].mxu0
  %v5047 = vadd.f32 0.0, %v5046
  %5048 = vmatprep.mubr.bf16.mxu0 0
  %5049 = vmatmul.mubr.bf16.gmra.mrb[0].mxu0 %v3248
  %v5050 = vpop.f32.mrb[0].mxu0
  %v5051 = vadd.f32 0.0, %v5050
  %v5052 = vpop.f32.mrb[0].mxu0
  %v5053 = vadd.f32 0.0, %v5052
  %v5054 = vpop.f32.mrb[0].mxu0
  %v5055 = vadd.f32 0.0, %v5054
  %v5056 = vpop.f32.mrb[0].mxu0
  %v5057 = vadd.f32 0.0, %v5056
  %5058 = vmatprep.mubr.bf16.mxu0 0
  %5059 = vmatmul.mubr.bf16.gmra.mrb[0].mxu0 %v3249
  %v5060 = vpop.f32.mrb[0].mxu0
  %v5061 = vadd.f32 0.0, %v5060
  %v5062 = vpop.f32.mrb[0].mxu0
  %v5063 = vadd.f32 0.0, %v5062
  %v5064 = vpop.f32.mrb[0].mxu0
  %v5065 = vadd.f32 0.0, %v5064
  %v5066 = vpop.f32.mrb[0].mxu0
  %v5067 = vadd.f32 0.0, %v5066
  %5068 = vmatprep.mubr.bf16.mxu0 0
  %5069 = vmatmul.mubr.bf16.gmra.mrb[0].mxu0 %v3250
  %v5070 = vpop.f32.mrb[0].mxu0
  %v5071 = vadd.f32 0.0, %v5070
  %v5072 = vpop.f32.mrb[0].mxu0
  %v5073 = vadd.f32 0.0, %v5072
  %v5074 = vpop.f32.mrb[0].mxu0
  %v5075 = vadd.f32 0.0, %v5074
  %v5076 = vpop.f32.mrb[0].mxu0
  %v5077 = vadd.f32 0.0, %v5076
  %5078 = vmatprep.mubr.bf16.mxu0 0
  %5079 = vmatmul.mubr.bf16.gmra.mrb[0].mxu0 %v3251
  %v5080 = vpop.f32.mrb[0].mxu0
  %v5081 = vadd.f32 0.0, %v5080
  %v5082 = vpop.f32.mrb[0].mxu0
  %v5083 = vadd.f32 0.0, %v5082
  %v5084 = vpop.f32.mrb[0].mxu0
  %v5085 = vadd.f32 0.0, %v5084
  %v5086 = vpop.f32.mrb[0].mxu0
  %v5087 = vadd.f32 0.0, %v5086
  %5088 = vmatprep.mubr.bf16.mxu0 0
  %5089 = vmatmul.mubr.bf16.gmra.mrb[0].mxu0 %v3252
  %v5090 = vpop.f32.mrb[0].mxu0
  %v5091 = vadd.f32 0.0, %v5090
  %v5092 = vpop.f32.mrb[0].mxu0
  %v5093 = vadd.f32 0.0, %v5092
  %v5094 = vpop.f32.mrb[0].mxu0
  %v5095 = vadd.f32 0.0, %v5094
  %v5096 = vpop.f32.mrb[0].mxu0
  %v5097 = vadd.f32 0.0, %v5096
  %5098 = vmatprep.mubr.bf16.mxu0 0
  %5099 = vmatmul.mubr.bf16.gmra.mrb[0].mxu0 %v3253
  %v5100 = vpop.f32.mrb[0].mxu0
  %v5101 = vadd.f32 0.0, %v5100
  %v5102 = vpop.f32.mrb[0].mxu0
  %v5103 = vadd.f32 0.0, %v5102
  %v5104 = vpop.f32.mrb[0].mxu0
  %v5105 = vadd.f32 0.0, %v5104
  %v5106 = vpop.f32.mrb[0].mxu0
  %v5107 = vadd.f32 0.0, %v5106
  %5108 = vdwg.mxu0
  %v5109 = vadd.f32 %v4666, %v5011
  %v5110 = vadd.f32 %v4667, %v5013
  %v5111 = vadd.f32 %v4668, %v5015
  %v5112 = vadd.f32 %v4669, %v5017
  %v5113 = vadd.f32 %v4670, %v5021
  %v5114 = vadd.f32 %v4671, %v5023
  %v5115 = vadd.f32 %v4672, %v5025
  %v5116 = vadd.f32 %v4673, %v5027
  %v5117 = vadd.f32 %v4674, %v5031
  %v5118 = vadd.f32 %v4675, %v5033
  %v5119 = vadd.f32 %v4676, %v5035
  %v5120 = vadd.f32 %v4677, %v5037
  %v5121 = vadd.f32 %v4678, %v5041
  %v5122 = vadd.f32 %v4679, %v5043
  %v5123 = vadd.f32 %v4680, %v5045
  %v5124 = vadd.f32 %v4681, %v5047
  %v5125 = vadd.f32 %v4682, %v5051
  %v5126 = vadd.f32 %v4683, %v5053
  %v5127 = vadd.f32 %v4684, %v5055
  %v5128 = vadd.f32 %v4685, %v5057
  %v5129 = vadd.f32 %v4686, %v5061
  %v5130 = vadd.f32 %v4687, %v5063
  %v5131 = vadd.f32 %v4688, %v5065
  %v5132 = vadd.f32 %v4689, %v5067
  %v5133 = vadd.f32 %v4690, %v5071
  %v5134 = vadd.f32 %v4691, %v5073
  %v5135 = vadd.f32 %v4692, %v5075
  %v5136 = vadd.f32 %v4693, %v5077
  %v5137 = vadd.f32 %v4694, %v5081
  %v5138 = vadd.f32 %v4695, %v5083
  %v5139 = vadd.f32 %v4696, %v5085
  %v5140 = vadd.f32 %v4697, %v5087
  %v5141 = vadd.f32 %v4698, %v5091
  %v5142 = vadd.f32 %v4699, %v5093
  %v5143 = vadd.f32 %v4700, %v5095
  %v5144 = vadd.f32 %v4701, %v5097
  %v5145 = vadd.f32 %v4702, %v5101
  %v5146 = vadd.f32 %v4703, %v5103
  %v5147 = vadd.f32 %v4704, %v5105
  %v5148 = vadd.f32 %v4705, %v5107
  %5149 = vmatprep.subr.bf16.mxu0 %v4945
  %5150 = vmatpush1.bf16.msra.mxu0 %v4944
  %5151 = vmatprep.subr.bf16.mxu0 %v4947
  %5152 = vmatpush1.bf16.msra.mxu0 %v4946
  %5153 = vmatprep.subr.bf16.mxu0 %v4949
  %5154 = vmatpush1.bf16.msra.mxu0 %v4948
  %5155 = vmatprep.subr.bf16.mxu0 %v4951
  %5156 = vmatpush1.bf16.msra.mxu0 %v4950
  %5157 = vmatprep.subr.bf16.mxu0 %v4953
  %5158 = vmatpush1.bf16.msra.mxu0 %v4952
  %5159 = vmatprep.subr.bf16.mxu0 %v4955
  %5160 = vmatpush1.bf16.msra.mxu0 %v4954
  %5161 = vmatprep.subr.bf16.mxu0 %v4957
  %5162 = vmatpush1.bf16.msra.mxu0 %v4956
  %5163 = vmatprep.subr.bf16.mxu0 %v4959
  %5164 = vmatpush1.bf16.msra.mxu0 %v4958
  %5165 = vmatprep.subr.bf16.mxu0 0
  %5166 = vmatpush1.bf16.msra.mxu0 0
  %5167 = vmatprep.subr.bf16.mxu0 0
  %5168 = vmatpush1.bf16.msra.mxu0 0
  %5169 = vmatprep.subr.bf16.mxu0 0
  %5170 = vmatpush1.bf16.msra.mxu0 0
  %5171 = vmatprep.subr.bf16.mxu0 0
  %5172 = vmatpush1.bf16.msra.mxu0 0
  %5173 = vmatprep.subr.bf16.mxu0 0
  %5174 = vmatpush1.bf16.msra.mxu0 0
  %5175 = vmatprep.subr.bf16.mxu0 0
  %5176 = vmatpush1.bf16.msra.mxu0 0
  %5177 = vmatprep.subr.bf16.mxu0 0
  %5178 = vmatpush1.bf16.msra.mxu0 0
  %5179 = vmatprep.subr.bf16.mxu0 0
  %5180 = vmatpush1.bf16.msra.mxu0 0
  %5181 = vmatprep.mubr.bf16.mxu0 0
  %5182 = vmatmul.mubr.bf16.gmra.mrb[0].mxu0 %v3258
  %v5183 = vpop.f32.mrb[0].mxu0
  %v5184 = vadd.f32 0.0, %v5183
  %v5185 = vpop.f32.mrb[0].mxu0
  %v5186 = vadd.f32 0.0, %v5185
  %v5187 = vpop.f32.mrb[0].mxu0
  %v5188 = vadd.f32 0.0, %v5187
  %v5189 = vpop.f32.mrb[0].mxu0
  %v5190 = vadd.f32 0.0, %v5189
  %5191 = vmatprep.mubr.bf16.mxu0 0
  %5192 = vmatmul.mubr.bf16.gmra.mrb[0].mxu0 %v3259
  %v5193 = vpop.f32.mrb[0].mxu0
  %v5194 = vadd.f32 0.0, %v5193
  %v5195 = vpop.f32.mrb[0].mxu0
  %v5196 = vadd.f32 0.0, %v5195
  %v5197 = vpop.f32.mrb[0].mxu0
  %v5198 = vadd.f32 0.0, %v5197
  %v5199 = vpop.f32.mrb[0].mxu0
  %v5200 = vadd.f32 0.0, %v5199
  %5201 = vmatprep.mubr.bf16.mxu0 0
  %5202 = vmatmul.mubr.bf16.gmra.mrb[0].mxu0 %v3260
  %v5203 = vpop.f32.mrb[0].mxu0
  %v5204 = vadd.f32 0.0, %v5203
  %v5205 = vpop.f32.mrb[0].mxu0
  %v5206 = vadd.f32 0.0, %v5205
  %v5207 = vpop.f32.mrb[0].mxu0
  %v5208 = vadd.f32 0.0, %v5207
  %v5209 = vpop.f32.mrb[0].mxu0
  %v5210 = vadd.f32 0.0, %v5209
  %5211 = vmatprep.mubr.bf16.mxu0 0
  %5212 = vmatmul.mubr.bf16.gmra.mrb[0].mxu0 %v3261
  %v5213 = vpop.f32.mrb[0].mxu0
  %v5214 = vadd.f32 0.0, %v5213
  %v5215 = vpop.f32.mrb[0].mxu0
  %v5216 = vadd.f32 0.0, %v5215
  %v5217 = vpop.f32.mrb[0].mxu0
  %v5218 = vadd.f32 0.0, %v5217
  %v5219 = vpop.f32.mrb[0].mxu0
  %v5220 = vadd.f32 0.0, %v5219
  %5221 = vmatprep.mubr.bf16.mxu0 0
  %5222 = vmatmul.mubr.bf16.gmra.mrb[0].mxu0 %v3262
  %v5223 = vpop.f32.mrb[0].mxu0
  %v5224 = vadd.f32 0.0, %v5223
  %v5225 = vpop.f32.mrb[0].mxu0
  %v5226 = vadd.f32 0.0, %v5225
  %v5227 = vpop.f32.mrb[0].mxu0
  %v5228 = vadd.f32 0.0, %v5227
  %v5229 = vpop.f32.mrb[0].mxu0
  %v5230 = vadd.f32 0.0, %v5229
  %5231 = vmatprep.mubr.bf16.mxu0 0
  %5232 = vmatmul.mubr.bf16.gmra.mrb[0].mxu0 %v3263
  %v5233 = vpop.f32.mrb[0].mxu0
  %v5234 = vadd.f32 0.0, %v5233
  %v5235 = vpop.f32.mrb[0].mxu0
  %v5236 = vadd.f32 0.0, %v5235
  %v5237 = vpop.f32.mrb[0].mxu0
  %v5238 = vadd.f32 0.0, %v5237
  %v5239 = vpop.f32.mrb[0].mxu0
  %v5240 = vadd.f32 0.0, %v5239
  %5241 = vmatprep.mubr.bf16.mxu0 0
  %5242 = vmatmul.mubr.bf16.gmra.mrb[0].mxu0 %v3264
  %v5243 = vpop.f32.mrb[0].mxu0
  %v5244 = vadd.f32 0.0, %v5243
  %v5245 = vpop.f32.mrb[0].mxu0
  %v5246 = vadd.f32 0.0, %v5245
  %v5247 = vpop.f32.mrb[0].mxu0
  %v5248 = vadd.f32 0.0, %v5247
  %v5249 = vpop.f32.mrb[0].mxu0
  %v5250 = vadd.f32 0.0, %v5249
  %5251 = vmatprep.mubr.bf16.mxu0 0
  %5252 = vmatmul.mubr.bf16.gmra.mrb[0].mxu0 %v3265
  %v5253 = vpop.f32.mrb[0].mxu0
  %v5254 = vadd.f32 0.0, %v5253
  %v5255 = vpop.f32.mrb[0].mxu0
  %v5256 = vadd.f32 0.0, %v5255
  %v5257 = vpop.f32.mrb[0].mxu0
  %v5258 = vadd.f32 0.0, %v5257
  %v5259 = vpop.f32.mrb[0].mxu0
  %v5260 = vadd.f32 0.0, %v5259
  %5261 = vmatprep.mubr.bf16.mxu0 0
  %5262 = vmatmul.mubr.bf16.gmra.mrb[0].mxu0 %v3266
  %v5263 = vpop.f32.mrb[0].mxu0
  %v5264 = vadd.f32 0.0, %v5263
  %v5265 = vpop.f32.mrb[0].mxu0
  %v5266 = vadd.f32 0.0, %v5265
  %v5267 = vpop.f32.mrb[0].mxu0
  %v5268 = vadd.f32 0.0, %v5267
  %v5269 = vpop.f32.mrb[0].mxu0
  %v5270 = vadd.f32 0.0, %v5269
  %5271 = vmatprep.mubr.bf16.mxu0 0
  %5272 = vmatmul.mubr.bf16.gmra.mrb[0].mxu0 %v3267
  %v5273 = vpop.f32.mrb[0].mxu0
  %v5274 = vadd.f32 0.0, %v5273
  %v5275 = vpop.f32.mrb[0].mxu0
  %v5276 = vadd.f32 0.0, %v5275
  %v5277 = vpop.f32.mrb[0].mxu0
  %v5278 = vadd.f32 0.0, %v5277
  %v5279 = vpop.f32.mrb[0].mxu0
  %v5280 = vadd.f32 0.0, %v5279
  %5281 = vdwg.mxu0
  %v5282 = vadd.f32 %v4839, %v5184
  %v5283 = vadd.f32 %v4840, %v5186
  %v5284 = vadd.f32 %v4841, %v5188
  %v5285 = vadd.f32 %v4842, %v5190
  %v5286 = vadd.f32 %v4843, %v5194
  %v5287 = vadd.f32 %v4844, %v5196
  %v5288 = vadd.f32 %v4845, %v5198
  %v5289 = vadd.f32 %v4846, %v5200
  %v5290 = vadd.f32 %v4847, %v5204
  %v5291 = vadd.f32 %v4848, %v5206
  %v5292 = vadd.f32 %v4849, %v5208
  %v5293 = vadd.f32 %v4850, %v5210
  %v5294 = vadd.f32 %v4851, %v5214
  %v5295 = vadd.f32 %v4852, %v5216
  %v5296 = vadd.f32 %v4853, %v5218
  %v5297 = vadd.f32 %v4854, %v5220
  %v5298 = vadd.f32 %v4855, %v5224
  %v5299 = vadd.f32 %v4856, %v5226
  %v5300 = vadd.f32 %v4857, %v5228
  %v5301 = vadd.f32 %v4858, %v5230
  %v5302 = vadd.f32 %v4859, %v5234
  %v5303 = vadd.f32 %v4860, %v5236
  %v5304 = vadd.f32 %v4861, %v5238
  %v5305 = vadd.f32 %v4862, %v5240
  %v5306 = vadd.f32 %v4863, %v5244
  %v5307 = vadd.f32 %v4864, %v5246
  %v5308 = vadd.f32 %v4865, %v5248
  %v5309 = vadd.f32 %v4866, %v5250
  %v5310 = vadd.f32 %v4867, %v5254
  %v5311 = vadd.f32 %v4868, %v5256
  %v5312 = vadd.f32 %v4869, %v5258
  %v5313 = vadd.f32 %v4870, %v5260
  %v5314 = vadd.f32 %v4871, %v5264
  %v5315 = vadd.f32 %v4872, %v5266
  %v5316 = vadd.f32 %v4873, %v5268
  %v5317 = vadd.f32 %v4874, %v5270
  %v5318 = vadd.f32 %v4875, %v5274
  %v5319 = vadd.f32 %v4876, %v5276
  %v5320 = vadd.f32 %v4877, %v5278
  %v5321 = vadd.f32 %v4878, %v5280
  %v5322 = vmax.f32 %v5109, %v5110
  %v5323 = vmax.f32 %v5111, %v5112
  %v5324 = vmax.f32 %v5113, %v5114
  %v5325 = vmax.f32 %v5115, %v5116
  %v5326 = vmax.f32 %v5117, %v5118
  %v5327 = vmax.f32 %v5119, %v5120
  %v5328 = vmax.f32 %v5121, %v5122
  %v5329 = vmax.f32 %v5123, %v5124
  %v5330 = vmax.f32 %v5125, %v5126
  %v5331 = vmax.f32 %v5127, %v5128
  %v5332 = vmax.f32 %v5129, %v5130
  %v5333 = vmax.f32 %v5131, %v5132
  %v5334 = vmax.f32 %v5133, %v5134
  %v5335 = vmax.f32 %v5135, %v5136
  %v5336 = vmax.f32 %v5137, %v5138
  %v5337 = vmax.f32 %v5139, %v5140
  %v5338 = vmax.f32 %v5141, %v5142
  %v5339 = vmax.f32 %v5143, %v5144
  %v5340 = vmax.f32 %v5145, %v5146
  %v5341 = vmax.f32 %v5147, %v5148
  %v5342 = vmax.f32 %v5282, %v5283
  %v5343 = vmax.f32 %v5284, %v5285
  %v5344 = vmax.f32 %v5286, %v5287
  %v5345 = vmax.f32 %v5288, %v5289
  %v5346 = vmax.f32 %v5290, %v5291
  %v5347 = vmax.f32 %v5292, %v5293
  %v5348 = vmax.f32 %v5294, %v5295
  %v5349 = vmax.f32 %v5296, %v5297
  %v5350 = vmax.f32 %v5298, %v5299
  %v5351 = vmax.f32 %v5300, %v5301
  %v5352 = vmax.f32 %v5302, %v5303
  %v5353 = vmax.f32 %v5304, %v5305
  %v5354 = vmax.f32 %v5306, %v5307
  %v5355 = vmax.f32 %v5308, %v5309
  %v5356 = vmax.f32 %v5310, %v5311
  %v5357 = vmax.f32 %v5312, %v5313
  %v5358 = vmax.f32 %v5314, %v5315
  %v5359 = vmax.f32 %v5316, %v5317
  %v5360 = vmax.f32 %v5318, %v5319
  %v5361 = vmax.f32 %v5320, %v5321
  %v5362 = vmax.f32 %v5322, %v5342
  %v5363 = vmax.f32 %v5323, %v5343
  %v5364 = vmax.f32 %v5324, %v5344
  %v5365 = vmax.f32 %v5325, %v5345
  %v5366 = vmax.f32 %v5326, %v5346
  %v5367 = vmax.f32 %v5327, %v5347
  %v5368 = vmax.f32 %v5328, %v5348
  %v5369 = vmax.f32 %v5329, %v5349
  %v5370 = vmax.f32 %v5330, %v5350
  %v5371 = vmax.f32 %v5331, %v5351
  %v5372 = vmax.f32 %v5332, %v5352
  %v5373 = vmax.f32 %v5333, %v5353
  %v5374 = vmax.f32 %v5334, %v5354
  %v5375 = vmax.f32 %v5335, %v5355
  %v5376 = vmax.f32 %v5336, %v5356
  %v5377 = vmax.f32 %v5337, %v5357
  %v5378 = vmax.f32 %v5338, %v5358
  %v5379 = vmax.f32 %v5339, %v5359
  %v5380 = vmax.f32 %v5340, %v5360
  %v5381 = vmax.f32 %v5341, %v5361
  %v5382 = vld [vmem:[%s4] sm:$0x1]
  %v5384 = vlaneseq
  %v5385 = vshrl.u32 %v5384, 7
  %v5386 = vsub.s32 0, %v5385
  %v5387 = vrot.slane %v5382, %v5386
  %v5389 = vadd.f32 %v5362, %v5387
  %v5390 = vadd.f32 %v5363, %v5387
  %v5391 = vadd.f32 %v5364, %v5387
  %v5392 = vadd.f32 %v5365, %v5387
  %v5393 = vadd.f32 %v5366, %v5387
  %v5394 = vadd.f32 %v5367, %v5387
  %v5395 = vadd.f32 %v5368, %v5387
  %v5396 = vadd.f32 %v5369, %v5387
  %v5397 = vadd.f32 %v5370, %v5387
  %v5398 = vadd.f32 %v5371, %v5387
  %v5399 = vadd.f32 %v5372, %v5387
  %v5400 = vadd.f32 %v5373, %v5387
  %v5401 = vadd.f32 %v5374, %v5387
  %v5402 = vadd.f32 %v5375, %v5387
  %v5403 = vadd.f32 %v5376, %v5387
  %v5404 = vadd.f32 %v5377, %v5387
  %v5405 = vadd.f32 %v5378, %v5387
  %v5406 = vadd.f32 %v5379, %v5387
  %v5407 = vadd.f32 %v5380, %v5387
  %v5408 = vadd.f32 %v5381, %v5387
  %v5409 = vmax.f32 %v5389, 0.0
  %v5410 = vmax.f32 %v5390, 0.0
  %v5411 = vmax.f32 %v5391, 0.0
  %v5412 = vmax.f32 %v5392, 0.0
  %v5413 = vmax.f32 %v5393, 0.0
  %v5414 = vmax.f32 %v5394, 0.0
  %v5415 = vmax.f32 %v5395, 0.0
  %v5416 = vmax.f32 %v5396, 0.0
  %v5417 = vmax.f32 %v5397, 0.0
  %v5418 = vmax.f32 %v5398, 0.0
  %v5419 = vmax.f32 %v5399, 0.0
  %v5420 = vmax.f32 %v5400, 0.0
  %v5421 = vmax.f32 %v5401, 0.0
  %v5422 = vmax.f32 %v5402, 0.0
  %v5423 = vmax.f32 %v5403, 0.0
  %v5424 = vmax.f32 %v5404, 0.0
  %v5425 = vmax.f32 %v5405, 0.0
  %v5426 = vmax.f32 %v5406, 0.0
  %v5427 = vmax.f32 %v5407, 0.0
  %v5428 = vmax.f32 %v5408, 0.0
  %v5429 = vpack.c.bf16 %v5410, %v5409
  %v5430 = vpack.c.bf16 %v5412, %v5411
  %v5431 = vpack.c.bf16 %v5414, %v5413
  %v5432 = vpack.c.bf16 %v5416, %v5415
  %v5433 = vpack.c.bf16 %v5418, %v5417
  %v5434 = vpack.c.bf16 %v5420, %v5419
  %v5435 = vpack.c.bf16 %v5422, %v5421
  %v5436 = vpack.c.bf16 %v5424, %v5423
  %v5437 = vpack.c.bf16 %v5426, %v5425
  %v5438 = vpack.c.bf16 %v5428, %v5427
  %v5439 = vld [vmem:[%s5] sm:$0xf]
  %v5440 = vld [vmem:[%s5 + $0x4] sm:$0xf]
  %v5441 = vld [vmem:[%s5 + $0x8] sm:$0xf]
  %v5442 = vld [vmem:[%s5 + $0xc] sm:$0xf]
  %v5443 = vld [vmem:[%s5 + $0x10] sm:$0xf]
  %v5444 = vld [vmem:[%s5 + $0x14] sm:$0xf]
  %v5445 = vld [vmem:[%s5 + $0x18] sm:$0xf]
  %v5446 = vld [vmem:[%s5 + $0x1c] sm:$0xf]
  %v5447 = vld [vmem:[%s5 + $0x20] sm:$0xf]
  %v5448 = vld [vmem:[%s5 + $0x24] sm:$0xf]
  %v5449 = vld [vmem:[%s5 + $0x28] sm:$0xf]
  %v5450 = vld [vmem:[%s5 + $0x2c] sm:$0xf]
  %v5451 = vld [vmem:[%s5 + $0x30] sm:$0xf]
  %v5452 = vld [vmem:[%s5 + $0x34] sm:$0xf]
  %v5453 = vld [vmem:[%s5 + $0x38] sm:$0xf]
  %v5454 = vld [vmem:[%s5 + $0x3c] sm:$0xf]
  %s5455 = scalar_lea.vmem %s5, 64
  %v5456 = vld [vmem:[%s5455] sm:$0xf]
  %v5457 = vld [vmem:[%s5455 + $0x4] sm:$0xf]
  %v5458 = vld [vmem:[%s5455 + $0x8] sm:$0xf]
  %v5459 = vld [vmem:[%s5455 + $0xc] sm:$0xf]
  %v5460 = vld [vmem:[%s5455 + $0x10] sm:$0xf]
  %v5461 = vld [vmem:[%s5455 + $0x14] sm:$0xf]
  %v5462 = vld [vmem:[%s5455 + $0x18] sm:$0xf]
  %v5463 = vld [vmem:[%s5455 + $0x1c] sm:$0xf]
  %v5464 = vld [vmem:[%s5455 + $0x20] sm:$0xf]
  %v5465 = vld [vmem:[%s5455 + $0x24] sm:$0xf]
  %v5466 = vld [vmem:[%s5455 + $0x28] sm:$0xf]
  %v5467 = vld [vmem:[%s5455 + $0x2c] sm:$0xf]
  %v5468 = vld [vmem:[%s5455 + $0x30] sm:$0xf]
  %v5469 = vld [vmem:[%s5455 + $0x34] sm:$0xf]
  %v5470 = vld [vmem:[%s5455 + $0x38] sm:$0xf]
  %v5471 = vld [vmem:[%s5455 + $0x3c] sm:$0xf]
  %v5488 = vunpack.c.l.b16 %v5456
  %v5489 = vunpack.c.l.b16 %v5457
  %v5490 = vunpack.c.l.b16 %v5458
  %v5491 = vunpack.c.l.b16 %v5459
  %v5492 = vunpack.c.l.b16 %v5460
  %v5493 = vunpack.c.l.b16 %v5461
  %v5494 = vunpack.c.l.b16 %v5462
  %v5495 = vunpack.c.l.b16 %v5463
  %v5496 = vunpack.c.l.b16 %v5464
  %v5497 = vunpack.c.l.b16 %v5465
  %v5498 = vunpack.c.l.b16 %v5466
  %v5499 = vunpack.c.l.b16 %v5467
  %v5500 = vunpack.c.l.b16 %v5468
  %v5501 = vunpack.c.l.b16 %v5469
  %v5502 = vunpack.c.l.b16 %v5470
  %v5503 = vunpack.c.l.b16 %v5471
  %v5504 = vpack.c.b16 %v5489, %v5488
  %v5505 = vpack.c.b16 %v5491, %v5490
  %v5506 = vpack.c.b16 %v5493, %v5492
  %v5507 = vpack.c.b16 %v5495, %v5494
  %v5508 = vpack.c.b16 %v5497, %v5496
  %v5509 = vpack.c.b16 %v5499, %v5498
  %v5510 = vpack.c.b16 %v5501, %v5500
  %v5511 = vpack.c.b16 %v5503, %v5502
  %5520 = vmatprep.subr.bf16.mxu0 0
  %5521 = vmatpush1.bf16.msra.mxu0 %v5504
  %5522 = vmatprep.subr.bf16.mxu0 0
  %5523 = vmatpush1.bf16.msra.mxu0 %v5505
  %5524 = vmatprep.subr.bf16.mxu0 0
  %5525 = vmatpush1.bf16.msra.mxu0 %v5506
  %5526 = vmatprep.subr.bf16.mxu0 0
  %5527 = vmatpush1.bf16.msra.mxu0 %v5507
  %5528 = vmatprep.subr.bf16.mxu0 0
  %5529 = vmatpush1.bf16.msra.mxu0 %v5508
  %5530 = vmatprep.subr.bf16.mxu0 0
  %5531 = vmatpush1.bf16.msra.mxu0 %v5509
  %5532 = vmatprep.subr.bf16.mxu0 0
  %5533 = vmatpush1.bf16.msra.mxu0 %v5510
  %5534 = vmatprep.subr.bf16.mxu0 0
  %5535 = vmatpush1.bf16.msra.mxu0 %v5511
  %5536 = vmatprep.subr.bf16.mxu0 0
  %5537 = vmatpush1.bf16.msra.mxu0 0
  %5538 = vmatprep.subr.bf16.mxu0 0
  %5539 = vmatpush1.bf16.msra.mxu0 0
  %5540 = vmatprep.subr.bf16.mxu0 0
  %5541 = vmatpush1.bf16.msra.mxu0 0
  %5542 = vmatprep.subr.bf16.mxu0 0
  %5543 = vmatpush1.bf16.msra.mxu0 0
  %5544 = vmatprep.subr.bf16.mxu0 0
  %5545 = vmatpush1.bf16.msra.mxu0 0
  %5546 = vmatprep.subr.bf16.mxu0 0
  %5547 = vmatpush1.bf16.msra.mxu0 0
  %5548 = vmatprep.subr.bf16.mxu0 0
  %5549 = vmatpush1.bf16.msra.mxu0 0
  %5550 = vmatprep.subr.bf16.mxu0 0
  %5551 = vmatpush1.bf16.msra.mxu0 0
  %5552 = vmatprep.mubr.bf16.mxu0 0
  %5553 = vmatmul.mubr.bf16.gmra.mrb[0].mxu0 %v5431
  %v5554 = vpop.f32.mrb[0].mxu0
  %v5555 = vadd.f32 0.0, %v5554
  %v5556 = vpop.f32.mrb[0].mxu0
  %v5557 = vpop.f32.mrb[0].mxu0
  %v5558 = vadd.f32 0.0, %v5557
  %v5559 = vpop.f32.mrb[0].mxu0
  %5560 = vmatprep.mubr.bf16.mxu0 0
  %5561 = vmatmul.mubr.bf16.gmra.mrb[0].mxu0 %v5432
  %v5562 = vpop.f32.mrb[0].mxu0
  %v5563 = vadd.f32 0.0, %v5562
  %v5564 = vpop.f32.mrb[0].mxu0
  %v5565 = vpop.f32.mrb[0].mxu0
  %v5566 = vadd.f32 0.0, %v5565
  %v5567 = vpop.f32.mrb[0].mxu0
  %5568 = vdwg.mxu0
  %v5585 = vunpack.c.l.b16 %v5439
  %v5586 = vunpack.c.l.b16 %v5440
  %v5587 = vunpack.c.l.b16 %v5441
  %v5588 = vunpack.c.l.b16 %v5442
  %v5589 = vunpack.c.l.b16 %v5443
  %v5590 = vunpack.c.l.b16 %v5444
  %v5591 = vunpack.c.l.b16 %v5445
  %v5592 = vunpack.c.l.b16 %v5446
  %v5593 = vunpack.c.l.b16 %v5447
  %v5594 = vunpack.c.l.b16 %v5448
  %v5595 = vunpack.c.l.b16 %v5449
  %v5596 = vunpack.c.l.b16 %v5450
  %v5597 = vunpack.c.l.b16 %v5451
  %v5598 = vunpack.c.l.b16 %v5452
  %v5599 = vunpack.c.l.b16 %v5453
  %v5600 = vunpack.c.l.b16 %v5454
  %v5601 = vpack.c.b16 %v5586, %v5585
  %v5602 = vpack.c.b16 %v5588, %v5587
  %v5603 = vpack.c.b16 %v5590, %v5589
  %v5604 = vpack.c.b16 %v5592, %v5591
  %v5605 = vpack.c.b16 %v5594, %v5593
  %v5606 = vpack.c.b16 %v5596, %v5595
  %v5607 = vpack.c.b16 %v5598, %v5597
  %v5608 = vpack.c.b16 %v5600, %v5599
  %5617 = vmatprep.subr.bf16.mxu0 0
  %5618 = vmatpush1.bf16.msra.mxu0 %v5601
  %5619 = vmatprep.subr.bf16.mxu0 0
  %5620 = vmatpush1.bf16.msra.mxu0 %v5602
  %5621 = vmatprep.subr.bf16.mxu0 0
  %5622 = vmatpush1.bf16.msra.mxu0 %v5603
  %5623 = vmatprep.subr.bf16.mxu0 0
  %5624 = vmatpush1.bf16.msra.mxu0 %v5604
  %5625 = vmatprep.subr.bf16.mxu0 0
  %5626 = vmatpush1.bf16.msra.mxu0 %v5605
  %5627 = vmatprep.subr.bf16.mxu0 0
  %5628 = vmatpush1.bf16.msra.mxu0 %v5606
  %5629 = vmatprep.subr.bf16.mxu0 0
  %5630 = vmatpush1.bf16.msra.mxu0 %v5607
  %5631 = vmatprep.subr.bf16.mxu0 0
  %5632 = vmatpush1.bf16.msra.mxu0 %v5608
  %5633 = vmatprep.subr.bf16.mxu0 0
  %5634 = vmatpush1.bf16.msra.mxu0 0
  %5635 = vmatprep.subr.bf16.mxu0 0
  %5636 = vmatpush1.bf16.msra.mxu0 0
  %5637 = vmatprep.subr.bf16.mxu0 0
  %5638 = vmatpush1.bf16.msra.mxu0 0
  %5639 = vmatprep.subr.bf16.mxu0 0
  %5640 = vmatpush1.bf16.msra.mxu0 0
  %5641 = vmatprep.subr.bf16.mxu0 0
  %5642 = vmatpush1.bf16.msra.mxu0 0
  %5643 = vmatprep.subr.bf16.mxu0 0
  %5644 = vmatpush1.bf16.msra.mxu0 0
  %5645 = vmatprep.subr.bf16.mxu0 0
  %5646 = vmatpush1.bf16.msra.mxu0 0
  %5647 = vmatprep.subr.bf16.mxu0 0
  %5648 = vmatpush1.bf16.msra.mxu0 0
  %5649 = vmatprep.mubr.bf16.mxu0 0
  %5650 = vmatmul.mubr.bf16.gmra.mrb[0].mxu0 %v5429
  %v5651 = vpop.f32.mrb[0].mxu0
  %v5652 = vadd.f32 %v5555, %v5651
  %v5653 = vpop.f32.mrb[0].mxu0
  %v5654 = vpop.f32.mrb[0].mxu0
  %v5655 = vadd.f32 %v5558, %v5654
  %v5656 = vpop.f32.mrb[0].mxu0
  %5657 = vmatprep.mubr.bf16.mxu0 0
  %5658 = vmatmul.mubr.bf16.gmra.mrb[0].mxu0 %v5430
  %v5659 = vpop.f32.mrb[0].mxu0
  %v5660 = vadd.f32 %v5563, %v5659
  %v5661 = vpop.f32.mrb[0].mxu0
  %v5662 = vpop.f32.mrb[0].mxu0
  %v5663 = vadd.f32 %v5566, %v5662
  %v5664 = vpop.f32.mrb[0].mxu0
  %5665 = vdwg.mxu0
  %s5666 = scalar_lea.vmem %s5, 128
  %v5667 = vld [vmem:[%s5666] sm:$0xf]
  %v5668 = vld [vmem:[%s5666 + $0x4] sm:$0xf]
  %v5669 = vld [vmem:[%s5666 + $0x8] sm:$0xf]
  %v5670 = vld [vmem:[%s5666 + $0xc] sm:$0xf]
  %v5671 = vld [vmem:[%s5666 + $0x10] sm:$0xf]
  %v5672 = vld [vmem:[%s5666 + $0x14] sm:$0xf]
  %v5673 = vld [vmem:[%s5666 + $0x18] sm:$0xf]
  %v5674 = vld [vmem:[%s5666 + $0x1c] sm:$0xf]
  %v5675 = vld [vmem:[%s5666 + $0x20] sm:$0xf]
  %v5676 = vld [vmem:[%s5666 + $0x24] sm:$0xf]
  %v5677 = vld [vmem:[%s5666 + $0x28] sm:$0xf]
  %v5678 = vld [vmem:[%s5666 + $0x2c] sm:$0xf]
  %v5679 = vld [vmem:[%s5666 + $0x30] sm:$0xf]
  %v5680 = vld [vmem:[%s5666 + $0x34] sm:$0xf]
  %v5681 = vld [vmem:[%s5666 + $0x38] sm:$0xf]
  %v5682 = vld [vmem:[%s5666 + $0x3c] sm:$0xf]
  %v5699 = vunpack.c.l.b16 %v5667
  %v5700 = vunpack.c.l.b16 %v5668
  %v5701 = vunpack.c.l.b16 %v5669
  %v5702 = vunpack.c.l.b16 %v5670
  %v5703 = vunpack.c.l.b16 %v5671
  %v5704 = vunpack.c.l.b16 %v5672
  %v5705 = vunpack.c.l.b16 %v5673
  %v5706 = vunpack.c.l.b16 %v5674
  %v5707 = vunpack.c.l.b16 %v5675
  %v5708 = vunpack.c.l.b16 %v5676
  %v5709 = vunpack.c.l.b16 %v5677
  %v5710 = vunpack.c.l.b16 %v5678
  %v5711 = vunpack.c.l.b16 %v5679
  %v5712 = vunpack.c.l.b16 %v5680
  %v5713 = vunpack.c.l.b16 %v5681
  %v5714 = vunpack.c.l.b16 %v5682
  %v5715 = vpack.c.b16 %v5700, %v5699
  %v5716 = vpack.c.b16 %v5702, %v5701
  %v5717 = vpack.c.b16 %v5704, %v5703
  %v5718 = vpack.c.b16 %v5706, %v5705
  %v5719 = vpack.c.b16 %v5708, %v5707
  %v5720 = vpack.c.b16 %v5710, %v5709
  %v5721 = vpack.c.b16 %v5712, %v5711
  %v5722 = vpack.c.b16 %v5714, %v5713
  %5731 = vmatprep.subr.bf16.mxu0 0
  %5732 = vmatpush1.bf16.msra.mxu0 %v5715
  %5733 = vmatprep.subr.bf16.mxu0 0
  %5734 = vmatpush1.bf16.msra.mxu0 %v5716
  %5735 = vmatprep.subr.bf16.mxu0 0
  %5736 = vmatpush1.bf16.msra.mxu0 %v5717
  %5737 = vmatprep.subr.bf16.mxu0 0
  %5738 = vmatpush1.bf16.msra.mxu0 %v5718
  %5739 = vmatprep.subr.bf16.mxu0 0
  %5740 = vmatpush1.bf16.msra.mxu0 %v5719
  %5741 = vmatprep.subr.bf16.mxu0 0
  %5742 = vmatpush1.bf16.msra.mxu0 %v5720
  %5743 = vmatprep.subr.bf16.mxu0 0
  %5744 = vmatpush1.bf16.msra.mxu0 %v5721
  %5745 = vmatprep.subr.bf16.mxu0 0
  %5746 = vmatpush1.bf16.msra.mxu0 %v5722
  %5747 = vmatprep.subr.bf16.mxu0 0
  %5748 = vmatpush1.bf16.msra.mxu0 0
  %5749 = vmatprep.subr.bf16.mxu0 0
  %5750 = vmatpush1.bf16.msra.mxu0 0
  %5751 = vmatprep.subr.bf16.mxu0 0
  %5752 = vmatpush1.bf16.msra.mxu0 0
  %5753 = vmatprep.subr.bf16.mxu0 0
  %5754 = vmatpush1.bf16.msra.mxu0 0
  %5755 = vmatprep.subr.bf16.mxu0 0
  %5756 = vmatpush1.bf16.msra.mxu0 0
  %5757 = vmatprep.subr.bf16.mxu0 0
  %5758 = vmatpush1.bf16.msra.mxu0 0
  %5759 = vmatprep.subr.bf16.mxu0 0
  %5760 = vmatpush1.bf16.msra.mxu0 0
  %5761 = vmatprep.subr.bf16.mxu0 0
  %5762 = vmatpush1.bf16.msra.mxu0 0
  %5763 = vmatprep.mubr.bf16.mxu0 0
  %5764 = vmatmul.mubr.bf16.gmra.mrb[0].mxu0 %v5433
  %v5765 = vpop.f32.mrb[0].mxu0
  %v5766 = vadd.f32 0.0, %v5765
  %v5767 = vpop.f32.mrb[0].mxu0
  %v5768 = vpop.f32.mrb[0].mxu0
  %v5769 = vadd.f32 0.0, %v5768
  %v5770 = vpop.f32.mrb[0].mxu0
  %5771 = vmatprep.mubr.bf16.mxu0 0
  %5772 = vmatmul.mubr.bf16.gmra.mrb[0].mxu0 %v5434
  %v5773 = vpop.f32.mrb[0].mxu0
  %v5774 = vadd.f32 0.0, %v5773
  %v5775 = vpop.f32.mrb[0].mxu0
  %v5776 = vpop.f32.mrb[0].mxu0
  %v5777 = vadd.f32 0.0, %v5776
  %v5778 = vpop.f32.mrb[0].mxu0
  %5779 = vdwg.mxu0
  %v5780 = vadd.f32 %v5652, %v5766
  %v5781 = vadd.f32 %v5655, %v5769
  %v5782 = vadd.f32 %v5660, %v5774
  %v5783 = vadd.f32 %v5663, %v5777
  %s5784 = scalar_lea.vmem %s5, 192
  %v5785 = vld [vmem:[%s5784] sm:$0xf]
  %v5786 = vld [vmem:[%s5784 + $0x4] sm:$0xf]
  %v5787 = vld [vmem:[%s5784 + $0x8] sm:$0xf]
  %v5788 = vld [vmem:[%s5784 + $0xc] sm:$0xf]
  %v5789 = vld [vmem:[%s5784 + $0x10] sm:$0xf]
  %v5790 = vld [vmem:[%s5784 + $0x14] sm:$0xf]
  %v5791 = vld [vmem:[%s5784 + $0x18] sm:$0xf]
  %v5792 = vld [vmem:[%s5784 + $0x1c] sm:$0xf]
  %v5793 = vld [vmem:[%s5784 + $0x20] sm:$0xf]
  %v5794 = vld [vmem:[%s5784 + $0x24] sm:$0xf]
  %v5795 = vld [vmem:[%s5784 + $0x28] sm:$0xf]
  %v5796 = vld [vmem:[%s5784 + $0x2c] sm:$0xf]
  %v5797 = vld [vmem:[%s5784 + $0x30] sm:$0xf]
  %v5798 = vld [vmem:[%s5784 + $0x34] sm:$0xf]
  %v5799 = vld [vmem:[%s5784 + $0x38] sm:$0xf]
  %v5800 = vld [vmem:[%s5784 + $0x3c] sm:$0xf]
  %v5817 = vunpack.c.l.b16 %v5785
  %v5818 = vunpack.c.l.b16 %v5786
  %v5819 = vunpack.c.l.b16 %v5787
  %v5820 = vunpack.c.l.b16 %v5788
  %v5821 = vunpack.c.l.b16 %v5789
  %v5822 = vunpack.c.l.b16 %v5790
  %v5823 = vunpack.c.l.b16 %v5791
  %v5824 = vunpack.c.l.b16 %v5792
  %v5825 = vunpack.c.l.b16 %v5793
  %v5826 = vunpack.c.l.b16 %v5794
  %v5827 = vunpack.c.l.b16 %v5795
  %v5828 = vunpack.c.l.b16 %v5796
  %v5829 = vunpack.c.l.b16 %v5797
  %v5830 = vunpack.c.l.b16 %v5798
  %v5831 = vunpack.c.l.b16 %v5799
  %v5832 = vunpack.c.l.b16 %v5800
  %v5833 = vpack.c.b16 %v5818, %v5817
  %v5834 = vpack.c.b16 %v5820, %v5819
  %v5835 = vpack.c.b16 %v5822, %v5821
  %v5836 = vpack.c.b16 %v5824, %v5823
  %v5837 = vpack.c.b16 %v5826, %v5825
  %v5838 = vpack.c.b16 %v5828, %v5827
  %v5839 = vpack.c.b16 %v5830, %v5829
  %v5840 = vpack.c.b16 %v5832, %v5831
  %5849 = vmatprep.subr.bf16.mxu0 0
  %5850 = vmatpush1.bf16.msra.mxu0 %v5833
  %5851 = vmatprep.subr.bf16.mxu0 0
  %5852 = vmatpush1.bf16.msra.mxu0 %v5834
  %5853 = vmatprep.subr.bf16.mxu0 0
  %5854 = vmatpush1.bf16.msra.mxu0 %v5835
  %5855 = vmatprep.subr.bf16.mxu0 0
  %5856 = vmatpush1.bf16.msra.mxu0 %v5836
  %5857 = vmatprep.subr.bf16.mxu0 0
  %5858 = vmatpush1.bf16.msra.mxu0 %v5837
  %5859 = vmatprep.subr.bf16.mxu0 0
  %5860 = vmatpush1.bf16.msra.mxu0 %v5838
  %5861 = vmatprep.subr.bf16.mxu0 0
  %5862 = vmatpush1.bf16.msra.mxu0 %v5839
  %5863 = vmatprep.subr.bf16.mxu0 0
  %5864 = vmatpush1.bf16.msra.mxu0 %v5840
  %5865 = vmatprep.subr.bf16.mxu0 0
  %5866 = vmatpush1.bf16.msra.mxu0 0
  %5867 = vmatprep.subr.bf16.mxu0 0
  %5868 = vmatpush1.bf16.msra.mxu0 0
  %5869 = vmatprep.subr.bf16.mxu0 0
  %5870 = vmatpush1.bf16.msra.mxu0 0
  %5871 = vmatprep.subr.bf16.mxu0 0
  %5872 = vmatpush1.bf16.msra.mxu0 0
  %5873 = vmatprep.subr.bf16.mxu0 0
  %5874 = vmatpush1.bf16.msra.mxu0 0
  %5875 = vmatprep.subr.bf16.mxu0 0
  %5876 = vmatpush1.bf16.msra.mxu0 0
  %5877 = vmatprep.subr.bf16.mxu0 0
  %5878 = vmatpush1.bf16.msra.mxu0 0
  %5879 = vmatprep.subr.bf16.mxu0 0
  %5880 = vmatpush1.bf16.msra.mxu0 0
  %5881 = vmatprep.mubr.bf16.mxu0 0
  %5882 = vmatmul.mubr.bf16.gmra.mrb[0].mxu0 %v5435
  %v5883 = vpop.f32.mrb[0].mxu0
  %v5884 = vadd.f32 0.0, %v5883
  %v5885 = vpop.f32.mrb[0].mxu0
  %v5886 = vpop.f32.mrb[0].mxu0
  %v5887 = vadd.f32 0.0, %v5886
  %v5888 = vpop.f32.mrb[0].mxu0
  %5889 = vmatprep.mubr.bf16.mxu0 0
  %5890 = vmatmul.mubr.bf16.gmra.mrb[0].mxu0 %v5436
  %v5891 = vpop.f32.mrb[0].mxu0
  %v5892 = vadd.f32 0.0, %v5891
  %v5893 = vpop.f32.mrb[0].mxu0
  %v5894 = vpop.f32.mrb[0].mxu0
  %v5895 = vadd.f32 0.0, %v5894
  %v5896 = vpop.f32.mrb[0].mxu0
  %5897 = vdwg.mxu0
  %v5898 = vadd.f32 %v5780, %v5884
  %v5899 = vadd.f32 %v5781, %v5887
  %v5900 = vadd.f32 %v5782, %v5892
  %v5901 = vadd.f32 %v5783, %v5895
  %s5902 = scalar_lea.vmem %s5, 256
  %v5903 = vld [vmem:[%s5902] sm:$0xf]
  %v5904 = vld [vmem:[%s5902 + $0x4] sm:$0xf]
  %v5905 = vld [vmem:[%s5902 + $0x8] sm:$0xf]
  %v5906 = vld [vmem:[%s5902 + $0xc] sm:$0xf]
  %v5907 = vld [vmem:[%s5902 + $0x10] sm:$0xf]
  %v5908 = vld [vmem:[%s5902 + $0x14] sm:$0xf]
  %v5909 = vld [vmem:[%s5902 + $0x18] sm:$0xf]
  %v5910 = vld [vmem:[%s5902 + $0x1c] sm:$0xf]
  %v5911 = vld [vmem:[%s5902 + $0x20] sm:$0xf]
  %v5912 = vld [vmem:[%s5902 + $0x24] sm:$0xf]
  %v5913 = vld [vmem:[%s5902 + $0x28] sm:$0xf]
  %v5914 = vld [vmem:[%s5902 + $0x2c] sm:$0xf]
  %v5915 = vld [vmem:[%s5902 + $0x30] sm:$0xf]
  %v5916 = vld [vmem:[%s5902 + $0x34] sm:$0xf]
  %v5917 = vld [vmem:[%s5902 + $0x38] sm:$0xf]
  %v5918 = vld [vmem:[%s5902 + $0x3c] sm:$0xf]
  %v5935 = vunpack.c.l.b16 %v5903
  %v5936 = vunpack.c.l.b16 %v5904
  %v5937 = vunpack.c.l.b16 %v5905
  %v5938 = vunpack.c.l.b16 %v5906
  %v5939 = vunpack.c.l.b16 %v5907
  %v5940 = vunpack.c.l.b16 %v5908
  %v5941 = vunpack.c.l.b16 %v5909
  %v5942 = vunpack.c.l.b16 %v5910
  %v5943 = vunpack.c.l.b16 %v5911
  %v5944 = vunpack.c.l.b16 %v5912
  %v5945 = vunpack.c.l.b16 %v5913
  %v5946 = vunpack.c.l.b16 %v5914
  %v5947 = vunpack.c.l.b16 %v5915
  %v5948 = vunpack.c.l.b16 %v5916
  %v5949 = vunpack.c.l.b16 %v5917
  %v5950 = vunpack.c.l.b16 %v5918
  %v5951 = vpack.c.b16 %v5936, %v5935
  %v5952 = vpack.c.b16 %v5938, %v5937
  %v5953 = vpack.c.b16 %v5940, %v5939
  %v5954 = vpack.c.b16 %v5942, %v5941
  %v5955 = vpack.c.b16 %v5944, %v5943
  %v5956 = vpack.c.b16 %v5946, %v5945
  %v5957 = vpack.c.b16 %v5948, %v5947
  %v5958 = vpack.c.b16 %v5950, %v5949
  %5967 = vmatprep.subr.bf16.mxu0 0
  %5968 = vmatpush1.bf16.msra.mxu0 %v5951
  %5969 = vmatprep.subr.bf16.mxu0 0
  %5970 = vmatpush1.bf16.msra.mxu0 %v5952
  %5971 = vmatprep.subr.bf16.mxu0 0
  %5972 = vmatpush1.bf16.msra.mxu0 %v5953
  %5973 = vmatprep.subr.bf16.mxu0 0
  %5974 = vmatpush1.bf16.msra.mxu0 %v5954
  %5975 = vmatprep.subr.bf16.mxu0 0
  %5976 = vmatpush1.bf16.msra.mxu0 %v5955
  %5977 = vmatprep.subr.bf16.mxu0 0
  %5978 = vmatpush1.bf16.msra.mxu0 %v5956
  %5979 = vmatprep.subr.bf16.mxu0 0
  %5980 = vmatpush1.bf16.msra.mxu0 %v5957
  %5981 = vmatprep.subr.bf16.mxu0 0
  %5982 = vmatpush1.bf16.msra.mxu0 %v5958
  %5983 = vmatprep.subr.bf16.mxu0 0
  %5984 = vmatpush1.bf16.msra.mxu0 0
  %5985 = vmatprep.subr.bf16.mxu0 0
  %5986 = vmatpush1.bf16.msra.mxu0 0
  %5987 = vmatprep.subr.bf16.mxu0 0
  %5988 = vmatpush1.bf16.msra.mxu0 0
  %5989 = vmatprep.subr.bf16.mxu0 0
  %5990 = vmatpush1.bf16.msra.mxu0 0
  %5991 = vmatprep.subr.bf16.mxu0 0
  %5992 = vmatpush1.bf16.msra.mxu0 0
  %5993 = vmatprep.subr.bf16.mxu0 0
  %5994 = vmatpush1.bf16.msra.mxu0 0
  %5995 = vmatprep.subr.bf16.mxu0 0
  %5996 = vmatpush1.bf16.msra.mxu0 0
  %5997 = vmatprep.subr.bf16.mxu0 0
  %5998 = vmatpush1.bf16.msra.mxu0 0
  %5999 = vmatprep.mubr.bf16.mxu0 0
  %6000 = vmatmul.mubr.bf16.gmra.mrb[0].mxu0 %v5437
  %v6001 = vpop.f32.mrb[0].mxu0
  %v6002 = vadd.f32 0.0, %v6001
  %v6003 = vpop.f32.mrb[0].mxu0
  %v6004 = vpop.f32.mrb[0].mxu0
  %v6005 = vadd.f32 0.0, %v6004
  %v6006 = vpop.f32.mrb[0].mxu0
  %6007 = vmatprep.mubr.bf16.mxu0 0
  %6008 = vmatmul.mubr.bf16.gmra.mrb[0].mxu0 %v5438
  %v6009 = vpop.f32.mrb[0].mxu0
  %v6010 = vadd.f32 0.0, %v6009
  %v6011 = vpop.f32.mrb[0].mxu0
  %v6012 = vpop.f32.mrb[0].mxu0
  %v6013 = vadd.f32 0.0, %v6012
  %v6014 = vpop.f32.mrb[0].mxu0
  %6015 = vdwg.mxu0
  %v6016 = vadd.f32 %v5898, %v6002
  %v6017 = vadd.f32 %v5899, %v6005
  %v6018 = vadd.f32 %v5900, %v6010
  %v6019 = vadd.f32 %v5901, %v6013
  %v6020 = vld [vmem:[%s6] sm:$0x1]
  %v6022 = vlaneseq
  %v6023 = vshrl.u32 %v6022, 7
  %v6024 = vsub.s32 0, %v6023
  %v6025 = vrot.slane %v6020, %v6024
  %v6027 = vadd.f32 %v6016, %v6025
  %v6028 = vadd.f32 %v6017, %v6025
  %v6029 = vadd.f32 %v6018, %v6025
  %v6030 = vadd.f32 %v6019, %v6025
  %v6031 = vmax.f32 %v6027, 0.0
  %v6032 = vmax.f32 %v6028, 0.0
  %v6033 = vmax.f32 %v6029, 0.0
  %v6034 = vmax.f32 %v6030, 0.0
  %v6035 = vpack.c.bf16 %v6032, %v6031
  %v6036 = vpack.c.bf16 %v6034, %v6033
  %v6037 = vld [vmem:[%s7] sm:$0xf]
  %v6038 = vld [vmem:[%s7 + $0x4] sm:$0xf]
  %v6039 = vld [vmem:[%s7 + $0x8] sm:$0xf]
  %v6040 = vld [vmem:[%s7 + $0xc] sm:$0xf]
  %v6041 = vld [vmem:[%s7 + $0x10] sm:$0xf]
  %v6042 = vld [vmem:[%s7 + $0x14] sm:$0xf]
  %v6043 = vld [vmem:[%s7 + $0x18] sm:$0xf]
  %v6044 = vld [vmem:[%s7 + $0x1c] sm:$0xf]
  %v6045 = vld [vmem:[%s7 + $0x20] sm:$0xf]
  %v6046 = vld [vmem:[%s7 + $0x24] sm:$0xf]
  %v6047 = vld [vmem:[%s7 + $0x28] sm:$0xf]
  %v6048 = vld [vmem:[%s7 + $0x2c] sm:$0xf]
  %v6049 = vld [vmem:[%s7 + $0x30] sm:$0xf]
  %v6050 = vld [vmem:[%s7 + $0x34] sm:$0xf]
  %v6051 = vld [vmem:[%s7 + $0x38] sm:$0xf]
  %v6052 = vld [vmem:[%s8] sm:$0x1]
  %v6054 = vlaneseq
  %v6055 = vshrl.u32 %v6054, 7
  %v6056 = vsub.s32 0, %v6055
  %v6057 = vrot.slane %v6052, %v6056
  %v6074 = vunpack.c.l.b16 %v6037
  %v6075 = vunpack.c.l.b16 %v6038
  %v6076 = vunpack.c.l.b16 %v6039
  %v6077 = vunpack.c.l.b16 %v6040
  %v6078 = vunpack.c.l.b16 %v6041
  %v6079 = vunpack.c.l.b16 %v6042
  %v6080 = vunpack.c.l.b16 %v6043
  %v6081 = vunpack.c.l.b16 %v6044
  %v6082 = vunpack.c.l.b16 %v6045
  %v6083 = vunpack.c.l.b16 %v6046
  %v6084 = vunpack.c.l.b16 %v6047
  %v6085 = vunpack.c.l.b16 %v6048
  %v6086 = vunpack.c.l.b16 %v6049
  %v6087 = vunpack.c.l.b16 %v6050
  %v6088 = vunpack.c.l.b16 %v6051
  %v6089 = vpack.c.b16 %v6075, %v6074
  %v6090 = vpack.c.b16 %v6077, %v6076
  %v6091 = vpack.c.b16 %v6079, %v6078
  %v6092 = vpack.c.b16 %v6081, %v6080
  %v6093 = vpack.c.b16 %v6083, %v6082
  %v6094 = vpack.c.b16 %v6085, %v6084
  %v6095 = vpack.c.b16 %v6087, %v6086
  %v6096 = vpack.c.b16 %v6088, %v6088
  %vm6104 = vcmask 982016
  %v6106 = vsel %vm6104, %v6035, 0
  %v6109 = vsel %vm6104, %v6036, 0
  %vm6111 = vcmask 1043456
  %v6113 = vsel %vm6111, %v6096, 0
  %6115 = vmatprep.subr.bf16.mxu0 0
  %6116 = vmatpush1.bf16.msra.mxu0 %v6089
  %6117 = vmatprep.subr.bf16.mxu0 0
  %6118 = vmatpush1.bf16.msra.mxu0 %v6090
  %6119 = vmatprep.subr.bf16.mxu0 0
  %6120 = vmatpush1.bf16.msra.mxu0 %v6091
  %6121 = vmatprep.subr.bf16.mxu0 0
  %6122 = vmatpush1.bf16.msra.mxu0 %v6092
  %6123 = vmatprep.subr.bf16.mxu0 0
  %6124 = vmatpush1.bf16.msra.mxu0 %v6093
  %6125 = vmatprep.subr.bf16.mxu0 0
  %6126 = vmatpush1.bf16.msra.mxu0 %v6094
  %6127 = vmatprep.subr.bf16.mxu0 0
  %6128 = vmatpush1.bf16.msra.mxu0 %v6095
  %6129 = vmatprep.subr.bf16.mxu0 0
  %6130 = vmatpush1.bf16.msra.mxu0 %v6113
  %6131 = vmatprep.subr.bf16.mxu0 0
  %6132 = vmatpush1.bf16.msra.mxu0 0
  %6133 = vmatprep.subr.bf16.mxu0 0
  %6134 = vmatpush1.bf16.msra.mxu0 0
  %6135 = vmatprep.subr.bf16.mxu0 0
  %6136 = vmatpush1.bf16.msra.mxu0 0
  %6137 = vmatprep.subr.bf16.mxu0 0
  %6138 = vmatpush1.bf16.msra.mxu0 0
  %6139 = vmatprep.subr.bf16.mxu0 0
  %6140 = vmatpush1.bf16.msra.mxu0 0
  %6141 = vmatprep.subr.bf16.mxu0 0
  %6142 = vmatpush1.bf16.msra.mxu0 0
  %6143 = vmatprep.subr.bf16.mxu0 0
  %6144 = vmatpush1.bf16.msra.mxu0 0
  %6145 = vmatprep.subr.bf16.mxu0 0
  %6146 = vmatpush1.bf16.msra.mxu0 0
  %6147 = vmatprep.mubr.bf16.mxu0 0
  %6148 = vmatmul.mubr.bf16.gmra.mrb[0].mxu0 %v6106
  %v6149 = vpop.f32.mrb[0].mxu0
  %v6150 = vadd.f32 %v6057, %v6149
  %v6151 = vpop.f32.mrb[0].mxu0
  %v6152 = vpop.f32.mrb[0].mxu0
  %v6153 = vadd.f32 %v6057, %v6152
  %v6154 = vpop.f32.mrb[0].mxu0
  %6155 = vmatprep.mubr.bf16.mxu0 0
  %6156 = vmatmul.mubr.bf16.gmra.mrb[0].mxu0 %v6109
  %v6157 = vpop.f32.mrb[0].mxu0
  %v6158 = vadd.f32 %v6057, %v6157
  %v6159 = vpop.f32.mrb[0].mxu0
  %v6160 = vpop.f32.mrb[0].mxu0
  %v6161 = vadd.f32 %v6057, %v6160
  %v6162 = vpop.f32.mrb[0].mxu0
  %6163 = vdwg.mxu0
  %v6164 = vmax.f32 %v6150, 0.0
  %v6165 = vmax.f32 %v6153, 0.0
  %v6166 = vmax.f32 %v6158, 0.0
  %v6167 = vmax.f32 %v6161, 0.0
  %v6168 = vpack.c.bf16 %v6165, %v6164
  %v6169 = vpack.c.bf16 %v6167, %v6166
  %v6170 = vld [vmem:[%s9] sm:$0xf]
  %v6171 = vld [vmem:[%s9 + $0x4] sm:$0xf]
  %v6172 = vld [vmem:[%s9 + $0x8] sm:$0xf]
  %v6173 = vld [vmem:[%s9 + $0xc] sm:$0xf]
  %v6174 = vld [vmem:[%s9 + $0x10] sm:$0xf]
  %v6175 = vld [vmem:[%s9 + $0x14] sm:$0xf]
  %v6176 = vld [vmem:[%s9 + $0x18] sm:$0xf]
  %v6177 = vld [vmem:[%s9 + $0x1c] sm:$0xf]
  %v6178 = vld [vmem:[%s9 + $0x20] sm:$0xf]
  %v6179 = vld [vmem:[%s9 + $0x24] sm:$0xf]
  %v6180 = vld [vmem:[%s9 + $0x28] sm:$0x3]
  %v6181 = vld [vmem:[%s10] sm:$0x1]
  %v6183 = vlaneseq
  %v6184 = vshrl.u32 %v6183, 7
  %v6185 = vsub.s32 0, %v6184
  %v6186 = vrot.slane %v6181, %v6185
  %v6199 = vunpack.c.l.b16 %v6170
  %v6200 = vunpack.c.l.b16 %v6171
  %v6201 = vunpack.c.l.b16 %v6172
  %v6202 = vunpack.c.l.b16 %v6173
  %v6203 = vunpack.c.l.b16 %v6174
  %v6204 = vunpack.c.l.b16 %v6175
  %v6205 = vunpack.c.l.b16 %v6176
  %v6206 = vunpack.c.l.b16 %v6177
  %v6207 = vunpack.c.l.b16 %v6178
  %v6208 = vunpack.c.l.b16 %v6179
  %v6209 = vunpack.c.l.b16 %v6180
  %v6210 = vpack.c.b16 %v6200, %v6199
  %v6211 = vpack.c.b16 %v6202, %v6201
  %v6212 = vpack.c.b16 %v6204, %v6203
  %v6213 = vpack.c.b16 %v6206, %v6205
  %v6214 = vpack.c.b16 %v6208, %v6207
  %v6215 = vpack.c.b16 %v6209, %v6209
  %vm6221 = vcmask 687104
  %v6223 = vsel %vm6221, %v6168, 0
  %v6226 = vsel %vm6221, %v6169, 0
  %vm6228 = vcmask 1041408
  %v6230 = vsel %vm6228, %v6215, 0
  %6232 = vmatprep.subr.bf16.mxu0 0
  %6233 = vmatpush1.bf16.msra.mxu0 %v6210
  %6234 = vmatprep.subr.bf16.mxu0 0
  %6235 = vmatpush1.bf16.msra.mxu0 %v6211
  %6236 = vmatprep.subr.bf16.mxu0 0
  %6237 = vmatpush1.bf16.msra.mxu0 %v6212
  %6238 = vmatprep.subr.bf16.mxu0 0
  %6239 = vmatpush1.bf16.msra.mxu0 %v6213
  %6240 = vmatprep.subr.bf16.mxu0 0
  %6241 = vmatpush1.bf16.msra.mxu0 %v6214
  %6242 = vmatprep.subr.bf16.mxu0 0
  %6243 = vmatpush1.bf16.msra.mxu0 %v6230
  %6244 = vmatprep.subr.bf16.mxu0 0
  %6245 = vmatpush1.bf16.msra.mxu0 0
  %6246 = vmatprep.subr.bf16.mxu0 0
  %6247 = vmatpush1.bf16.msra.mxu0 0
  %6248 = vmatprep.subr.bf16.mxu0 0
  %6249 = vmatpush1.bf16.msra.mxu0 0
  %6250 = vmatprep.subr.bf16.mxu0 0
  %6251 = vmatpush1.bf16.msra.mxu0 0
  %6252 = vmatprep.subr.bf16.mxu0 0
  %6253 = vmatpush1.bf16.msra.mxu0 0
  %6254 = vmatprep.subr.bf16.mxu0 0
  %6255 = vmatpush1.bf16.msra.mxu0 0
  %6256 = vmatprep.subr.bf16.mxu0 0
  %6257 = vmatpush1.bf16.msra.mxu0 0
  %6258 = vmatprep.subr.bf16.mxu0 0
  %6259 = vmatpush1.bf16.msra.mxu0 0
  %6260 = vmatprep.subr.bf16.mxu0 0
  %6261 = vmatpush1.bf16.msra.mxu0 0
  %6262 = vmatprep.subr.bf16.mxu0 0
  %6263 = vmatpush1.bf16.msra.mxu0 0
  %6264 = vmatprep.mubr.bf16.mxu0 0
  %6265 = vmatmul.mubr.bf16.gmra.mrb[0].mxu0 %v6223
  %v6266 = vpop.f32.mrb[0].mxu0
  %v6267 = vadd.f32 %v6186, %v6266
  %v6268 = vpop.f32.mrb[0].mxu0
  %v6269 = vpop.f32.mrb[0].mxu0
  %v6270 = vadd.f32 %v6186, %v6269
  %v6271 = vpop.f32.mrb[0].mxu0
  %6272 = vmatprep.mubr.bf16.mxu0 0
  %6273 = vmatmul.mubr.bf16.gmra.mrb[0].mxu0 %v6226
  %v6274 = vpop.f32.mrb[0].mxu0
  %v6275 = vadd.f32 %v6186, %v6274
  %v6276 = vpop.f32.mrb[0].mxu0
  %v6277 = vpop.f32.mrb[0].mxu0
  %v6278 = vadd.f32 %v6186, %v6277
  %v6279 = vpop.f32.mrb[0].mxu0
  %6280 = vdwg.mxu0
  %6281 = vmax.xlane.f32.xlu0 %v6267
  %v6282 = vpop.xlane.xlu0 %6281
  %6283 = vmax.xlane.f32.xlu0 %v6270
  %v6284 = vpop.xlane.xlu0 %6283
  %6285 = vmax.xlane.f32.xlu0 %v6275
  %v6286 = vpop.xlane.xlu0 %6285
  %6287 = vmax.xlane.f32.xlu0 %v6278
  %v6288 = vpop.xlane.xlu0 %6287
  %v6289 = vsub.f32 %v6267, %v6282
  %v6290 = vsub.f32 %v6270, %v6284
  %v6291 = vsub.f32 %v6275, %v6286
  %v6292 = vsub.f32 %v6278, %v6288
  %v6293 = vmul.f32 %v6289, 1.442695
  %v6294 = vpow.pop %v6293
  %v6295 = vmul.f32 %v6290, 1.442695
  %v6296 = vpow.pop %v6295
  %v6297 = vmul.f32 %v6291, 1.442695
  %v6298 = vpow.pop %v6297
  %v6299 = vmul.f32 %v6292, 1.442695
  %v6300 = vpow.pop %v6299
  %6301 = vadd.xlane.f32.xlu0 %v6294
  %v6302 = vpop.xlane.xlu0 %6301
  %6303 = vadd.xlane.f32.xlu0 %v6296
  %v6304 = vpop.xlane.xlu0 %6303
  %6305 = vadd.xlane.f32.xlu0 %v6298
  %v6306 = vpop.xlane.xlu0 %6305
  %6307 = vadd.xlane.f32.xlu0 %v6300
  %v6308 = vpop.xlane.xlu0 %6307
  %v6309 = vlog2.pop %v6302
  %v6310 = vmul.f32 %v6309, 0.6931472
  %v6311 = vlog2.pop %v6304
  %v6312 = vmul.f32 %v6311, 0.6931472
  %v6313 = vlog2.pop %v6306
  %v6314 = vmul.f32 %v6313, 0.6931472
  %v6315 = vlog2.pop %v6308
  %v6316 = vmul.f32 %v6315, 0.6931472
  %v6317 = vadd.f32 %v6310, %v6282
  %v6318 = vadd.f32 %v6312, %v6284
  %v6319 = vadd.f32 %v6314, %v6286
  %v6320 = vadd.f32 %v6316, %v6288
  %v6321 = vsub.f32 %v6267, %v6317
  %v6322 = vsub.f32 %v6270, %v6318
  %v6323 = vsub.f32 %v6275, %v6319
  %v6324 = vsub.f32 %v6278, %v6320
  %6325 = vst [vmem:[%s11] sm:$0xff] %v6321
  %6326 = vst [vmem:[%s11 + $0x8] sm:$0xff] %v6322
  %6327 = vst [vmem:[%s11 + $0x10] sm:$0xff] %v6323
  %6328 = vst [vmem:[%s11 + $0x18] sm:$0xff] %v6324
  // Predicated region
  $region46: #{cifar_net_fedsi_forward.1} parent=0 // pred_check
    _
  $region47: #{cifar_net_fedsi_forward.1} parent=0 // pred_check_branch
    %6330 = sbr.rel (0) target = $region49
  $region48: #{cifar_net_fedsi_forward.1} parent=0 // pred_region
    _
  $region49: #{cifar_net_fedsi_forward.1} parent=0 // pred_fallthru
    _
  // Predicated region
  $region50: #{cifar_net_fedsi_forward.1} parent=0 // pred_check
    _
  $region51: #{cifar_net_fedsi_forward.1} parent=0 // pred_check_branch
    %6332 = sbr.rel (0) target = $region53
  $region52: #{cifar_net_fedsi_forward.1} parent=0 // pred_region
    _
  $region53: #{cifar_net_fedsi_forward.1} parent=0 // pred_fallthru
    _

</llo_original>
